<compile_context>
chip_gen: v7x
topology: tpu7x:2x2x1
jax: 0.10.0
libtpu: 0.0.40
codegen_flags: <defaults>
</compile_context>

<pallas_src>
import math
import functools

import jax
import jax.numpy as jnp
from jax.experimental import pallas as pl
from jax.experimental.pallas import tpu as pltpu

NEG_INF = -1e9
# TODO(synk): CPY_ID/INS_ID/PRO_ID/EOS_ID constants are not defined in the reference
# source; op_head has 4 logits so we assign 0..3 deterministically.
CPY_ID, INS_ID, PRO_ID, EOS_ID = 0, 1, 2, 3

_VMEM_LIMIT = 32 * 1024 * 1024  # safe on v5e/v6e/v7x (>= default scoped limit everywhere)


# ---------------------------------------------------------------------------
# In-kernel helpers (f32 math)
# ---------------------------------------------------------------------------
def _ln_f32(x, g, b):
    mu = jnp.mean(x, axis=-1, keepdims=True)
    var = jnp.mean((x - mu) ** 2, axis=-1, keepdims=True)
    return (x - mu) * jax.lax.rsqrt(var + 1e-5) * g + b


# ---------------------------------------------------------------------------
# Fused multi-head attention block:
#   out = LayerNorm(x_q + Wo @ MHA(x_q Wq, x_kv Wk, x_kv Wv) + bo)
# ---------------------------------------------------------------------------
def _mha_kernel(xq_ref, xkv_ref, wqkv_ref, bqkv_ref, wo_ref, bo_ref, kpad_ref,
                g_ref, b_ref, o_ref, *, nhead, causal, is_self, scale):
    f32, bf16 = jnp.float32, jnp.bfloat16
    xq = xq_ref[0]                                  # (Sq, D) f32
    D = xq.shape[-1]
    Dh = D // nhead

    if is_self:
        # single fused (D, 3D) projection
        qkv = jnp.dot(xq.astype(bf16), wqkv_ref[...].astype(bf16),
                      preferred_element_type=f32) + bqkv_ref[...]
        q, k, v = qkv[:, :D], qkv[:, D:2 * D], qkv[:, 2 * D:]
    else:
        xkv = xkv_ref[0]                            # (Sk, D)
        q = jnp.dot(xq.astype(bf16), wqkv_ref[:, :D].astype(bf16),
                    preferred_element_type=f32) + bqkv_ref[:, :D]
        kv = jnp.dot(xkv.astype(bf16), wqkv_ref[:, D:].astype(bf16),
                     preferred_element_type=f32) + bqkv_ref[:, D:]
        k, v = kv[:, :D], kv[:, D:]

    Sq, Sk = q.shape[0], k.shape[0]

    # Additive bias: key-padding (0 / -1e9) from SMEM-sized input + in-kernel causal mask.
    bias = kpad_ref[0]                              # (1, Sk) f32
    if causal:
        qi = jax.lax.broadcasted_iota(jnp.int32, (Sq, Sk), 0)
        ki = jax.lax.broadcasted_iota(jnp.int32, (Sq, Sk), 1)
        bias = bias + jnp.where(ki > qi, NEG_INF, 0.0)

    ctx = []
    for h in range(nhead):                          # static unroll over heads
        qh = q[:, h * Dh:(h + 1) * Dh].astype(bf16)
        kh = k[:, h * Dh:(h + 1) * Dh].astype(bf16)
        vh = v[:, h * Dh:(h + 1) * Dh].astype(bf16)
        s = jax.lax.dot_general(qh, kh, (((1,), (1,)), ((), ())),
                                preferred_element_type=f32) * scale + bias
        m = jnp.max(s, axis=-1, keepdims=True)
        p = jnp.exp(s - m)
        p = p * pl.reciprocal(jnp.sum(p, axis=-1, keepdims=True), approx=True)
        ctx.append(jnp.dot(p.astype(bf16), vh, preferred_element_type=f32))
    ctx = jnp.concatenate(ctx, axis=-1)             # (Sq, D)

    o = jnp.dot(ctx.astype(bf16), wo_ref[...].astype(bf16),
                preferred_element_type=f32) + bo_ref[...]
    o_ref[0] = _ln_f32(xq + o, g_ref[...], b_ref[...]).astype(o_ref.dtype)


def mha_block(x_q, x_kv, p, kpad, ln_g, ln_b, *, nhead, causal, is_self):
    """x_q: (B,Sq,D), x_kv: (B,Sk,D), kpad: (B,1,Sk) additive key-pad bias."""
    B, Sq, D = x_q.shape
    Sk = x_kv.shape[1]
    Dh = D // nhead
    scale = 1.0 / math.sqrt(Dh)
    flops = B * (2 * Sq * D * 3 * D + nhead * 4 * Sq * Sk * Dh + 2 * Sq * D * D)
    bytes_acc = 4 * (2 * B * Sq * D + B * Sk * D + 4 * D * D + 6 * D + B * Sk)
    kern = functools.partial(_mha_kernel, nhead=nhead, causal=causal,
                             is_self=is_self, scale=scale)
    return pl.pallas_call(
        kern,
        out_shape=jax.ShapeDtypeStruct((B, Sq, D), jnp.float32),
        grid=(B,),
        in_specs=[
            pl.BlockSpec((1, Sq, D), lambda b: (b, 0, 0)),
            pl.BlockSpec((1, Sk, D), lambda b: (b, 0, 0)),
            pl.BlockSpec((D, 3 * D), lambda b: (0, 0)),
            pl.BlockSpec((1, 3 * D), lambda b: (0, 0)),
            pl.BlockSpec((D, D), lambda b: (0, 0)),
            pl.BlockSpec((1, D), lambda b: (0, 0)),
            pl.BlockSpec((1, 1, Sk), lambda b: (b, 0, 0)),
            pl.BlockSpec((1, D), lambda b: (0, 0)),
            pl.BlockSpec((1, D), lambda b: (0, 0)),
        ],
        out_specs=pl.BlockSpec((1, Sq, D), lambda b: (b, 0, 0)),
        compiler_params=pltpu.CompilerParams(
            dimension_semantics=("parallel",), vmem_limit_bytes=_VMEM_LIMIT),
        cost_estimate=pl.CostEstimate(flops=flops,
                                      transcendentals=B * nhead * Sq * Sk,
                                      bytes_accessed=bytes_acc),
    )(x_q, x_kv, p["wqkv"], p["bqkv"].reshape(1, 3 * D),
      p["wo"], p["bo"].reshape(1, D), kpad,
      ln_g.reshape(1, D), ln_b.reshape(1, D))


# ---------------------------------------------------------------------------
# Fused FFN block:  out = LayerNorm(x + W2 relu(W1 x + b1) + b2)
# ---------------------------------------------------------------------------
def _ffn_kernel(x_ref, w1_ref, b1_ref, w2_ref, b2_ref, g_ref, b_ref, o_ref):
    f32, bf16 = jnp.float32, jnp.bfloat16
    x = x_ref[0]                                    # (S, D)
    h = jnp.maximum(jnp.dot(x.astype(bf16), w1_ref[...].astype(bf16),
                            preferred_element_type=f32) + b1_ref[...], 0.0)
    y = jnp.dot(h.astype(bf16), w2_ref[...].astype(bf16),
                preferred_element_type=f32) + b2_ref[...]
    o_ref[0] = _ln_f32(x + y, g_ref[...], b_ref[...]).astype(o_ref.dtype)


def ffn_block(x, w1, b1, w2, b2, ln_g, ln_b):
    B, S, D = x.shape
    Dff = w1.shape[1]
    flops = B * S * 4 * D * Dff
    bytes_acc = 4 * (2 * B * S * D + 2 * D * Dff + Dff + 3 * D)
    return pl.pallas_call(
        _ffn_kernel,
        out_shape=jax.ShapeDtypeStruct((B, S, D), jnp.float32),
        grid=(B,),
        in_specs=[
            pl.BlockSpec((1, S, D), lambda b: (b, 0, 0)),
            pl.BlockSpec((D, Dff), lambda b: (0, 0)),
            pl.BlockSpec((1, Dff), lambda b: (0, 0)),
            pl.BlockSpec((Dff, D), lambda b: (0, 0)),
            pl.BlockSpec((1, D), lambda b: (0, 0)),
            pl.BlockSpec((1, D), lambda b: (0, 0)),
            pl.BlockSpec((1, D), lambda b: (0, 0)),
        ],
        out_specs=pl.BlockSpec((1, S, D), lambda b: (b, 0, 0)),
        compiler_params=pltpu.CompilerParams(
            dimension_semantics=("parallel",), vmem_limit_bytes=_VMEM_LIMIT),
        cost_estimate=pl.CostEstimate(flops=flops, transcendentals=0,
                                      bytes_accessed=bytes_acc),
    )(x, w1, b1.reshape(1, Dff), w2, b2.reshape(1, D),
      ln_g.reshape(1, D), ln_b.reshape(1, D))


# ---------------------------------------------------------------------------
# Tiled linear (output heads): grid over M tiles, resident weight block.
# ---------------------------------------------------------------------------
def _linear_kernel(x_ref, w_ref, b_ref, o_ref):
    y = jnp.dot(x_ref[...].astype(jnp.bfloat16), w_ref[...].astype(jnp.bfloat16),
                preferred_element_type=jnp.float32) + b_ref[...]
    o_ref[...] = y.astype(o_ref.dtype)


def _pick_tm(M, target=512):
    if M <= target:
        return M
    for tm in range(target, 7, -1):
        if M % tm == 0 and tm % 8 == 0:
            return tm
    return M


def linear_pallas(x, w, b):
    M, K = x.shape
    N = w.shape[1]
    tm = _pick_tm(M)
    flops = 2 * M * K * N
    bytes_acc = 4 * (M * K + K * N + M * N + N)
    return pl.pallas_call(
        _linear_kernel,
        out_shape=jax.ShapeDtypeStruct((M, N), jnp.float32),
        grid=(M // tm,),
        in_specs=[
            pl.BlockSpec((tm, K), lambda i: (i, 0)),
            pl.BlockSpec((K, N), lambda i: (0, 0)),
            pl.BlockSpec((1, N), lambda i: (0, 0)),
        ],
        out_specs=pl.BlockSpec((tm, N), lambda i: (i, 0)),
        compiler_params=pltpu.CompilerParams(
            dimension_semantics=("parallel",), vmem_limit_bytes=_VMEM_LIMIT),
        cost_estimate=pl.CostEstimate(flops=flops, transcendentals=0,
                                      bytes_accessed=bytes_acc),
    )(x, w, b.reshape(1, N))


# ---------------------------------------------------------------------------
# Encoder / decoder stacks built on the fused kernels
# ---------------------------------------------------------------------------
def pad_bias(mask):
    """bool (B, Sk), True = padded key -> additive bias (B, 1, Sk)."""
    return jnp.where(mask, NEG_INF, 0.0).astype(jnp.float32)[:, None, :]


def run_encoder(params, src, src_pad_mask, nhead):
    kpad = pad_bias(src_pad_mask)
    x = src
    for lp in params["encoder"]:
        # nn.TransformerEncoderLayer, norm_first=False, relu, dropout ignored (eval)
        x = mha_block(x, x, lp["attn"], kpad, *lp["ln1"],
                      nhead=nhead, causal=False, is_self=True)
        x = ffn_block(x, lp["w1"], lp["b1"], lp["w2"], lp["b2"], *lp["ln2"])
    return x


def run_decoder(params, tgt, mem, tgt_kpad, mem_kpad, nhead):
    x = tgt
    for lp in params["decoder"]:
        # nn.TransformerDecoderLayer, norm_first=False, relu, dropout ignored (eval)
        x = mha_block(x, x, lp["self_attn"], tgt_kpad, *lp["ln1"],
                      nhead=nhead, causal=True, is_self=True)
        x = mha_block(x, mem, lp["cross_attn"], mem_kpad, *lp["ln2"],
                      nhead=nhead, causal=False, is_self=False)
        x = ffn_block(x, lp["w1"], lp["b1"], lp["w2"], lp["b2"], *lp["ln3"])
    return x


# ---------------------------------------------------------------------------
# Positional embedding
# ---------------------------------------------------------------------------
def sinusoidal_pe(max_len, d_model):
    # TODO(synk): SinusoidalEmbedding class source not provided; assumed standard
    # sin/cos table applied additively as pe(x, d) = x + d * PE[:S].
    pos = jnp.arange(max_len, dtype=jnp.float32)[:, None]
    div = jnp.exp(jnp.arange(0, d_model, 2, dtype=jnp.float32) * (-math.log(10000.0) / d_model))
    pe = jnp.zeros((max_len, d_model), jnp.float32)
    pe = pe.at[:, 0::2].set(jnp.sin(pos * div))
    pe = pe.at[:, 1::2].set(jnp.cos(pos * div))
    return pe


# ---------------------------------------------------------------------------
# DependencyEvolver-specific target constructions (glue) + forward
# ---------------------------------------------------------------------------
def _replace(t, old, new):
    return jnp.where(t == old, new, t)


def tgt_op_fn(params, mem, t_op, t_cpy):
    B, S, _ = mem.shape
    pe = params["pe"][:S]
    pe_mem = mem - pe                                   # positional_embedding(mem, d=-1)
    idx = _replace(t_cpy, -1, 0)
    permuted = pe_mem[jnp.arange(B)[:, None], idx]      # (B, S, D) gather along seq
    cond_cp = ((t_op == CPY_ID) | (t_op == PRO_ID))[..., None]
    tgt = jnp.where(cond_cp, permuted, 0.0)
    tgt = tgt + jnp.where((t_op == INS_ID)[..., None], params["plh"], 0.0)
    tgt = tgt + jnp.where((t_op == PRO_ID)[..., None], params["done"], 0.0)
    tgt = tgt + jnp.where((t_op == EOS_ID)[..., None], mem, 0.0)
    return tgt + pe                                     # positional_embedding(tgt, d=1)


def tgt_par_fn(mem, t_par):
    B, S, _ = mem.shape
    idx = _replace(t_par, -1, 0)
    permuted = mem[jnp.arange(B)[:, None], idx]
    return mem + jnp.where((t_par != -1)[..., None], permuted, 0.0)


def tgt_gen_fn(params, mem, t_gen):
    embeds = params["embedding"][_replace(t_gen, -1, 0)]
    return mem + jnp.where((t_gen != -1)[..., None], embeds, 0.0)


def forward_op(params, src, t_op, t_cpy, src_pad_mask, nhead):
    B, S, D = src.shape
    mem = run_encoder(params, src, src_pad_mask, nhead)
    tgt = tgt_op_fn(params, mem, t_op, t_cpy)
    tgt_kpad = jnp.zeros((B, 1, S), jnp.float32)        # no tgt key padding in forward_op
    mem_kpad = pad_bias(src_pad_mask)
    h = run_decoder(params, tgt, mem, tgt_kpad, mem_kpad, nhead)
    # fused op|cpy head: one lane-dense matmul, split logits afterwards
    l = linear_pallas(h.reshape(B * S, D), params["opcpy_w"], params["opcpy_b"]).reshape(B, S, -1)
    return l[..., :4], l[..., 4:], tgt


def forward_par(params, src, t_par, src_pad_mask, tgt_pad_mask, nhead):
    B, S, D = src.shape
    mem = run_encoder(params, src, src_pad_mask, nhead)
    tgt = tgt_par_fn(mem, t_par)
    h = run_decoder(params, tgt, mem, pad_bias(tgt_pad_mask), pad_bias(src_pad_mask), nhead)
    l = linear_pallas(h.reshape(B * S, D), params["par_w"], params["par_b"]).reshape(B, S, -1)
    return l, tgt


def forward_gen(params, src, t_gen, src_pad_mask, tgt_pad_mask, nhead):
    B, S, D = src.shape
    mem = run_encoder(params, src, src_pad_mask, nhead)
    tgt = tgt_gen_fn(params, mem, t_gen)
    h = run_decoder(params, tgt, mem, pad_bias(tgt_pad_mask), pad_bias(src_pad_mask), nhead)
    l = linear_pallas(h.reshape(B * S, D), params["v_w"], params["v_b"]).reshape(B, S, -1)
    return l, tgt


def forward(params, src, pad_masks, t_op, t_cpy, t_par, t_rel, t_pos, t_tok, *, nhead):
    init_pad, src_pad, tgt_pad = pad_masks
    l_op, l_cpy, src = forward_op(params, src, t_op, t_cpy, init_pad, nhead)
    l_par, src = forward_par(params, src, t_par, src_pad, tgt_pad, nhead)
    l_rel, src = forward_gen(params, src, t_rel, src_pad, tgt_pad, nhead)
    l_pos, src = forward_gen(params, src, t_pos, src_pad, tgt_pad, nhead)
    l_tok, src = forward_gen(params, src, t_tok, src_pad, tgt_pad, nhead)
    return l_op, l_cpy, l_par, l_rel, l_pos, l_tok


# ---------------------------------------------------------------------------
# Deterministic synthetic parameters (fused-weight layout)
# ---------------------------------------------------------------------------
def init_params(key, *, d_model, d_ff, n_enc, n_dec, N, tok_v, rel_v, pos_v):
    vocab = tok_v + rel_v + pos_v + 1
    keys = iter(jax.random.split(key, 1024))

    def w(shape, scale=0.02):
        return jax.random.normal(next(keys), shape, jnp.float32) * scale

    def ln():
        return (jnp.ones((d_model,), jnp.float32), jnp.zeros((d_model,), jnp.float32))

    def mha_p():
        return dict(wqkv=w((d_model, 3 * d_model)),
                    bqkv=jnp.zeros((3 * d_model,), jnp.float32),
                    wo=w((d_model, d_model)), bo=jnp.zeros((d_model,), jnp.float32))

    def enc_layer():
        return dict(attn=mha_p(),
                    w1=w((d_model, d_ff)), b1=jnp.zeros((d_ff,), jnp.float32),
                    w2=w((d_ff, d_model)), b2=jnp.zeros((d_model,), jnp.float32),
                    ln1=ln(), ln2=ln())

    def dec_layer():
        return dict(self_attn=mha_p(), cross_attn=mha_p(),
                    w1=w((d_model, d_ff)), b1=jnp.zeros((d_ff,), jnp.float32),
                    w2=w((d_ff, d_model)), b2=jnp.zeros((d_model,), jnp.float32),
                    ln1=ln(), ln2=ln(), ln3=ln())

    std = 1.0 / math.sqrt(d_model)
    gen_dim = tok_v + rel_v + pos_v
    return dict(
        encoder=[enc_layer() for _ in range(n_enc)],
        decoder=[dec_layer() for _ in range(n_dec)],
        embedding=w((vocab, d_model)),
        opcpy_w=w((d_model, 4 + N)), opcpy_b=jnp.zeros((4 + N,), jnp.float32),
        par_w=w((d_model, N)), par_b=jnp.zeros((N,), jnp.float32),
        v_w=w((d_model, gen_dim)), v_b=jnp.zeros((gen_dim,), jnp.float32),
        done=w((d_model,), std), plh=w((d_model,), std),
        pe=sinusoidal_pe(N, d_model),
    )


# ---------------------------------------------------------------------------
if __name__ == "__main__":
    # Small config consistent with the module (N = seq length, d_model, nhead, ...)
    B, N_SEQ, D_MODEL, NHEAD, D_FF = 2, 8, 32, 4, 64
    ENC_LAYERS, DEC_LAYERS = 2, 2
    TOK_V, REL_V, POS_V = 10, 5, 6
    VOCAB = TOK_V + REL_V + POS_V + 1

    params = init_params(jax.random.PRNGKey(0), d_model=D_MODEL, d_ff=D_FF,
                         n_enc=ENC_LAYERS, n_dec=DEC_LAYERS, N=N_SEQ,
                         tok_v=TOK_V, rel_v=REL_V, pos_v=POS_V)

    ks = jax.random.split(jax.random.PRNGKey(0), 8)
    src = jax.random.normal(ks[0], (B, N_SEQ, D_MODEL), jnp.float32)

    valid = (jnp.arange(N_SEQ) < 5)[None, :]                       # first 5 positions valid
    t_op = jnp.where(valid, jax.random.randint(ks[1], (B, N_SEQ), 0, 4), -1)
    t_cpy = jnp.where(valid, jax.random.randint(ks[2], (B, N_SEQ), 0, N_SEQ), -1)
    t_par = jnp.where(valid, jax.random.randint(ks[3], (B, N_SEQ), 0, N_SEQ), -1)
    t_rel = jnp.where(valid, jax.random.randint(ks[4], (B, N_SEQ), 0, VOCAB), -1)
    t_pos = jnp.where(valid, jax.random.randint(ks[5], (B, N_SEQ), 0, VOCAB), -1)
    t_tok = jnp.where(valid, jax.random.randint(ks[6], (B, N_SEQ), 0, VOCAB), -1)

    init_pad_mask = jnp.broadcast_to(jnp.arange(N_SEQ)[None, :] >= 3, (B, N_SEQ))  # as in traj_loss
    src_pad_mask = t_op == -1
    tgt_pad_mask = (t_par == -1).at[:, 0].set(False)
    pad_masks = (init_pad_mask, src_pad_mask, tgt_pad_mask)

    fwd = jax.jit(functools.partial(forward, nhead=NHEAD))
    outs = fwd(params, src, pad_masks, t_op, t_cpy, t_par, t_rel, t_pos, t_tok)
    outs = jax.block_until_ready(outs)

    # shape sanity: (l_op, l_cpy, l_par, l_rel, l_pos, l_tok)
    expected = [(B, N_SEQ, 4), (B, N_SEQ, N_SEQ), (B, N_SEQ, N_SEQ),
                (B, N_SEQ, TOK_V + REL_V + POS_V)] + [(B, N_SEQ, TOK_V + REL_V + POS_V)] * 2
    assert all(o.shape == e for o, e in zip(outs, expected)), [o.shape for o in outs]
    assert all(bool(jnp.all(jnp.isfinite(o))) for o in outs)

    print("KERNEL_OK")
</pallas_src>

<mosaic_0001>
module attributes {stable_mosaic.version = 11 : i64} {
  func.func @_ffn_kernel(%arg0: i32, %arg1: memref<1x8x32xf32, #tpu.memory_space<vmem>>, %arg2: memref<32x64xf32, #tpu.memory_space<vmem>>, %arg3: memref<1x64xf32, #tpu.memory_space<vmem>>, %arg4: memref<64x32xf32, #tpu.memory_space<vmem>>, %arg5: memref<1x32xf32, #tpu.memory_space<vmem>>, %arg6: memref<1x32xf32, #tpu.memory_space<vmem>>, %arg7: memref<1x32xf32, #tpu.memory_space<vmem>>, %arg8: memref<1x8x32xf32, #tpu.memory_space<vmem>>) attributes {dimension_semantics = [#tpu.dimension_semantics<parallel>], iteration_bounds = array<i64: 2>, scalar_prefetch = 0 : i64, scratch_operands = 0 : i64, tpu.core_type = #tpu.core_type<tc>, window_params = [{transform_indices = @transform_0, window_bounds = array<i64: 1, 8, 32>}, {pipeline_mode = #tpu.pipeline_mode<synchronous>, transform_indices = @transform_1, window_bounds = array<i64: 32, 64>}, {pipeline_mode = #tpu.pipeline_mode<synchronous>, transform_indices = @transform_2, window_bounds = array<i64: 1, 64>}, {pipeline_mode = #tpu.pipeline_mode<synchronous>, transform_indices = @transform_3, window_bounds = array<i64: 64, 32>}, {pipeline_mode = #tpu.pipeline_mode<synchronous>, transform_indices = @transform_4, window_bounds = array<i64: 1, 32>}, {pipeline_mode = #tpu.pipeline_mode<synchronous>, transform_indices = @transform_5, window_bounds = array<i64: 1, 32>}, {pipeline_mode = #tpu.pipeline_mode<synchronous>, transform_indices = @transform_6, window_bounds = array<i64: 1, 32>}, {transform_indices = @transform_7, window_bounds = array<i64: 1, 8, 32>}]} {
    %c0 = arith.constant 0 : index
    %c0_0 = arith.constant 0 : index
    %c0_1 = arith.constant 0 : index
    %0 = vector.load %arg1[%c0, %c0_0, %c0_1] : memref<1x8x32xf32, #tpu.memory_space<vmem>>, vector<1x8x32xf32>
    %1 = vector.shape_cast %0 : vector<1x8x32xf32> to vector<8x32xf32>
    %2 = arith.truncf %1 : vector<8x32xf32> to vector<8x32xbf16>
    %c0_2 = arith.constant 0 : index
    %c0_3 = arith.constant 0 : index
    %3 = vector.load %arg2[%c0_2, %c0_3] : memref<32x64xf32, #tpu.memory_space<vmem>>, vector<32x64xf32>
    %4 = arith.truncf %3 : vector<32x64xf32> to vector<32x64xbf16>
    %cst = arith.constant dense<0.000000e+00> : vector<8x64xf32>
    %5 = tpu.matmul %2, %4, %cst {dimension_numbers = #tpu.dot_dimension_numbers<[1], [0], [0], [1], [0, 0, 1, 1], [], []>} : vector<8x32xbf16>, vector<32x64xbf16>, vector<8x64xf32> -> vector<8x64xf32>
    %c0_4 = arith.constant 0 : index
    %c0_5 = arith.constant 0 : index
    %6 = vector.load %arg3[%c0_4, %c0_5] : memref<1x64xf32, #tpu.memory_space<vmem>>, vector<1x64xf32>
    %7 = vector.broadcast %6 : vector<1x64xf32> to vector<8x64xf32>
    %8 = arith.addf %5, %7 : vector<8x64xf32>
    %cst_6 = arith.constant 0.000000e+00 : f32
    %9 = vector.broadcast %cst_6 : f32 to vector<8x64xf32>
    %10 = arith.maximumf %8, %9 : vector<8x64xf32>
    %11 = arith.truncf %10 : vector<8x64xf32> to vector<8x64xbf16>
    %c0_7 = arith.constant 0 : index
    %c0_8 = arith.constant 0 : index
    %12 = vector.load %arg4[%c0_7, %c0_8] : memref<64x32xf32, #tpu.memory_space<vmem>>, vector<64x32xf32>
    %13 = arith.truncf %12 : vector<64x32xf32> to vector<64x32xbf16>
    %cst_9 = arith.constant dense<0.000000e+00> : vector<8x32xf32>
    %14 = tpu.matmul %11, %13, %cst_9 {dimension_numbers = #tpu.dot_dimension_numbers<[1], [0], [0], [1], [0, 0, 1, 1], [], []>} : vector<8x64xbf16>, vector<64x32xbf16>, vector<8x32xf32> -> vector<8x32xf32>
    %c0_10 = arith.constant 0 : index
    %c0_11 = arith.constant 0 : index
    %15 = vector.load %arg5[%c0_10, %c0_11] : memref<1x32xf32, #tpu.memory_space<vmem>>, vector<1x32xf32>
    %16 = vector.broadcast %15 : vector<1x32xf32> to vector<8x32xf32>
    %17 = arith.addf %14, %16 : vector<8x32xf32>
    %18 = arith.addf %1, %17 : vector<8x32xf32>
    %c0_12 = arith.constant 0 : index
    %c0_13 = arith.constant 0 : index
    %19 = vector.load %arg6[%c0_12, %c0_13] : memref<1x32xf32, #tpu.memory_space<vmem>>, vector<1x32xf32>
    %c0_14 = arith.constant 0 : index
    %c0_15 = arith.constant 0 : index
    %20 = vector.load %arg7[%c0_14, %c0_15] : memref<1x32xf32, #tpu.memory_space<vmem>>, vector<1x32xf32>
    %cst_16 = arith.constant dense<0.000000e+00> : vector<8xf32>
    %21 = vector.multi_reduction <add>, %18, %cst_16 [1] : vector<8x32xf32> to vector<8xf32>
    %22 = vector.shape_cast %21 : vector<8xf32> to vector<8x1xf32>
    %cst_17 = arith.constant 3.200000e+01 : f32
    %23 = vector.broadcast %cst_17 : f32 to vector<8x1xf32>
    %24 = arith.divf %22, %23 : vector<8x1xf32>
    %25 = vector.broadcast %24 : vector<8x1xf32> to vector<8x32xf32>
    %26 = arith.subf %18, %25 : vector<8x32xf32>
    %27 = arith.mulf %26, %26 : vector<8x32xf32>
    %cst_18 = arith.constant dense<0.000000e+00> : vector<8xf32>
    %28 = vector.multi_reduction <add>, %27, %cst_18 [1] : vector<8x32xf32> to vector<8xf32>
    %29 = vector.shape_cast %28 : vector<8xf32> to vector<8x1xf32>
    %cst_19 = arith.constant 3.200000e+01 : f32
    %30 = vector.broadcast %cst_19 : f32 to vector<8x1xf32>
    %31 = arith.divf %29, %30 : vector<8x1xf32>
    %32 = vector.broadcast %24 : vector<8x1xf32> to vector<8x32xf32>
    %33 = arith.subf %18, %32 : vector<8x32xf32>
    %cst_20 = arith.constant 9.99999974E-6 : f32
    %34 = vector.broadcast %cst_20 : f32 to vector<8x1xf32>
    %35 = arith.addf %31, %34 : vector<8x1xf32>
    %36 = math.rsqrt %35 : vector<8x1xf32>
    %37 = vector.broadcast %36 : vector<8x1xf32> to vector<8x32xf32>
    %38 = arith.mulf %33, %37 : vector<8x32xf32>
    %39 = vector.broadcast %19 : vector<1x32xf32> to vector<8x32xf32>
    %40 = arith.mulf %38, %39 : vector<8x32xf32>
    %41 = vector.broadcast %20 : vector<1x32xf32> to vector<8x32xf32>
    %42 = arith.addf %40, %41 : vector<8x32xf32>
    %c0_21 = arith.constant 0 : index
    %c0_22 = arith.constant 0 : index
    %c0_23 = arith.constant 0 : index
    %43 = vector.load %arg8[%c0_21, %c0_22, %c0_23] : memref<1x8x32xf32, #tpu.memory_space<vmem>>, vector<1x8x32xf32>
    %44 = vector.shape_cast %43 : vector<1x8x32xf32> to vector<8x32xf32>
    %45 = vector.shape_cast %42 : vector<8x32xf32> to vector<1x8x32xf32>
    tpu.vector_store %arg8[%c0_21, %c0_22, %c0_23], %45 {strides = array<i32>} : memref<1x8x32xf32, #tpu.memory_space<vmem>>, vector<1x8x32xf32>,
    return
  }
  func.func @transform_0(%arg0: i32) -> (i32, i32, i32) {
    %c0_i32 = arith.constant 0 : i32
    %c0_i32_0 = arith.constant 0 : i32
    %c0_i32_1 = arith.constant 0 : i32
    return %arg0, %c0_i32, %c0_i32_0 : i32, i32, i32
  }
  func.func @transform_1(%arg0: i32) -> (i32, i32) {
    %c0_i32 = arith.constant 0 : i32
    %c0_i32_0 = arith.constant 0 : i32
    %c0_i32_1 = arith.constant 0 : i32
    return %c0_i32, %c0_i32_0 : i32, i32
  }
  func.func @transform_2(%arg0: i32) -> (i32, i32) {
    %c0_i32 = arith.constant 0 : i32
    %c0_i32_0 = arith.constant 0 : i32
    %c0_i32_1 = arith.constant 0 : i32
    return %c0_i32, %c0_i32_0 : i32, i32
  }
  func.func @transform_3(%arg0: i32) -> (i32, i32) {
    %c0_i32 = arith.constant 0 : i32
    %c0_i32_0 = arith.constant 0 : i32
    %c0_i32_1 = arith.constant 0 : i32
    return %c0_i32, %c0_i32_0 : i32, i32
  }
  func.func @transform_4(%arg0: i32) -> (i32, i32) {
    %c0_i32 = arith.constant 0 : i32
    %c0_i32_0 = arith.constant 0 : i32
    %c0_i32_1 = arith.constant 0 : i32
    return %c0_i32, %c0_i32_0 : i32, i32
  }
  func.func @transform_5(%arg0: i32) -> (i32, i32) {
    %c0_i32 = arith.constant 0 : i32
    %c0_i32_0 = arith.constant 0 : i32
    %c0_i32_1 = arith.constant 0 : i32
    return %c0_i32, %c0_i32_0 : i32, i32
  }
  func.func @transform_6(%arg0: i32) -> (i32, i32) {
    %c0_i32 = arith.constant 0 : i32
    %c0_i32_0 = arith.constant 0 : i32
    %c0_i32_1 = arith.constant 0 : i32
    return %c0_i32, %c0_i32_0 : i32, i32
  }
  func.func @transform_7(%arg0: i32) -> (i32, i32, i32) {
    %c0_i32 = arith.constant 0 : i32
    %c0_i32_0 = arith.constant 0 : i32
    %c0_i32_1 = arith.constant 0 : i32
    return %arg0, %c0_i32, %c0_i32_0 : i32, i32, i32
  }
}

module attributes {stable_mosaic.version = 11 : i64} {
  func.func @_mha_kernel(%arg0: i32, %arg1: memref<1x8x32xf32, #tpu.memory_space<vmem>>, %arg2: memref<1x8x32xf32, #tpu.memory_space<vmem>>, %arg3: memref<32x96xf32, #tpu.memory_space<vmem>>, %arg4: memref<1x96xf32, #tpu.memory_space<vmem>>, %arg5: memref<32x32xf32, #tpu.memory_space<vmem>>, %arg6: memref<1x32xf32, #tpu.memory_space<vmem>>, %arg7: memref<1x1x8xf32, #tpu.memory_space<vmem>>, %arg8: memref<1x32xf32, #tpu.memory_space<vmem>>, %arg9: memref<1x32xf32, #tpu.memory_space<vmem>>, %arg10: memref<1x8x32xf32, #tpu.memory_space<vmem>>) attributes {dimension_semantics = [#tpu.dimension_semantics<parallel>], iteration_bounds = array<i64: 2>, scalar_prefetch = 0 : i64, scratch_operands = 0 : i64, tpu.core_type = #tpu.core_type<tc>, window_params = [{transform_indices = @transform_0, window_bounds = array<i64: 1, 8, 32>}, {transform_indices = @transform_1, window_bounds = array<i64: 1, 8, 32>}, {pipeline_mode = #tpu.pipeline_mode<synchronous>, transform_indices = @transform_2, window_bounds = array<i64: 32, 96>}, {pipeline_mode = #tpu.pipeline_mode<synchronous>, transform_indices = @transform_3, window_bounds = array<i64: 1, 96>}, {pipeline_mode = #tpu.pipeline_mode<synchronous>, transform_indices = @transform_4, window_bounds = array<i64: 32, 32>}, {pipeline_mode = #tpu.pipeline_mode<synchronous>, transform_indices = @transform_5, window_bounds = array<i64: 1, 32>}, {transform_indices = @transform_6, window_bounds = array<i64: 1, 1, 8>}, {pipeline_mode = #tpu.pipeline_mode<synchronous>, transform_indices = @transform_7, window_bounds = array<i64: 1, 32>}, {pipeline_mode = #tpu.pipeline_mode<synchronous>, transform_indices = @transform_8, window_bounds = array<i64: 1, 32>}, {transform_indices = @transform_9, window_bounds = array<i64: 1, 8, 32>}]} {
    %c0 = arith.constant 0 : index
    %c0_0 = arith.constant 0 : index
    %c0_1 = arith.constant 0 : index
    %0 = vector.load %arg1[%c0, %c0_0, %c0_1] : memref<1x8x32xf32, #tpu.memory_space<vmem>>, vector<1x8x32xf32>
    %1 = vector.shape_cast %0 : vector<1x8x32xf32> to vector<8x32xf32>
    %2 = arith.truncf %1 : vector<8x32xf32> to vector<8x32xbf16>
    %c0_2 = arith.constant 0 : index
    %c0_3 = arith.constant 0 : index
    %3 = vector.load %arg3[%c0_2, %c0_3] : memref<32x96xf32, #tpu.memory_space<vmem>>, vector<32x96xf32>
    %4 = arith.truncf %3 : vector<32x96xf32> to vector<32x96xbf16>
    %cst = arith.constant dense<0.000000e+00> : vector<8x96xf32>
    %5 = tpu.matmul %2, %4, %cst {dimension_numbers = #tpu.dot_dimension_numbers<[1], [0], [0], [1], [0, 0, 1, 1], [], []>} : vector<8x32xbf16>, vector<32x96xbf16>, vector<8x96xf32> -> vector<8x96xf32>
    %c0_4 = arith.constant 0 : index
    %c0_5 = arith.constant 0 : index
    %6 = vector.load %arg4[%c0_4, %c0_5] : memref<1x96xf32, #tpu.memory_space<vmem>>, vector<1x96xf32>
    %7 = vector.broadcast %6 : vector<1x96xf32> to vector<8x96xf32>
    %8 = arith.addf %5, %7 : vector<8x96xf32>
    %9 = vector.extract_strided_slice %8 {offsets = [0, 0], sizes = [8, 32], strides = [1, 1]} : vector<8x96xf32> to vector<8x32xf32>
    %10 = vector.extract_strided_slice %8 {offsets = [0, 32], sizes = [8, 32], strides = [1, 1]} : vector<8x96xf32> to vector<8x32xf32>
    %11 = vector.extract_strided_slice %8 {offsets = [0, 64], sizes = [8, 32], strides = [1, 1]} : vector<8x96xf32> to vector<8x32xf32>
    %c0_6 = arith.constant 0 : index
    %c0_7 = arith.constant 0 : index
    %c0_8 = arith.constant 0 : index
    %12 = vector.load %arg7[%c0_6, %c0_7, %c0_8] : memref<1x1x8xf32, #tpu.memory_space<vmem>>, vector<1x1x8xf32>
    %13 = vector.shape_cast %12 : vector<1x1x8xf32> to vector<1x8xf32>
    %14 = vector.extract_strided_slice %9 {offsets = [0, 0], sizes = [8, 8], strides = [1, 1]} : vector<8x32xf32> to vector<8x8xf32>
    %15 = arith.truncf %14 : vector<8x8xf32> to vector<8x8xbf16>
    %16 = vector.extract_strided_slice %10 {offsets = [0, 0], sizes = [8, 8], strides = [1, 1]} : vector<8x32xf32> to vector<8x8xf32>
    %17 = arith.truncf %16 : vector<8x8xf32> to vector<8x8xbf16>
    %18 = vector.extract_strided_slice %11 {offsets = [0, 0], sizes = [8, 8], strides = [1, 1]} : vector<8x32xf32> to vector<8x8xf32>
    %19 = arith.truncf %18 : vector<8x8xf32> to vector<8x8xbf16>
    %cst_9 = arith.constant dense<0.000000e+00> : vector<8x8xf32>
    %20 = tpu.matmul %15, %17, %cst_9 {dimension_numbers = #tpu.dot_dimension_numbers<[1], [1], [0], [0], [0, 0, 1, 0], [], []>} : vector<8x8xbf16>, vector<8x8xbf16>, vector<8x8xf32> -> vector<8x8xf32>
    %cst_10 = arith.constant 0.353553385 : f32
    %21 = vector.broadcast %cst_10 : f32 to vector<8x8xf32>
    %22 = arith.mulf %20, %21 : vector<8x8xf32>
    %23 = vector.broadcast %13 : vector<1x8xf32> to vector<8x8xf32>
    %24 = arith.addf %22, %23 : vector<8x8xf32>
    %cst_11 = arith.constant dense<0xFF800000> : vector<8xf32>
    %25 = vector.multi_reduction <maximumf>, %24, %cst_11 [1] : vector<8x8xf32> to vector<8xf32>
    %26 = vector.shape_cast %25 : vector<8xf32> to vector<8x1xf32>
    %27 = vector.broadcast %26 : vector<8x1xf32> to vector<8x8xf32>
    %28 = arith.subf %24, %27 : vector<8x8xf32>
    %29 = math.exp %28 : vector<8x8xf32>
    %cst_12 = arith.constant dense<0.000000e+00> : vector<8xf32>
    %30 = vector.multi_reduction <add>, %29, %cst_12 [1] : vector<8x8xf32> to vector<8xf32>
    %31 = vector.shape_cast %30 : vector<8xf32> to vector<8x1xf32>
    %32 = tpu.reciprocal %31 {approx = true} : vector<8x1xf32> -> vector<8x1xf32>
    %33 = vector.broadcast %32 : vector<8x1xf32> to vector<8x8xf32>
    %34 = arith.mulf %29, %33 : vector<8x8xf32>
    %35 = arith.truncf %34 : vector<8x8xf32> to vector<8x8xbf16>
    %cst_13 = arith.constant dense<0.000000e+00> : vector<8x8xf32>
    %36 = tpu.matmul %35, %19, %cst_13 {dimension_numbers = #tpu.dot_dimension_numbers<[1], [0], [0], [1], [0, 0, 1, 1], [], []>} : vector<8x8xbf16>, vector<8x8xbf16>, vector<8x8xf32> -> vector<8x8xf32>
    %37 = vector.extract_strided_slice %9 {offsets = [0, 8], sizes = [8, 8], strides = [1, 1]} : vector<8x32xf32> to vector<8x8xf32>
    %38 = arith.truncf %37 : vector<8x8xf32> to vector<8x8xbf16>
    %39 = vector.extract_strided_slice %10 {offsets = [0, 8], sizes = [8, 8], strides = [1, 1]} : vector<8x32xf32> to vector<8x8xf32>
    %40 = arith.truncf %39 : vector<8x8xf32> to vector<8x8xbf16>
    %41 = vector.extract_strided_slice %11 {offsets = [0, 8], sizes = [8, 8], strides = [1, 1]} : vector<8x32xf32> to vector<8x8xf32>
    %42 = arith.truncf %41 : vector<8x8xf32> to vector<8x8xbf16>
    %cst_14 = arith.constant dense<0.000000e+00> : vector<8x8xf32>
    %43 = tpu.matmul %38, %40, %cst_14 {dimension_numbers = #tpu.dot_dimension_numbers<[1], [1], [0], [0], [0, 0, 1, 0], [], []>} : vector<8x8xbf16>, vector<8x8xbf16>, vector<8x8xf32> -> vector<8x8xf32>
    %cst_15 = arith.constant 0.353553385 : f32
    %44 = vector.broadcast %cst_15 : f32 to vector<8x8xf32>
    %45 = arith.mulf %43, %44 : vector<8x8xf32>
    %46 = vector.broadcast %13 : vector<1x8xf32> to vector<8x8xf32>
    %47 = arith.addf %45, %46 : vector<8x8xf32>
    %cst_16 = arith.constant dense<0xFF800000> : vector<8xf32>
    %48 = vector.multi_reduction <maximumf>, %47, %cst_16 [1] : vector<8x8xf32> to vector<8xf32>
    %49 = vector.shape_cast %48 : vector<8xf32> to vector<8x1xf32>
    %50 = vector.broadcast %49 : vector<8x1xf32> to vector<8x8xf32>
    %51 = arith.subf %47, %50 : vector<8x8xf32>
    %52 = math.exp %51 : vector<8x8xf32>
    %cst_17 = arith.constant dense<0.000000e+00> : vector<8xf32>
    %53 = vector.multi_reduction <add>, %52, %cst_17 [1] : vector<8x8xf32> to vector<8xf32>
    %54 = vector.shape_cast %53 : vector<8xf32> to vector<8x1xf32>
    %55 = tpu.reciprocal %54 {approx = true} : vector<8x1xf32> -> vector<8x1xf32>
    %56 = vector.broadcast %55 : vector<8x1xf32> to vector<8x8xf32>
    %57 = arith.mulf %52, %56 : vector<8x8xf32>
    %58 = arith.truncf %57 : vector<8x8xf32> to vector<8x8xbf16>
    %cst_18 = arith.constant dense<0.000000e+00> : vector<8x8xf32>
    %59 = tpu.matmul %58, %42, %cst_18 {dimension_numbers = #tpu.dot_dimension_numbers<[1], [0], [0], [1], [0, 0, 1, 1], [], []>} : vector<8x8xbf16>, vector<8x8xbf16>, vector<8x8xf32> -> vector<8x8xf32>
    %60 = vector.extract_strided_slice %9 {offsets = [0, 16], sizes = [8, 8], strides = [1, 1]} : vector<8x32xf32> to vector<8x8xf32>
    %61 = arith.truncf %60 : vector<8x8xf32> to vector<8x8xbf16>
    %62 = vector.extract_strided_slice %10 {offsets = [0, 16], sizes = [8, 8], strides = [1, 1]} : vector<8x32xf32> to vector<8x8xf32>
    %63 = arith.truncf %62 : vector<8x8xf32> to vector<8x8xbf16>
    %64 = vector.extract_strided_slice %11 {offsets = [0, 16], sizes = [8, 8], strides = [1, 1]} : vector<8x32xf32> to vector<8x8xf32>
    %65 = arith.truncf %64 : vector<8x8xf32> to vector<8x8xbf16>
    %cst_19 = arith.constant dense<0.000000e+00> : vector<8x8xf32>
    %66 = tpu.matmul %61, %63, %cst_19 {dimension_numbers = #tpu.dot_dimension_numbers<[1], [1], [0], [0], [0, 0, 1, 0], [], []>} : vector<8x8xbf16>, vector<8x8xbf16>, vector<8x8xf32> -> vector<8x8xf32>
    %cst_20 = arith.constant 0.353553385 : f32
    %67 = vector.broadcast %cst_20 : f32 to vector<8x8xf32>
    %68 = arith.mulf %66, %67 : vector<8x8xf32>
    %69 = vector.broadcast %13 : vector<1x8xf32> to vector<8x8xf32>
    %70 = arith.addf %68, %69 : vector<8x8xf32>
    %cst_21 = arith.constant dense<0xFF800000> : vector<8xf32>
    %71 = vector.multi_reduction <maximumf>, %70, %cst_21 [1] : vector<8x8xf32> to vector<8xf32>
    %72 = vector.shape_cast %71 : vector<8xf32> to vector<8x1xf32>
    %73 = vector.broadcast %72 : vector<8x1xf32> to vector<8x8xf32>
    %74 = arith.subf %70, %73 : vector<8x8xf32>
    %75 = math.exp %74 : vector<8x8xf32>
    %cst_22 = arith.constant dense<0.000000e+00> : vector<8xf32>
    %76 = vector.multi_reduction <add>, %75, %cst_22 [1] : vector<8x8xf32> to vector<8xf32>
    %77 = vector.shape_cast %76 : vector<8xf32> to vector<8x1xf32>
    %78 = tpu.reciprocal %77 {approx = true} : vector<8x1xf32> -> vector<8x1xf32>
    %79 = vector.broadcast %78 : vector<8x1xf32> to vector<8x8xf32>
    %80 = arith.mulf %75, %79 : vector<8x8xf32>
    %81 = arith.truncf %80 : vector<8x8xf32> to vector<8x8xbf16>
    %cst_23 = arith.constant dense<0.000000e+00> : vector<8x8xf32>
    %82 = tpu.matmul %81, %65, %cst_23 {dimension_numbers = #tpu.dot_dimension_numbers<[1], [0], [0], [1], [0, 0, 1, 1], [], []>} : vector<8x8xbf16>, vector<8x8xbf16>, vector<8x8xf32> -> vector<8x8xf32>
    %83 = vector.extract_strided_slice %9 {offsets = [0, 24], sizes = [8, 8], strides = [1, 1]} : vector<8x32xf32> to vector<8x8xf32>
    %84 = arith.truncf %83 : vector<8x8xf32> to vector<8x8xbf16>
    %85 = vector.extract_strided_slice %10 {offsets = [0, 24], sizes = [8, 8], strides = [1, 1]} : vector<8x32xf32> to vector<8x8xf32>
    %86 = arith.truncf %85 : vector<8x8xf32> to vector<8x8xbf16>
    %87 = vector.extract_strided_slice %11 {offsets = [0, 24], sizes = [8, 8], strides = [1, 1]} : vector<8x32xf32> to vector<8x8xf32>
    %88 = arith.truncf %87 : vector<8x8xf32> to vector<8x8xbf16>
    %cst_24 = arith.constant dense<0.000000e+00> : vector<8x8xf32>
    %89 = tpu.matmul %84, %86, %cst_24 {dimension_numbers = #tpu.dot_dimension_numbers<[1], [1], [0], [0], [0, 0, 1, 0], [], []>} : vector<8x8xbf16>, vector<8x8xbf16>, vector<8x8xf32> -> vector<8x8xf32>
    %cst_25 = arith.constant 0.353553385 : f32
    %90 = vector.broadcast %cst_25 : f32 to vector<8x8xf32>
    %91 = arith.mulf %89, %90 : vector<8x8xf32>
    %92 = vector.broadcast %13 : vector<1x8xf32> to vector<8x8xf32>
    %93 = arith.addf %91, %92 : vector<8x8xf32>
    %cst_26 = arith.constant dense<0xFF800000> : vector<8xf32>
    %94 = vector.multi_reduction <maximumf>, %93, %cst_26 [1] : vector<8x8xf32> to vector<8xf32>
    %95 = vector.shape_cast %94 : vector<8xf32> to vector<8x1xf32>
    %96 = vector.broadcast %95 : vector<8x1xf32> to vector<8x8xf32>
    %97 = arith.subf %93, %96 : vector<8x8xf32>
    %98 = math.exp %97 : vector<8x8xf32>
    %cst_27 = arith.constant dense<0.000000e+00> : vector<8xf32>
    %99 = vector.multi_reduction <add>, %98, %cst_27 [1] : vector<8x8xf32> to vector<8xf32>
    %100 = vector.shape_cast %99 : vector<8xf32> to vector<8x1xf32>
    %101 = tpu.reciprocal %100 {approx = true} : vector<8x1xf32> -> vector<8x1xf32>
    %102 = vector.broadcast %101 : vector<8x1xf32> to vector<8x8xf32>
    %103 = arith.mulf %98, %102 : vector<8x8xf32>
    %104 = arith.truncf %103 : vector<8x8xf32> to vector<8x8xbf16>
    %cst_28 = arith.constant dense<0.000000e+00> : vector<8x8xf32>
    %105 = tpu.matmul %104, %88, %cst_28 {dimension_numbers = #tpu.dot_dimension_numbers<[1], [0], [0], [1], [0, 0, 1, 1], [], []>} : vector<8x8xbf16>, vector<8x8xbf16>, vector<8x8xf32> -> vector<8x8xf32>
    %106 = tpu.concatenate %36, %59, %82, %105 in 1 : vector<8x8xf32>, vector<8x8xf32>, vector<8x8xf32>, vector<8x8xf32> -> vector<8x32xf32>
    %107 = arith.truncf %106 : vector<8x32xf32> to vector<8x32xbf16>
    %c0_29 = arith.constant 0 : index
    %c0_30 = arith.constant 0 : index
    %108 = vector.load %arg5[%c0_29, %c0_30] : memref<32x32xf32, #tpu.memory_space<vmem>>, vector<32x32xf32>
    %109 = arith.truncf %108 : vector<32x32xf32> to vector<32x32xbf16>
    %cst_31 = arith.constant dense<0.000000e+00> : vector<8x32xf32>
    %110 = tpu.matmul %107, %109, %cst_31 {dimension_numbers = #tpu.dot_dimension_numbers<[1], [0], [0], [1], [0, 0, 1, 1], [], []>} : vector<8x32xbf16>, vector<32x32xbf16>, vector<8x32xf32> -> vector<8x32xf32>
    %c0_32 = arith.constant 0 : index
    %c0_33 = arith.constant 0 : index
    %111 = vector.load %arg6[%c0_32, %c0_33] : memref<1x32xf32, #tpu.memory_space<vmem>>, vector<1x32xf32>
    %112 = vector.broadcast %111 : vector<1x32xf32> to vector<8x32xf32>
    %113 = arith.addf %110, %112 : vector<8x32xf32>
    %114 = arith.addf %1, %113 : vector<8x32xf32>
    %c0_34 = arith.constant 0 : index
    %c0_35 = arith.constant 0 : index
    %115 = vector.load %arg8[%c0_34, %c0_35] : memref<1x32xf32, #tpu.memory_space<vmem>>, vector<1x32xf32>
    %c0_36 = arith.constant 0 : index
    %c0_37 = arith.constant 0 : index
    %116 = vector.load %arg9[%c0_36, %c0_37] : memref<1x32xf32, #tpu.memory_space<vmem>>, vector<1x32xf32>
    %cst_38 = arith.constant dense<0.000000e+00> : vector<8xf32>
    %117 = vector.multi_reduction <add>, %114, %cst_38 [1] : vector<8x32xf32> to vector<8xf32>
    %118 = vector.shape_cast %117 : vector<8xf32> to vector<8x1xf32>
    %cst_39 = arith.constant 3.200000e+01 : f32
    %119 = vector.broadcast %cst_39 : f32 to vector<8x1xf32>
    %120 = arith.divf %118, %119 : vector<8x1xf32>
    %121 = vector.broadcast %120 : vector<8x1xf32> to vector<8x32xf32>
    %122 = arith.subf %114, %121 : vector<8x32xf32>
    %123 = arith.mulf %122, %122 : vector<8x32xf32>
    %cst_40 = arith.constant dense<0.000000e+00> : vector<8xf32>
    %124 = vector.multi_reduction <add>, %123, %cst_40 [1] : vector<8x32xf32> to vector<8xf32>
    %125 = vector.shape_cast %124 : vector<8xf32> to vector<8x1xf32>
    %cst_41 = arith.constant 3.200000e+01 : f32
    %126 = vector.broadcast %cst_41 : f32 to vector<8x1xf32>
    %127 = arith.divf %125, %126 : vector<8x1xf32>
    %128 = vector.broadcast %120 : vector<8x1xf32> to vector<8x32xf32>
    %129 = arith.subf %114, %128 : vector<8x32xf32>
    %cst_42 = arith.constant 9.99999974E-6 : f32
    %130 = vector.broadcast %cst_42 : f32 to vector<8x1xf32>
    %131 = arith.addf %127, %130 : vector<8x1xf32>
    %132 = math.rsqrt %131 : vector<8x1xf32>
    %133 = vector.broadcast %132 : vector<8x1xf32> to vector<8x32xf32>
    %134 = arith.mulf %129, %133 : vector<8x32xf32>
    %135 = vector.broadcast %115 : vector<1x32xf32> to vector<8x32xf32>
    %136 = arith.mulf %134, %135 : vector<8x32xf32>
    %137 = vector.broadcast %116 : vector<1x32xf32> to vector<8x32xf32>
    %138 = arith.addf %136, %137 : vector<8x32xf32>
    %c0_43 = arith.constant 0 : index
    %c0_44 = arith.constant 0 : index
    %c0_45 = arith.constant 0 : index
    %139 = vector.load %arg10[%c0_43, %c0_44, %c0_45] : memref<1x8x32xf32, #tpu.memory_space<vmem>>, vector<1x8x32xf32>
    %140 = vector.shape_cast %139 : vector<1x8x32xf32> to vector<8x32xf32>
    %141 = vector.shape_cast %138 : vector<8x32xf32> to vector<1x8x32xf32>
    tpu.vector_store %arg10[%c0_43, %c0_44, %c0_45], %141 {strides = array<i32>} : memref<1x8x32xf32, #tpu.memory_space<vmem>>, vector<1x8x32xf32>,
    return
  }
  func.func @transform_0(%arg0: i32) -> (i32, i32, i32) {
    %c0_i32 = arith.constant 0 : i32
    %c0_i32_0 = arith.constant 0 : i32
    %c0_i32_1 = arith.constant 0 : i32
    return %arg0, %c0_i32, %c0_i32_0 : i32, i32, i32
  }
  func.func @transform_1(%arg0: i32) -> (i32, i32, i32) {
    %c0_i32 = arith.constant 0 : i32
    %c0_i32_0 = arith.constant 0 : i32
    %c0_i32_1 = arith.constant 0 : i32
    return %arg0, %c0_i32, %c0_i32_0 : i32, i32, i32
  }
  func.func @transform_2(%arg0: i32) -> (i32, i32) {
    %c0_i32 = arith.constant 0 : i32
    %c0_i32_0 = arith.constant 0 : i32
    %c0_i32_1 = arith.constant 0 : i32
    return %c0_i32, %c0_i32_0 : i32, i32
  }
  func.func @transform_3(%arg0: i32) -> (i32, i32) {
    %c0_i32 = arith.constant 0 : i32
    %c0_i32_0 = arith.constant 0 : i32
    %c0_i32_1 = arith.constant 0 : i32
    return %c0_i32, %c0_i32_0 : i32, i32
  }
  func.func @transform_4(%arg0: i32) -> (i32, i32) {
    %c0_i32 = arith.constant 0 : i32
    %c0_i32_0 = arith.constant 0 : i32
    %c0_i32_1 = arith.constant 0 : i32
    return %c0_i32, %c0_i32_0 : i32, i32
  }
  func.func @transform_5(%arg0: i32) -> (i32, i32) {
    %c0_i32 = arith.constant 0 : i32
    %c0_i32_0 = arith.constant 0 : i32
    %c0_i32_1 = arith.constant 0 : i32
    return %c0_i32, %c0_i32_0 : i32, i32
  }
  func.func @transform_6(%arg0: i32) -> (i32, i32, i32) {
    %c0_i32 = arith.constant 0 : i32
    %c0_i32_0 = arith.constant 0 : i32
    %c0_i32_1 = arith.constant 0 : i32
    return %arg0, %c0_i32, %c0_i32_0 : i32, i32, i32
  }
  func.func @transform_7(%arg0: i32) -> (i32, i32) {
    %c0_i32 = arith.constant 0 : i32
    %c0_i32_0 = arith.constant 0 : i32
    %c0_i32_1 = arith.constant 0 : i32
    return %c0_i32, %c0_i32_0 : i32, i32
  }
  func.func @transform_8(%arg0: i32) -> (i32, i32) {
    %c0_i32 = arith.constant 0 : i32
    %c0_i32_0 = arith.constant 0 : i32
    %c0_i32_1 = arith.constant 0 : i32
    return %c0_i32, %c0_i32_0 : i32, i32
  }
  func.func @transform_9(%arg0: i32) -> (i32, i32, i32) {
    %c0_i32 = arith.constant 0 : i32
    %c0_i32_0 = arith.constant 0 : i32
    %c0_i32_1 = arith.constant 0 : i32
    return %arg0, %c0_i32, %c0_i32_0 : i32, i32, i32
  }
}

module attributes {stable_mosaic.version = 11 : i64} {
  func.func @_mha_kernel(%arg0: i32, %arg1: memref<1x8x32xf32, #tpu.memory_space<vmem>>, %arg2: memref<1x8x32xf32, #tpu.memory_space<vmem>>, %arg3: memref<32x96xf32, #tpu.memory_space<vmem>>, %arg4: memref<1x96xf32, #tpu.memory_space<vmem>>, %arg5: memref<32x32xf32, #tpu.memory_space<vmem>>, %arg6: memref<1x32xf32, #tpu.memory_space<vmem>>, %arg7: memref<1x1x8xf32, #tpu.memory_space<vmem>>, %arg8: memref<1x32xf32, #tpu.memory_space<vmem>>, %arg9: memref<1x32xf32, #tpu.memory_space<vmem>>, %arg10: memref<1x8x32xf32, #tpu.memory_space<vmem>>) attributes {dimension_semantics = [#tpu.dimension_semantics<parallel>], iteration_bounds = array<i64: 2>, scalar_prefetch = 0 : i64, scratch_operands = 0 : i64, tpu.core_type = #tpu.core_type<tc>, window_params = [{transform_indices = @transform_0, window_bounds = array<i64: 1, 8, 32>}, {transform_indices = @transform_1, window_bounds = array<i64: 1, 8, 32>}, {pipeline_mode = #tpu.pipeline_mode<synchronous>, transform_indices = @transform_2, window_bounds = array<i64: 32, 96>}, {pipeline_mode = #tpu.pipeline_mode<synchronous>, transform_indices = @transform_3, window_bounds = array<i64: 1, 96>}, {pipeline_mode = #tpu.pipeline_mode<synchronous>, transform_indices = @transform_4, window_bounds = array<i64: 32, 32>}, {pipeline_mode = #tpu.pipeline_mode<synchronous>, transform_indices = @transform_5, window_bounds = array<i64: 1, 32>}, {transform_indices = @transform_6, window_bounds = array<i64: 1, 1, 8>}, {pipeline_mode = #tpu.pipeline_mode<synchronous>, transform_indices = @transform_7, window_bounds = array<i64: 1, 32>}, {pipeline_mode = #tpu.pipeline_mode<synchronous>, transform_indices = @transform_8, window_bounds = array<i64: 1, 32>}, {transform_indices = @transform_9, window_bounds = array<i64: 1, 8, 32>}]} {
    %c0 = arith.constant 0 : index
    %c0_0 = arith.constant 0 : index
    %c0_1 = arith.constant 0 : index
    %0 = vector.load %arg1[%c0, %c0_0, %c0_1] : memref<1x8x32xf32, #tpu.memory_space<vmem>>, vector<1x8x32xf32>
    %1 = vector.shape_cast %0 : vector<1x8x32xf32> to vector<8x32xf32>
    %c0_2 = arith.constant 0 : index
    %c0_3 = arith.constant 0 : index
    %c0_4 = arith.constant 0 : index
    %2 = vector.load %arg2[%c0_2, %c0_3, %c0_4] : memref<1x8x32xf32, #tpu.memory_space<vmem>>, vector<1x8x32xf32>
    %3 = vector.shape_cast %2 : vector<1x8x32xf32> to vector<8x32xf32>
    %4 = arith.truncf %1 : vector<8x32xf32> to vector<8x32xbf16>
    %c0_5 = arith.constant 0 : index
    %c0_6 = arith.constant 0 : index
    %5 = vector.load %arg3[%c0_5, %c0_6] : memref<32x96xf32, #tpu.memory_space<vmem>>, vector<32x32xf32>
    %6 = arith.truncf %5 : vector<32x32xf32> to vector<32x32xbf16>
    %cst = arith.constant dense<0.000000e+00> : vector<8x32xf32>
    %7 = tpu.matmul %4, %6, %cst {dimension_numbers = #tpu.dot_dimension_numbers<[1], [0], [0], [1], [0, 0, 1, 1], [], []>} : vector<8x32xbf16>, vector<32x32xbf16>, vector<8x32xf32> -> vector<8x32xf32>
    %c0_7 = arith.constant 0 : index
    %c0_8 = arith.constant 0 : index
    %8 = vector.load %arg4[%c0_7, %c0_8] : memref<1x96xf32, #tpu.memory_space<vmem>>, vector<1x32xf32>
    %9 = vector.broadcast %8 : vector<1x32xf32> to vector<8x32xf32>
    %10 = arith.addf %7, %9 : vector<8x32xf32>
    %11 = arith.truncf %3 : vector<8x32xf32> to vector<8x32xbf16>
    %c0_9 = arith.constant 0 : index
    %c32 = arith.constant 32 : index
    %12 = vector.load %arg3[%c0_9, %c32] : memref<32x96xf32, #tpu.memory_space<vmem>>, vector<32x64xf32>
    %13 = arith.truncf %12 : vector<32x64xf32> to vector<32x64xbf16>
    %cst_10 = arith.constant dense<0.000000e+00> : vector<8x64xf32>
    %14 = tpu.matmul %11, %13, %cst_10 {dimension_numbers = #tpu.dot_dimension_numbers<[1], [0], [0], [1], [0, 0, 1, 1], [], []>} : vector<8x32xbf16>, vector<32x64xbf16>, vector<8x64xf32> -> vector<8x64xf32>
    %c0_11 = arith.constant 0 : index
    %c32_12 = arith.constant 32 : index
    %15 = vector.load %arg4[%c0_11, %c32_12] : memref<1x96xf32, #tpu.memory_space<vmem>>, vector<1x64xf32>
    %16 = vector.broadcast %15 : vector<1x64xf32> to vector<8x64xf32>
    %17 = arith.addf %14, %16 : vector<8x64xf32>
    %18 = vector.extract_strided_slice %17 {offsets = [0, 0], sizes = [8, 32], strides = [1, 1]} : vector<8x64xf32> to vector<8x32xf32>
    %19 = vector.extract_strided_slice %17 {offsets = [0, 32], sizes = [8, 32], strides = [1, 1]} : vector<8x64xf32> to vector<8x32xf32>
    %c0_13 = arith.constant 0 : index
    %c0_14 = arith.constant 0 : index
    %c0_15 = arith.constant 0 : index
    %20 = vector.load %arg7[%c0_13, %c0_14, %c0_15] : memref<1x1x8xf32, #tpu.memory_space<vmem>>, vector<1x1x8xf32>
    %21 = vector.shape_cast %20 : vector<1x1x8xf32> to vector<1x8xf32>
    %22 = vector.extract_strided_slice %10 {offsets = [0, 0], sizes = [8, 8], strides = [1, 1]} : vector<8x32xf32> to vector<8x8xf32>
    %23 = arith.truncf %22 : vector<8x8xf32> to vector<8x8xbf16>
    %24 = vector.extract_strided_slice %18 {offsets = [0, 0], sizes = [8, 8], strides = [1, 1]} : vector<8x32xf32> to vector<8x8xf32>
    %25 = arith.truncf %24 : vector<8x8xf32> to vector<8x8xbf16>
    %26 = vector.extract_strided_slice %19 {offsets = [0, 0], sizes = [8, 8], strides = [1, 1]} : vector<8x32xf32> to vector<8x8xf32>
    %27 = arith.truncf %26 : vector<8x8xf32> to vector<8x8xbf16>
    %cst_16 = arith.constant dense<0.000000e+00> : vector<8x8xf32>
    %28 = tpu.matmul %23, %25, %cst_16 {dimension_numbers = #tpu.dot_dimension_numbers<[1], [1], [0], [0], [0, 0, 1, 0], [], []>} : vector<8x8xbf16>, vector<8x8xbf16>, vector<8x8xf32> -> vector<8x8xf32>
    %cst_17 = arith.constant 0.353553385 : f32
    %29 = vector.broadcast %cst_17 : f32 to vector<8x8xf32>
    %30 = arith.mulf %28, %29 : vector<8x8xf32>
    %31 = vector.broadcast %21 : vector<1x8xf32> to vector<8x8xf32>
    %32 = arith.addf %30, %31 : vector<8x8xf32>
    %cst_18 = arith.constant dense<0xFF800000> : vector<8xf32>
    %33 = vector.multi_reduction <maximumf>, %32, %cst_18 [1] : vector<8x8xf32> to vector<8xf32>
    %34 = vector.shape_cast %33 : vector<8xf32> to vector<8x1xf32>
    %35 = vector.broadcast %34 : vector<8x1xf32> to vector<8x8xf32>
    %36 = arith.subf %32, %35 : vector<8x8xf32>
    %37 = math.exp %36 : vector<8x8xf32>
    %cst_19 = arith.constant dense<0.000000e+00> : vector<8xf32>
    %38 = vector.multi_reduction <add>, %37, %cst_19 [1] : vector<8x8xf32> to vector<8xf32>
    %39 = vector.shape_cast %38 : vector<8xf32> to vector<8x1xf32>
    %40 = tpu.reciprocal %39 {approx = true} : vector<8x1xf32> -> vector<8x1xf32>
    %41 = vector.broadcast %40 : vector<8x1xf32> to vector<8x8xf32>
    %42 = arith.mulf %37, %41 : vector<8x8xf32>
    %43 = arith.truncf %42 : vector<8x8xf32> to vector<8x8xbf16>
    %cst_20 = arith.constant dense<0.000000e+00> : vector<8x8xf32>
    %44 = tpu.matmul %43, %27, %cst_20 {dimension_numbers = #tpu.dot_dimension_numbers<[1], [0], [0], [1], [0, 0, 1, 1], [], []>} : vector<8x8xbf16>, vector<8x8xbf16>, vector<8x8xf32> -> vector<8x8xf32>
    %45 = vector.extract_strided_slice %10 {offsets = [0, 8], sizes = [8, 8], strides = [1, 1]} : vector<8x32xf32> to vector<8x8xf32>
    %46 = arith.truncf %45 : vector<8x8xf32> to vector<8x8xbf16>
    %47 = vector.extract_strided_slice %18 {offsets = [0, 8], sizes = [8, 8], strides = [1, 1]} : vector<8x32xf32> to vector<8x8xf32>
    %48 = arith.truncf %47 : vector<8x8xf32> to vector<8x8xbf16>
    %49 = vector.extract_strided_slice %19 {offsets = [0, 8], sizes = [8, 8], strides = [1, 1]} : vector<8x32xf32> to vector<8x8xf32>
    %50 = arith.truncf %49 : vector<8x8xf32> to vector<8x8xbf16>
    %cst_21 = arith.constant dense<0.000000e+00> : vector<8x8xf32>
    %51 = tpu.matmul %46, %48, %cst_21 {dimension_numbers = #tpu.dot_dimension_numbers<[1], [1], [0], [0], [0, 0, 1, 0], [], []>} : vector<8x8xbf16>, vector<8x8xbf16>, vector<8x8xf32> -> vector<8x8xf32>
    %cst_22 = arith.constant 0.353553385 : f32
    %52 = vector.broadcast %cst_22 : f32 to vector<8x8xf32>
    %53 = arith.mulf %51, %52 : vector<8x8xf32>
    %54 = vector.broadcast %21 : vector<1x8xf32> to vector<8x8xf32>
    %55 = arith.addf %53, %54 : vector<8x8xf32>
    %cst_23 = arith.constant dense<0xFF800000> : vector<8xf32>
    %56 = vector.multi_reduction <maximumf>, %55, %cst_23 [1] : vector<8x8xf32> to vector<8xf32>
    %57 = vector.shape_cast %56 : vector<8xf32> to vector<8x1xf32>
    %58 = vector.broadcast %57 : vector<8x1xf32> to vector<8x8xf32>
    %59 = arith.subf %55, %58 : vector<8x8xf32>
    %60 = math.exp %59 : vector<8x8xf32>
    %cst_24 = arith.constant dense<0.000000e+00> : vector<8xf32>
    %61 = vector.multi_reduction <add>, %60, %cst_24 [1] : vector<8x8xf32> to vector<8xf32>
    %62 = vector.shape_cast %61 : vector<8xf32> to vector<8x1xf32>
    %63 = tpu.reciprocal %62 {approx = true} : vector<8x1xf32> -> vector<8x1xf32>
    %64 = vector.broadcast %63 : vector<8x1xf32> to vector<8x8xf32>
    %65 = arith.mulf %60, %64 : vector<8x8xf32>
    %66 = arith.truncf %65 : vector<8x8xf32> to vector<8x8xbf16>
    %cst_25 = arith.constant dense<0.000000e+00> : vector<8x8xf32>
    %67 = tpu.matmul %66, %50, %cst_25 {dimension_numbers = #tpu.dot_dimension_numbers<[1], [0], [0], [1], [0, 0, 1, 1], [], []>} : vector<8x8xbf16>, vector<8x8xbf16>, vector<8x8xf32> -> vector<8x8xf32>
    %68 = vector.extract_strided_slice %10 {offsets = [0, 16], sizes = [8, 8], strides = [1, 1]} : vector<8x32xf32> to vector<8x8xf32>
    %69 = arith.truncf %68 : vector<8x8xf32> to vector<8x8xbf16>
    %70 = vector.extract_strided_slice %18 {offsets = [0, 16], sizes = [8, 8], strides = [1, 1]} : vector<8x32xf32> to vector<8x8xf32>
    %71 = arith.truncf %70 : vector<8x8xf32> to vector<8x8xbf16>
    %72 = vector.extract_strided_slice %19 {offsets = [0, 16], sizes = [8, 8], strides = [1, 1]} : vector<8x32xf32> to vector<8x8xf32>
    %73 = arith.truncf %72 : vector<8x8xf32> to vector<8x8xbf16>
    %cst_26 = arith.constant dense<0.000000e+00> : vector<8x8xf32>
    %74 = tpu.matmul %69, %71, %cst_26 {dimension_numbers = #tpu.dot_dimension_numbers<[1], [1], [0], [0], [0, 0, 1, 0], [], []>} : vector<8x8xbf16>, vector<8x8xbf16>, vector<8x8xf32> -> vector<8x8xf32>
    %cst_27 = arith.constant 0.353553385 : f32
    %75 = vector.broadcast %cst_27 : f32 to vector<8x8xf32>
    %76 = arith.mulf %74, %75 : vector<8x8xf32>
    %77 = vector.broadcast %21 : vector<1x8xf32> to vector<8x8xf32>
    %78 = arith.addf %76, %77 : vector<8x8xf32>
    %cst_28 = arith.constant dense<0xFF800000> : vector<8xf32>
    %79 = vector.multi_reduction <maximumf>, %78, %cst_28 [1] : vector<8x8xf32> to vector<8xf32>
    %80 = vector.shape_cast %79 : vector<8xf32> to vector<8x1xf32>
    %81 = vector.broadcast %80 : vector<8x1xf32> to vector<8x8xf32>
    %82 = arith.subf %78, %81 : vector<8x8xf32>
    %83 = math.exp %82 : vector<8x8xf32>
    %cst_29 = arith.constant dense<0.000000e+00> : vector<8xf32>
    %84 = vector.multi_reduction <add>, %83, %cst_29 [1] : vector<8x8xf32> to vector<8xf32>
    %85 = vector.shape_cast %84 : vector<8xf32> to vector<8x1xf32>
    %86 = tpu.reciprocal %85 {approx = true} : vector<8x1xf32> -> vector<8x1xf32>
    %87 = vector.broadcast %86 : vector<8x1xf32> to vector<8x8xf32>
    %88 = arith.mulf %83, %87 : vector<8x8xf32>
    %89 = arith.truncf %88 : vector<8x8xf32> to vector<8x8xbf16>
    %cst_30 = arith.constant dense<0.000000e+00> : vector<8x8xf32>
    %90 = tpu.matmul %89, %73, %cst_30 {dimension_numbers = #tpu.dot_dimension_numbers<[1], [0], [0], [1], [0, 0, 1, 1], [], []>} : vector<8x8xbf16>, vector<8x8xbf16>, vector<8x8xf32> -> vector<8x8xf32>
    %91 = vector.extract_strided_slice %10 {offsets = [0, 24], sizes = [8, 8], strides = [1, 1]} : vector<8x32xf32> to vector<8x8xf32>
    %92 = arith.truncf %91 : vector<8x8xf32> to vector<8x8xbf16>
    %93 = vector.extract_strided_slice %18 {offsets = [0, 24], sizes = [8, 8], strides = [1, 1]} : vector<8x32xf32> to vector<8x8xf32>
    %94 = arith.truncf %93 : vector<8x8xf32> to vector<8x8xbf16>
    %95 = vector.extract_strided_slice %19 {offsets = [0, 24], sizes = [8, 8], strides = [1, 1]} : vector<8x32xf32> to vector<8x8xf32>
    %96 = arith.truncf %95 : vector<8x8xf32> to vector<8x8xbf16>
    %cst_31 = arith.constant dense<0.000000e+00> : vector<8x8xf32>
    %97 = tpu.matmul %92, %94, %cst_31 {dimension_numbers = #tpu.dot_dimension_numbers<[1], [1], [0], [0], [0, 0, 1, 0], [], []>} : vector<8x8xbf16>, vector<8x8xbf16>, vector<8x8xf32> -> vector<8x8xf32>
    %cst_32 = arith.constant 0.353553385 : f32
    %98 = vector.broadcast %cst_32 : f32 to vector<8x8xf32>
    %99 = arith.mulf %97, %98 : vector<8x8xf32>
    %100 = vector.broadcast %21 : vector<1x8xf32> to vector<8x8xf32>
    %101 = arith.addf %99, %100 : vector<8x8xf32>
    %cst_33 = arith.constant dense<0xFF800000> : vector<8xf32>
    %102 = vector.multi_reduction <maximumf>, %101, %cst_33 [1] : vector<8x8xf32> to vector<8xf32>
    %103 = vector.shape_cast %102 : vector<8xf32> to vector<8x1xf32>
    %104 = vector.broadcast %103 : vector<8x1xf32> to vector<8x8xf32>
    %105 = arith.subf %101, %104 : vector<8x8xf32>
    %106 = math.exp %105 : vector<8x8xf32>
    %cst_34 = arith.constant dense<0.000000e+00> : vector<8xf32>
    %107 = vector.multi_reduction <add>, %106, %cst_34 [1] : vector<8x8xf32> to vector<8xf32>
    %108 = vector.shape_cast %107 : vector<8xf32> to vector<8x1xf32>
    %109 = tpu.reciprocal %108 {approx = true} : vector<8x1xf32> -> vector<8x1xf32>
    %110 = vector.broadcast %109 : vector<8x1xf32> to vector<8x8xf32>
    %111 = arith.mulf %106, %110 : vector<8x8xf32>
    %112 = arith.truncf %111 : vector<8x8xf32> to vector<8x8xbf16>
    %cst_35 = arith.constant dense<0.000000e+00> : vector<8x8xf32>
    %113 = tpu.matmul %112, %96, %cst_35 {dimension_numbers = #tpu.dot_dimension_numbers<[1], [0], [0], [1], [0, 0, 1, 1], [], []>} : vector<8x8xbf16>, vector<8x8xbf16>, vector<8x8xf32> -> vector<8x8xf32>
    %114 = tpu.concatenate %44, %67, %90, %113 in 1 : vector<8x8xf32>, vector<8x8xf32>, vector<8x8xf32>, vector<8x8xf32> -> vector<8x32xf32>
    %115 = arith.truncf %114 : vector<8x32xf32> to vector<8x32xbf16>
    %c0_36 = arith.constant 0 : index
    %c0_37 = arith.constant 0 : index
    %116 = vector.load %arg5[%c0_36, %c0_37] : memref<32x32xf32, #tpu.memory_space<vmem>>, vector<32x32xf32>
    %117 = arith.truncf %116 : vector<32x32xf32> to vector<32x32xbf16>
    %cst_38 = arith.constant dense<0.000000e+00> : vector<8x32xf32>
    %118 = tpu.matmul %115, %117, %cst_38 {dimension_numbers = #tpu.dot_dimension_numbers<[1], [0], [0], [1], [0, 0, 1, 1], [], []>} : vector<8x32xbf16>, vector<32x32xbf16>, vector<8x32xf32> -> vector<8x32xf32>
    %c0_39 = arith.constant 0 : index
    %c0_40 = arith.constant 0 : index
    %119 = vector.load %arg6[%c0_39, %c0_40] : memref<1x32xf32, #tpu.memory_space<vmem>>, vector<1x32xf32>
    %120 = vector.broadcast %119 : vector<1x32xf32> to vector<8x32xf32>
    %121 = arith.addf %118, %120 : vector<8x32xf32>
    %122 = arith.addf %1, %121 : vector<8x32xf32>
    %c0_41 = arith.constant 0 : index
    %c0_42 = arith.constant 0 : index
    %123 = vector.load %arg8[%c0_41, %c0_42] : memref<1x32xf32, #tpu.memory_space<vmem>>, vector<1x32xf32>
    %c0_43 = arith.constant 0 : index
    %c0_44 = arith.constant 0 : index
    %124 = vector.load %arg9[%c0_43, %c0_44] : memref<1x32xf32, #tpu.memory_space<vmem>>, vector<1x32xf32>
    %cst_45 = arith.constant dense<0.000000e+00> : vector<8xf32>
    %125 = vector.multi_reduction <add>, %122, %cst_45 [1] : vector<8x32xf32> to vector<8xf32>
    %126 = vector.shape_cast %125 : vector<8xf32> to vector<8x1xf32>
    %cst_46 = arith.constant 3.200000e+01 : f32
    %127 = vector.broadcast %cst_46 : f32 to vector<8x1xf32>
    %128 = arith.divf %126, %127 : vector<8x1xf32>
    %129 = vector.broadcast %128 : vector<8x1xf32> to vector<8x32xf32>
    %130 = arith.subf %122, %129 : vector<8x32xf32>
    %131 = arith.mulf %130, %130 : vector<8x32xf32>
    %cst_47 = arith.constant dense<0.000000e+00> : vector<8xf32>
    %132 = vector.multi_reduction <add>, %131, %cst_47 [1] : vector<8x32xf32> to vector<8xf32>
    %133 = vector.shape_cast %132 : vector<8xf32> to vector<8x1xf32>
    %cst_48 = arith.constant 3.200000e+01 : f32
    %134 = vector.broadcast %cst_48 : f32 to vector<8x1xf32>
    %135 = arith.divf %133, %134 : vector<8x1xf32>
    %136 = vector.broadcast %128 : vector<8x1xf32> to vector<8x32xf32>
    %137 = arith.subf %122, %136 : vector<8x32xf32>
    %cst_49 = arith.constant 9.99999974E-6 : f32
    %138 = vector.broadcast %cst_49 : f32 to vector<8x1xf32>
    %139 = arith.addf %135, %138 : vector<8x1xf32>
    %140 = math.rsqrt %139 : vector<8x1xf32>
    %141 = vector.broadcast %140 : vector<8x1xf32> to vector<8x32xf32>
    %142 = arith.mulf %137, %141 : vector<8x32xf32>
    %143 = vector.broadcast %123 : vector<1x32xf32> to vector<8x32xf32>
    %144 = arith.mulf %142, %143 : vector<8x32xf32>
    %145 = vector.broadcast %124 : vector<1x32xf32> to vector<8x32xf32>
    %146 = arith.addf %144, %145 : vector<8x32xf32>
    %c0_50 = arith.constant 0 : index
    %c0_51 = arith.constant 0 : index
    %c0_52 = arith.constant 0 : index
    %147 = vector.load %arg10[%c0_50, %c0_51, %c0_52] : memref<1x8x32xf32, #tpu.memory_space<vmem>>, vector<1x8x32xf32>
    %148 = vector.shape_cast %147 : vector<1x8x32xf32> to vector<8x32xf32>
    %149 = vector.shape_cast %146 : vector<8x32xf32> to vector<1x8x32xf32>
    tpu.vector_store %arg10[%c0_50, %c0_51, %c0_52], %149 {strides = array<i32>} : memref<1x8x32xf32, #tpu.memory_space<vmem>>, vector<1x8x32xf32>,
    return
  }
  func.func @transform_0(%arg0: i32) -> (i32, i32, i32) {
    %c0_i32 = arith.constant 0 : i32
    %c0_i32_0 = arith.constant 0 : i32
    %c0_i32_1 = arith.constant 0 : i32
    return %arg0, %c0_i32, %c0_i32_0 : i32, i32, i32
  }
  func.func @transform_1(%arg0: i32) -> (i32, i32, i32) {
    %c0_i32 = arith.constant 0 : i32
    %c0_i32_0 = arith.constant 0 : i32
    %c0_i32_1 = arith.constant 0 : i32
    return %arg0, %c0_i32, %c0_i32_0 : i32, i32, i32
  }
  func.func @transform_2(%arg0: i32) -> (i32, i32) {
    %c0_i32 = arith.constant 0 : i32
    %c0_i32_0 = arith.constant 0 : i32
    %c0_i32_1 = arith.constant 0 : i32
    return %c0_i32, %c0_i32_0 : i32, i32
  }
  func.func @transform_3(%arg0: i32) -> (i32, i32) {
    %c0_i32 = arith.constant 0 : i32
    %c0_i32_0 = arith.constant 0 : i32
    %c0_i32_1 = arith.constant 0 : i32
    return %c0_i32, %c0_i32_0 : i32, i32
  }
  func.func @transform_4(%arg0: i32) -> (i32, i32) {
    %c0_i32 = arith.constant 0 : i32
    %c0_i32_0 = arith.constant 0 : i32
    %c0_i32_1 = arith.constant 0 : i32
    return %c0_i32, %c0_i32_0 : i32, i32
  }
  func.func @transform_5(%arg0: i32) -> (i32, i32) {
    %c0_i32 = arith.constant 0 : i32
    %c0_i32_0 = arith.constant 0 : i32
    %c0_i32_1 = arith.constant 0 : i32
    return %c0_i32, %c0_i32_0 : i32, i32
  }
  func.func @transform_6(%arg0: i32) -> (i32, i32, i32) {
    %c0_i32 = arith.constant 0 : i32
    %c0_i32_0 = arith.constant 0 : i32
    %c0_i32_1 = arith.constant 0 : i32
    return %arg0, %c0_i32, %c0_i32_0 : i32, i32, i32
  }
  func.func @transform_7(%arg0: i32) -> (i32, i32) {
    %c0_i32 = arith.constant 0 : i32
    %c0_i32_0 = arith.constant 0 : i32
    %c0_i32_1 = arith.constant 0 : i32
    return %c0_i32, %c0_i32_0 : i32, i32
  }
  func.func @transform_8(%arg0: i32) -> (i32, i32) {
    %c0_i32 = arith.constant 0 : i32
    %c0_i32_0 = arith.constant 0 : i32
    %c0_i32_1 = arith.constant 0 : i32
    return %c0_i32, %c0_i32_0 : i32, i32
  }
  func.func @transform_9(%arg0: i32) -> (i32, i32, i32) {
    %c0_i32 = arith.constant 0 : i32
    %c0_i32_0 = arith.constant 0 : i32
    %c0_i32_1 = arith.constant 0 : i32
    return %arg0, %c0_i32, %c0_i32_0 : i32, i32, i32
  }
}

module attributes {stable_mosaic.version = 11 : i64} {
  func.func @_mha_kernel(%arg0: i32, %arg1: memref<1x8x32xf32, #tpu.memory_space<vmem>>, %arg2: memref<1x8x32xf32, #tpu.memory_space<vmem>>, %arg3: memref<32x96xf32, #tpu.memory_space<vmem>>, %arg4: memref<1x96xf32, #tpu.memory_space<vmem>>, %arg5: memref<32x32xf32, #tpu.memory_space<vmem>>, %arg6: memref<1x32xf32, #tpu.memory_space<vmem>>, %arg7: memref<1x1x8xf32, #tpu.memory_space<vmem>>, %arg8: memref<1x32xf32, #tpu.memory_space<vmem>>, %arg9: memref<1x32xf32, #tpu.memory_space<vmem>>, %arg10: memref<1x8x32xf32, #tpu.memory_space<vmem>>) attributes {dimension_semantics = [#tpu.dimension_semantics<parallel>], iteration_bounds = array<i64: 2>, scalar_prefetch = 0 : i64, scratch_operands = 0 : i64, tpu.core_type = #tpu.core_type<tc>, window_params = [{transform_indices = @transform_0, window_bounds = array<i64: 1, 8, 32>}, {transform_indices = @transform_1, window_bounds = array<i64: 1, 8, 32>}, {pipeline_mode = #tpu.pipeline_mode<synchronous>, transform_indices = @transform_2, window_bounds = array<i64: 32, 96>}, {pipeline_mode = #tpu.pipeline_mode<synchronous>, transform_indices = @transform_3, window_bounds = array<i64: 1, 96>}, {pipeline_mode = #tpu.pipeline_mode<synchronous>, transform_indices = @transform_4, window_bounds = array<i64: 32, 32>}, {pipeline_mode = #tpu.pipeline_mode<synchronous>, transform_indices = @transform_5, window_bounds = array<i64: 1, 32>}, {transform_indices = @transform_6, window_bounds = array<i64: 1, 1, 8>}, {pipeline_mode = #tpu.pipeline_mode<synchronous>, transform_indices = @transform_7, window_bounds = array<i64: 1, 32>}, {pipeline_mode = #tpu.pipeline_mode<synchronous>, transform_indices = @transform_8, window_bounds = array<i64: 1, 32>}, {transform_indices = @transform_9, window_bounds = array<i64: 1, 8, 32>}]} {
    %c0 = arith.constant 0 : index
    %c0_0 = arith.constant 0 : index
    %c0_1 = arith.constant 0 : index
    %0 = vector.load %arg1[%c0, %c0_0, %c0_1] : memref<1x8x32xf32, #tpu.memory_space<vmem>>, vector<1x8x32xf32>
    %1 = vector.shape_cast %0 : vector<1x8x32xf32> to vector<8x32xf32>
    %2 = arith.truncf %1 : vector<8x32xf32> to vector<8x32xbf16>
    %c0_2 = arith.constant 0 : index
    %c0_3 = arith.constant 0 : index
    %3 = vector.load %arg3[%c0_2, %c0_3] : memref<32x96xf32, #tpu.memory_space<vmem>>, vector<32x96xf32>
    %4 = arith.truncf %3 : vector<32x96xf32> to vector<32x96xbf16>
    %cst = arith.constant dense<0.000000e+00> : vector<8x96xf32>
    %5 = tpu.matmul %2, %4, %cst {dimension_numbers = #tpu.dot_dimension_numbers<[1], [0], [0], [1], [0, 0, 1, 1], [], []>} : vector<8x32xbf16>, vector<32x96xbf16>, vector<8x96xf32> -> vector<8x96xf32>
    %c0_4 = arith.constant 0 : index
    %c0_5 = arith.constant 0 : index
    %6 = vector.load %arg4[%c0_4, %c0_5] : memref<1x96xf32, #tpu.memory_space<vmem>>, vector<1x96xf32>
    %7 = vector.broadcast %6 : vector<1x96xf32> to vector<8x96xf32>
    %8 = arith.addf %5, %7 : vector<8x96xf32>
    %9 = vector.extract_strided_slice %8 {offsets = [0, 0], sizes = [8, 32], strides = [1, 1]} : vector<8x96xf32> to vector<8x32xf32>
    %10 = vector.extract_strided_slice %8 {offsets = [0, 32], sizes = [8, 32], strides = [1, 1]} : vector<8x96xf32> to vector<8x32xf32>
    %11 = vector.extract_strided_slice %8 {offsets = [0, 64], sizes = [8, 32], strides = [1, 1]} : vector<8x96xf32> to vector<8x32xf32>
    %c0_6 = arith.constant 0 : index
    %c0_7 = arith.constant 0 : index
    %c0_8 = arith.constant 0 : index
    %12 = vector.load %arg7[%c0_6, %c0_7, %c0_8] : memref<1x1x8xf32, #tpu.memory_space<vmem>>, vector<1x1x8xf32>
    %13 = vector.shape_cast %12 : vector<1x1x8xf32> to vector<1x8xf32>
    %14 = tpu.iota {dimensions = array<i32: 0>} : vector<8x8xi32>
    %15 = tpu.iota {dimensions = array<i32: 1>} : vector<8x8xi32>
    %16 = arith.cmpi sgt, %15, %14 : vector<8x8xi32>
    %cst_9 = arith.constant -1.000000e+09 : f32
    %cst_10 = arith.constant 0.000000e+00 : f32
    %17 = vector.broadcast %cst_9 : f32 to vector<8x8xf32>
    %18 = vector.broadcast %cst_10 : f32 to vector<8x8xf32>
    %19 = arith.select %16, %17, %18 : vector<8x8xi1>, vector<8x8xf32>
    %20 = vector.broadcast %13 : vector<1x8xf32> to vector<8x8xf32>
    %21 = arith.addf %20, %19 : vector<8x8xf32>
    %22 = vector.extract_strided_slice %9 {offsets = [0, 0], sizes = [8, 8], strides = [1, 1]} : vector<8x32xf32> to vector<8x8xf32>
    %23 = arith.truncf %22 : vector<8x8xf32> to vector<8x8xbf16>
    %24 = vector.extract_strided_slice %10 {offsets = [0, 0], sizes = [8, 8], strides = [1, 1]} : vector<8x32xf32> to vector<8x8xf32>
    %25 = arith.truncf %24 : vector<8x8xf32> to vector<8x8xbf16>
    %26 = vector.extract_strided_slice %11 {offsets = [0, 0], sizes = [8, 8], strides = [1, 1]} : vector<8x32xf32> to vector<8x8xf32>
    %27 = arith.truncf %26 : vector<8x8xf32> to vector<8x8xbf16>
    %cst_11 = arith.constant dense<0.000000e+00> : vector<8x8xf32>
    %28 = tpu.matmul %23, %25, %cst_11 {dimension_numbers = #tpu.dot_dimension_numbers<[1], [1], [0], [0], [0, 0, 1, 0], [], []>} : vector<8x8xbf16>, vector<8x8xbf16>, vector<8x8xf32> -> vector<8x8xf32>
    %cst_12 = arith.constant 0.353553385 : f32
    %29 = vector.broadcast %cst_12 : f32 to vector<8x8xf32>
    %30 = arith.mulf %28, %29 : vector<8x8xf32>
    %31 = arith.addf %30, %21 : vector<8x8xf32>
    %cst_13 = arith.constant dense<0xFF800000> : vector<8xf32>
    %32 = vector.multi_reduction <maximumf>, %31, %cst_13 [1] : vector<8x8xf32> to vector<8xf32>
    %33 = vector.shape_cast %32 : vector<8xf32> to vector<8x1xf32>
    %34 = vector.broadcast %33 : vector<8x1xf32> to vector<8x8xf32>
    %35 = arith.subf %31, %34 : vector<8x8xf32>
    %36 = math.exp %35 : vector<8x8xf32>
    %cst_14 = arith.constant dense<0.000000e+00> : vector<8xf32>
    %37 = vector.multi_reduction <add>, %36, %cst_14 [1] : vector<8x8xf32> to vector<8xf32>
    %38 = vector.shape_cast %37 : vector<8xf32> to vector<8x1xf32>
    %39 = tpu.reciprocal %38 {approx = true} : vector<8x1xf32> -> vector<8x1xf32>
    %40 = vector.broadcast %39 : vector<8x1xf32> to vector<8x8xf32>
    %41 = arith.mulf %36, %40 : vector<8x8xf32>
    %42 = arith.truncf %41 : vector<8x8xf32> to vector<8x8xbf16>
    %cst_15 = arith.constant dense<0.000000e+00> : vector<8x8xf32>
    %43 = tpu.matmul %42, %27, %cst_15 {dimension_numbers = #tpu.dot_dimension_numbers<[1], [0], [0], [1], [0, 0, 1, 1], [], []>} : vector<8x8xbf16>, vector<8x8xbf16>, vector<8x8xf32> -> vector<8x8xf32>
    %44 = vector.extract_strided_slice %9 {offsets = [0, 8], sizes = [8, 8], strides = [1, 1]} : vector<8x32xf32> to vector<8x8xf32>
    %45 = arith.truncf %44 : vector<8x8xf32> to vector<8x8xbf16>
    %46 = vector.extract_strided_slice %10 {offsets = [0, 8], sizes = [8, 8], strides = [1, 1]} : vector<8x32xf32> to vector<8x8xf32>
    %47 = arith.truncf %46 : vector<8x8xf32> to vector<8x8xbf16>
    %48 = vector.extract_strided_slice %11 {offsets = [0, 8], sizes = [8, 8], strides = [1, 1]} : vector<8x32xf32> to vector<8x8xf32>
    %49 = arith.truncf %48 : vector<8x8xf32> to vector<8x8xbf16>
    %cst_16 = arith.constant dense<0.000000e+00> : vector<8x8xf32>
    %50 = tpu.matmul %45, %47, %cst_16 {dimension_numbers = #tpu.dot_dimension_numbers<[1], [1], [0], [0], [0, 0, 1, 0], [], []>} : vector<8x8xbf16>, vector<8x8xbf16>, vector<8x8xf32> -> vector<8x8xf32>
    %cst_17 = arith.constant 0.353553385 : f32
    %51 = vector.broadcast %cst_17 : f32 to vector<8x8xf32>
    %52 = arith.mulf %50, %51 : vector<8x8xf32>
    %53 = arith.addf %52, %21 : vector<8x8xf32>
    %cst_18 = arith.constant dense<0xFF800000> : vector<8xf32>
    %54 = vector.multi_reduction <maximumf>, %53, %cst_18 [1] : vector<8x8xf32> to vector<8xf32>
    %55 = vector.shape_cast %54 : vector<8xf32> to vector<8x1xf32>
    %56 = vector.broadcast %55 : vector<8x1xf32> to vector<8x8xf32>
    %57 = arith.subf %53, %56 : vector<8x8xf32>
    %58 = math.exp %57 : vector<8x8xf32>
    %cst_19 = arith.constant dense<0.000000e+00> : vector<8xf32>
    %59 = vector.multi_reduction <add>, %58, %cst_19 [1] : vector<8x8xf32> to vector<8xf32>
    %60 = vector.shape_cast %59 : vector<8xf32> to vector<8x1xf32>
    %61 = tpu.reciprocal %60 {approx = true} : vector<8x1xf32> -> vector<8x1xf32>
    %62 = vector.broadcast %61 : vector<8x1xf32> to vector<8x8xf32>
    %63 = arith.mulf %58, %62 : vector<8x8xf32>
    %64 = arith.truncf %63 : vector<8x8xf32> to vector<8x8xbf16>
    %cst_20 = arith.constant dense<0.000000e+00> : vector<8x8xf32>
    %65 = tpu.matmul %64, %49, %cst_20 {dimension_numbers = #tpu.dot_dimension_numbers<[1], [0], [0], [1], [0, 0, 1, 1], [], []>} : vector<8x8xbf16>, vector<8x8xbf16>, vector<8x8xf32> -> vector<8x8xf32>
    %66 = vector.extract_strided_slice %9 {offsets = [0, 16], sizes = [8, 8], strides = [1, 1]} : vector<8x32xf32> to vector<8x8xf32>
    %67 = arith.truncf %66 : vector<8x8xf32> to vector<8x8xbf16>
    %68 = vector.extract_strided_slice %10 {offsets = [0, 16], sizes = [8, 8], strides = [1, 1]} : vector<8x32xf32> to vector<8x8xf32>
    %69 = arith.truncf %68 : vector<8x8xf32> to vector<8x8xbf16>
    %70 = vector.extract_strided_slice %11 {offsets = [0, 16], sizes = [8, 8], strides = [1, 1]} : vector<8x32xf32> to vector<8x8xf32>
    %71 = arith.truncf %70 : vector<8x8xf32> to vector<8x8xbf16>
    %cst_21 = arith.constant dense<0.000000e+00> : vector<8x8xf32>
    %72 = tpu.matmul %67, %69, %cst_21 {dimension_numbers = #tpu.dot_dimension_numbers<[1], [1], [0], [0], [0, 0, 1, 0], [], []>} : vector<8x8xbf16>, vector<8x8xbf16>, vector<8x8xf32> -> vector<8x8xf32>
    %cst_22 = arith.constant 0.353553385 : f32
    %73 = vector.broadcast %cst_22 : f32 to vector<8x8xf32>
    %74 = arith.mulf %72, %73 : vector<8x8xf32>
    %75 = arith.addf %74, %21 : vector<8x8xf32>
    %cst_23 = arith.constant dense<0xFF800000> : vector<8xf32>
    %76 = vector.multi_reduction <maximumf>, %75, %cst_23 [1] : vector<8x8xf32> to vector<8xf32>
    %77 = vector.shape_cast %76 : vector<8xf32> to vector<8x1xf32>
    %78 = vector.broadcast %77 : vector<8x1xf32> to vector<8x8xf32>
    %79 = arith.subf %75, %78 : vector<8x8xf32>
    %80 = math.exp %79 : vector<8x8xf32>
    %cst_24 = arith.constant dense<0.000000e+00> : vector<8xf32>
    %81 = vector.multi_reduction <add>, %80, %cst_24 [1] : vector<8x8xf32> to vector<8xf32>
    %82 = vector.shape_cast %81 : vector<8xf32> to vector<8x1xf32>
    %83 = tpu.reciprocal %82 {approx = true} : vector<8x1xf32> -> vector<8x1xf32>
    %84 = vector.broadcast %83 : vector<8x1xf32> to vector<8x8xf32>
    %85 = arith.mulf %80, %84 : vector<8x8xf32>
    %86 = arith.truncf %85 : vector<8x8xf32> to vector<8x8xbf16>
    %cst_25 = arith.constant dense<0.000000e+00> : vector<8x8xf32>
    %87 = tpu.matmul %86, %71, %cst_25 {dimension_numbers = #tpu.dot_dimension_numbers<[1], [0], [0], [1], [0, 0, 1, 1], [], []>} : vector<8x8xbf16>, vector<8x8xbf16>, vector<8x8xf32> -> vector<8x8xf32>
    %88 = vector.extract_strided_slice %9 {offsets = [0, 24], sizes = [8, 8], strides = [1, 1]} : vector<8x32xf32> to vector<8x8xf32>
    %89 = arith.truncf %88 : vector<8x8xf32> to vector<8x8xbf16>
    %90 = vector.extract_strided_slice %10 {offsets = [0, 24], sizes = [8, 8], strides = [1, 1]} : vector<8x32xf32> to vector<8x8xf32>
    %91 = arith.truncf %90 : vector<8x8xf32> to vector<8x8xbf16>
    %92 = vector.extract_strided_slice %11 {offsets = [0, 24], sizes = [8, 8], strides = [1, 1]} : vector<8x32xf32> to vector<8x8xf32>
    %93 = arith.truncf %92 : vector<8x8xf32> to vector<8x8xbf16>
    %cst_26 = arith.constant dense<0.000000e+00> : vector<8x8xf32>
    %94 = tpu.matmul %89, %91, %cst_26 {dimension_numbers = #tpu.dot_dimension_numbers<[1], [1], [0], [0], [0, 0, 1, 0], [], []>} : vector<8x8xbf16>, vector<8x8xbf16>, vector<8x8xf32> -> vector<8x8xf32>
    %cst_27 = arith.constant 0.353553385 : f32
    %95 = vector.broadcast %cst_27 : f32 to vector<8x8xf32>
    %96 = arith.mulf %94, %95 : vector<8x8xf32>
    %97 = arith.addf %96, %21 : vector<8x8xf32>
    %cst_28 = arith.constant dense<0xFF800000> : vector<8xf32>
    %98 = vector.multi_reduction <maximumf>, %97, %cst_28 [1] : vector<8x8xf32> to vector<8xf32>
    %99 = vector.shape_cast %98 : vector<8xf32> to vector<8x1xf32>
    %100 = vector.broadcast %99 : vector<8x1xf32> to vector<8x8xf32>
    %101 = arith.subf %97, %100 : vector<8x8xf32>
    %102 = math.exp %101 : vector<8x8xf32>
    %cst_29 = arith.constant dense<0.000000e+00> : vector<8xf32>
    %103 = vector.multi_reduction <add>, %102, %cst_29 [1] : vector<8x8xf32> to vector<8xf32>
    %104 = vector.shape_cast %103 : vector<8xf32> to vector<8x1xf32>
    %105 = tpu.reciprocal %104 {approx = true} : vector<8x1xf32> -> vector<8x1xf32>
    %106 = vector.broadcast %105 : vector<8x1xf32> to vector<8x8xf32>
    %107 = arith.mulf %102, %106 : vector<8x8xf32>
    %108 = arith.truncf %107 : vector<8x8xf32> to vector<8x8xbf16>
    %cst_30 = arith.constant dense<0.000000e+00> : vector<8x8xf32>
    %109 = tpu.matmul %108, %93, %cst_30 {dimension_numbers = #tpu.dot_dimension_numbers<[1], [0], [0], [1], [0, 0, 1, 1], [], []>} : vector<8x8xbf16>, vector<8x8xbf16>, vector<8x8xf32> -> vector<8x8xf32>
    %110 = tpu.concatenate %43, %65, %87, %109 in 1 : vector<8x8xf32>, vector<8x8xf32>, vector<8x8xf32>, vector<8x8xf32> -> vector<8x32xf32>
    %111 = arith.truncf %110 : vector<8x32xf32> to vector<8x32xbf16>
    %c0_31 = arith.constant 0 : index
    %c0_32 = arith.constant 0 : index
    %112 = vector.load %arg5[%c0_31, %c0_32] : memref<32x32xf32, #tpu.memory_space<vmem>>, vector<32x32xf32>
    %113 = arith.truncf %112 : vector<32x32xf32> to vector<32x32xbf16>
    %cst_33 = arith.constant dense<0.000000e+00> : vector<8x32xf32>
    %114 = tpu.matmul %111, %113, %cst_33 {dimension_numbers = #tpu.dot_dimension_numbers<[1], [0], [0], [1], [0, 0, 1, 1], [], []>} : vector<8x32xbf16>, vector<32x32xbf16>, vector<8x32xf32> -> vector<8x32xf32>
    %c0_34 = arith.constant 0 : index
    %c0_35 = arith.constant 0 : index
    %115 = vector.load %arg6[%c0_34, %c0_35] : memref<1x32xf32, #tpu.memory_space<vmem>>, vector<1x32xf32>
    %116 = vector.broadcast %115 : vector<1x32xf32> to vector<8x32xf32>
    %117 = arith.addf %114, %116 : vector<8x32xf32>
    %118 = arith.addf %1, %117 : vector<8x32xf32>
    %c0_36 = arith.constant 0 : index
    %c0_37 = arith.constant 0 : index
    %119 = vector.load %arg8[%c0_36, %c0_37] : memref<1x32xf32, #tpu.memory_space<vmem>>, vector<1x32xf32>
    %c0_38 = arith.constant 0 : index
    %c0_39 = arith.constant 0 : index
    %120 = vector.load %arg9[%c0_38, %c0_39] : memref<1x32xf32, #tpu.memory_space<vmem>>, vector<1x32xf32>
    %cst_40 = arith.constant dense<0.000000e+00> : vector<8xf32>
    %121 = vector.multi_reduction <add>, %118, %cst_40 [1] : vector<8x32xf32> to vector<8xf32>
    %122 = vector.shape_cast %121 : vector<8xf32> to vector<8x1xf32>
    %cst_41 = arith.constant 3.200000e+01 : f32
    %123 = vector.broadcast %cst_41 : f32 to vector<8x1xf32>
    %124 = arith.divf %122, %123 : vector<8x1xf32>
    %125 = vector.broadcast %124 : vector<8x1xf32> to vector<8x32xf32>
    %126 = arith.subf %118, %125 : vector<8x32xf32>
    %127 = arith.mulf %126, %126 : vector<8x32xf32>
    %cst_42 = arith.constant dense<0.000000e+00> : vector<8xf32>
    %128 = vector.multi_reduction <add>, %127, %cst_42 [1] : vector<8x32xf32> to vector<8xf32>
    %129 = vector.shape_cast %128 : vector<8xf32> to vector<8x1xf32>
    %cst_43 = arith.constant 3.200000e+01 : f32
    %130 = vector.broadcast %cst_43 : f32 to vector<8x1xf32>
    %131 = arith.divf %129, %130 : vector<8x1xf32>
    %132 = vector.broadcast %124 : vector<8x1xf32> to vector<8x32xf32>
    %133 = arith.subf %118, %132 : vector<8x32xf32>
    %cst_44 = arith.constant 9.99999974E-6 : f32
    %134 = vector.broadcast %cst_44 : f32 to vector<8x1xf32>
    %135 = arith.addf %131, %134 : vector<8x1xf32>
    %136 = math.rsqrt %135 : vector<8x1xf32>
    %137 = vector.broadcast %136 : vector<8x1xf32> to vector<8x32xf32>
    %138 = arith.mulf %133, %137 : vector<8x32xf32>
    %139 = vector.broadcast %119 : vector<1x32xf32> to vector<8x32xf32>
    %140 = arith.mulf %138, %139 : vector<8x32xf32>
    %141 = vector.broadcast %120 : vector<1x32xf32> to vector<8x32xf32>
    %142 = arith.addf %140, %141 : vector<8x32xf32>
    %c0_45 = arith.constant 0 : index
    %c0_46 = arith.constant 0 : index
    %c0_47 = arith.constant 0 : index
    %143 = vector.load %arg10[%c0_45, %c0_46, %c0_47] : memref<1x8x32xf32, #tpu.memory_space<vmem>>, vector<1x8x32xf32>
    %144 = vector.shape_cast %143 : vector<1x8x32xf32> to vector<8x32xf32>
    %145 = vector.shape_cast %142 : vector<8x32xf32> to vector<1x8x32xf32>
    tpu.vector_store %arg10[%c0_45, %c0_46, %c0_47], %145 {strides = array<i32>} : memref<1x8x32xf32, #tpu.memory_space<vmem>>, vector<1x8x32xf32>,
    return
  }
  func.func @transform_0(%arg0: i32) -> (i32, i32, i32) {
    %c0_i32 = arith.constant 0 : i32
    %c0_i32_0 = arith.constant 0 : i32
    %c0_i32_1 = arith.constant 0 : i32
    return %arg0, %c0_i32, %c0_i32_0 : i32, i32, i32
  }
  func.func @transform_1(%arg0: i32) -> (i32, i32, i32) {
    %c0_i32 = arith.constant 0 : i32
    %c0_i32_0 = arith.constant 0 : i32
    %c0_i32_1 = arith.constant 0 : i32
    return %arg0, %c0_i32, %c0_i32_0 : i32, i32, i32
  }
  func.func @transform_2(%arg0: i32) -> (i32, i32) {
    %c0_i32 = arith.constant 0 : i32
    %c0_i32_0 = arith.constant 0 : i32
    %c0_i32_1 = arith.constant 0 : i32
    return %c0_i32, %c0_i32_0 : i32, i32
  }
  func.func @transform_3(%arg0: i32) -> (i32, i32) {
    %c0_i32 = arith.constant 0 : i32
    %c0_i32_0 = arith.constant 0 : i32
    %c0_i32_1 = arith.constant 0 : i32
    return %c0_i32, %c0_i32_0 : i32, i32
  }
  func.func @transform_4(%arg0: i32) -> (i32, i32) {
    %c0_i32 = arith.constant 0 : i32
    %c0_i32_0 = arith.constant 0 : i32
    %c0_i32_1 = arith.constant 0 : i32
    return %c0_i32, %c0_i32_0 : i32, i32
  }
  func.func @transform_5(%arg0: i32) -> (i32, i32) {
    %c0_i32 = arith.constant 0 : i32
    %c0_i32_0 = arith.constant 0 : i32
    %c0_i32_1 = arith.constant 0 : i32
    return %c0_i32, %c0_i32_0 : i32, i32
  }
  func.func @transform_6(%arg0: i32) -> (i32, i32, i32) {
    %c0_i32 = arith.constant 0 : i32
    %c0_i32_0 = arith.constant 0 : i32
    %c0_i32_1 = arith.constant 0 : i32
    return %arg0, %c0_i32, %c0_i32_0 : i32, i32, i32
  }
  func.func @transform_7(%arg0: i32) -> (i32, i32) {
    %c0_i32 = arith.constant 0 : i32
    %c0_i32_0 = arith.constant 0 : i32
    %c0_i32_1 = arith.constant 0 : i32
    return %c0_i32, %c0_i32_0 : i32, i32
  }
  func.func @transform_8(%arg0: i32) -> (i32, i32) {
    %c0_i32 = arith.constant 0 : i32
    %c0_i32_0 = arith.constant 0 : i32
    %c0_i32_1 = arith.constant 0 : i32
    return %c0_i32, %c0_i32_0 : i32, i32
  }
  func.func @transform_9(%arg0: i32) -> (i32, i32, i32) {
    %c0_i32 = arith.constant 0 : i32
    %c0_i32_0 = arith.constant 0 : i32
    %c0_i32_1 = arith.constant 0 : i32
    return %arg0, %c0_i32, %c0_i32_0 : i32, i32, i32
  }
}

module attributes {stable_mosaic.version = 11 : i64} {
  func.func @_linear_kernel(%arg0: i32, %arg1: memref<16x32xf32, #tpu.memory_space<vmem>>, %arg2: memref<32x8xf32, #tpu.memory_space<vmem>>, %arg3: memref<1x8xf32, #tpu.memory_space<vmem>>, %arg4: memref<16x8xf32, #tpu.memory_space<vmem>>) attributes {dimension_semantics = [#tpu.dimension_semantics<parallel>], iteration_bounds = array<i64: 1>, scalar_prefetch = 0 : i64, scratch_operands = 0 : i64, tpu.core_type = #tpu.core_type<tc>, window_params = [{transform_indices = @transform_0, window_bounds = array<i64: 16, 32>}, {pipeline_mode = #tpu.pipeline_mode<synchronous>, transform_indices = @transform_1, window_bounds = array<i64: 32, 8>}, {pipeline_mode = #tpu.pipeline_mode<synchronous>, transform_indices = @transform_2, window_bounds = array<i64: 1, 8>}, {transform_indices = @transform_3, window_bounds = array<i64: 16, 8>}]} {
    %c0 = arith.constant 0 : index
    %c0_0 = arith.constant 0 : index
    %0 = vector.load %arg1[%c0, %c0_0] : memref<16x32xf32, #tpu.memory_space<vmem>>, vector<16x32xf32>
    %1 = arith.truncf %0 : vector<16x32xf32> to vector<16x32xbf16>
    %c0_1 = arith.constant 0 : index
    %c0_2 = arith.constant 0 : index
    %2 = vector.load %arg2[%c0_1, %c0_2] : memref<32x8xf32, #tpu.memory_space<vmem>>, vector<32x8xf32>
    %3 = arith.truncf %2 : vector<32x8xf32> to vector<32x8xbf16>
    %cst = arith.constant dense<0.000000e+00> : vector<16x8xf32>
    %4 = tpu.matmul %1, %3, %cst {dimension_numbers = #tpu.dot_dimension_numbers<[1], [0], [0], [1], [0, 0, 1, 1], [], []>} : vector<16x32xbf16>, vector<32x8xbf16>, vector<16x8xf32> -> vector<16x8xf32>
    %c0_3 = arith.constant 0 : index
    %c0_4 = arith.constant 0 : index
    %5 = vector.load %arg3[%c0_3, %c0_4] : memref<1x8xf32, #tpu.memory_space<vmem>>, vector<1x8xf32>
    %6 = vector.broadcast %5 : vector<1x8xf32> to vector<16x8xf32>
    %7 = arith.addf %4, %6 : vector<16x8xf32>
    %c0_5 = arith.constant 0 : index
    %c0_6 = arith.constant 0 : index
    %8 = vector.load %arg4[%c0_5, %c0_6] : memref<16x8xf32, #tpu.memory_space<vmem>>, vector<16x8xf32>
    tpu.vector_store %arg4[%c0_5, %c0_6], %7 {strides = array<i32>} : memref<16x8xf32, #tpu.memory_space<vmem>>, vector<16x8xf32>,
    return
  }
  func.func @transform_0(%arg0: i32) -> (i32, i32) {
    %c0_i32 = arith.constant 0 : i32
    %c0_i32_0 = arith.constant 0 : i32
    return %arg0, %c0_i32 : i32, i32
  }
  func.func @transform_1(%arg0: i32) -> (i32, i32) {
    %c0_i32 = arith.constant 0 : i32
    %c0_i32_0 = arith.constant 0 : i32
    %c0_i32_1 = arith.constant 0 : i32
    return %c0_i32, %c0_i32_0 : i32, i32
  }
  func.func @transform_2(%arg0: i32) -> (i32, i32) {
    %c0_i32 = arith.constant 0 : i32
    %c0_i32_0 = arith.constant 0 : i32
    %c0_i32_1 = arith.constant 0 : i32
    return %c0_i32, %c0_i32_0 : i32, i32
  }
  func.func @transform_3(%arg0: i32) -> (i32, i32) {
    %c0_i32 = arith.constant 0 : i32
    %c0_i32_0 = arith.constant 0 : i32
    return %arg0, %c0_i32 : i32, i32
  }
}

module attributes {stable_mosaic.version = 11 : i64} {
  func.func @_linear_kernel(%arg0: i32, %arg1: memref<16x32xf32, #tpu.memory_space<vmem>>, %arg2: memref<32x21xf32, #tpu.memory_space<vmem>>, %arg3: memref<1x21xf32, #tpu.memory_space<vmem>>, %arg4: memref<16x21xf32, #tpu.memory_space<vmem>>) attributes {dimension_semantics = [#tpu.dimension_semantics<parallel>], iteration_bounds = array<i64: 1>, scalar_prefetch = 0 : i64, scratch_operands = 0 : i64, tpu.core_type = #tpu.core_type<tc>, window_params = [{transform_indices = @transform_0, window_bounds = array<i64: 16, 32>}, {pipeline_mode = #tpu.pipeline_mode<synchronous>, transform_indices = @transform_1, window_bounds = array<i64: 32, 21>}, {pipeline_mode = #tpu.pipeline_mode<synchronous>, transform_indices = @transform_2, window_bounds = array<i64: 1, 21>}, {transform_indices = @transform_3, window_bounds = array<i64: 16, 21>}]} {
    %c0 = arith.constant 0 : index
    %c0_0 = arith.constant 0 : index
    %0 = vector.load %arg1[%c0, %c0_0] : memref<16x32xf32, #tpu.memory_space<vmem>>, vector<16x32xf32>
    %1 = arith.truncf %0 : vector<16x32xf32> to vector<16x32xbf16>
    %c0_1 = arith.constant 0 : index
    %c0_2 = arith.constant 0 : index
    %2 = vector.load %arg2[%c0_1, %c0_2] : memref<32x21xf32, #tpu.memory_space<vmem>>, vector<32x21xf32>
    %3 = arith.truncf %2 : vector<32x21xf32> to vector<32x21xbf16>
    %cst = arith.constant dense<0.000000e+00> : vector<16x21xf32>
    %4 = tpu.matmul %1, %3, %cst {dimension_numbers = #tpu.dot_dimension_numbers<[1], [0], [0], [1], [0, 0, 1, 1], [], []>} : vector<16x32xbf16>, vector<32x21xbf16>, vector<16x21xf32> -> vector<16x21xf32>
    %c0_3 = arith.constant 0 : index
    %c0_4 = arith.constant 0 : index
    %5 = vector.load %arg3[%c0_3, %c0_4] : memref<1x21xf32, #tpu.memory_space<vmem>>, vector<1x21xf32>
    %6 = vector.broadcast %5 : vector<1x21xf32> to vector<16x21xf32>
    %7 = arith.addf %4, %6 : vector<16x21xf32>
    %c0_5 = arith.constant 0 : index
    %c0_6 = arith.constant 0 : index
    %8 = vector.load %arg4[%c0_5, %c0_6] : memref<16x21xf32, #tpu.memory_space<vmem>>, vector<16x21xf32>
    tpu.vector_store %arg4[%c0_5, %c0_6], %7 {strides = array<i32>} : memref<16x21xf32, #tpu.memory_space<vmem>>, vector<16x21xf32>,
    return
  }
  func.func @transform_0(%arg0: i32) -> (i32, i32) {
    %c0_i32 = arith.constant 0 : i32
    %c0_i32_0 = arith.constant 0 : i32
    return %arg0, %c0_i32 : i32, i32
  }
  func.func @transform_1(%arg0: i32) -> (i32, i32) {
    %c0_i32 = arith.constant 0 : i32
    %c0_i32_0 = arith.constant 0 : i32
    %c0_i32_1 = arith.constant 0 : i32
    return %c0_i32, %c0_i32_0 : i32, i32
  }
  func.func @transform_2(%arg0: i32) -> (i32, i32) {
    %c0_i32 = arith.constant 0 : i32
    %c0_i32_0 = arith.constant 0 : i32
    %c0_i32_1 = arith.constant 0 : i32
    return %c0_i32, %c0_i32_0 : i32, i32
  }
  func.func @transform_3(%arg0: i32) -> (i32, i32) {
    %c0_i32 = arith.constant 0 : i32
    %c0_i32_0 = arith.constant 0 : i32
    return %arg0, %c0_i32 : i32, i32
  }
}

module attributes {stable_mosaic.version = 11 : i64} {
  func.func @_linear_kernel(%arg0: i32, %arg1: memref<16x32xf32, #tpu.memory_space<vmem>>, %arg2: memref<32x12xf32, #tpu.memory_space<vmem>>, %arg3: memref<1x12xf32, #tpu.memory_space<vmem>>, %arg4: memref<16x12xf32, #tpu.memory_space<vmem>>) attributes {dimension_semantics = [#tpu.dimension_semantics<parallel>], iteration_bounds = array<i64: 1>, scalar_prefetch = 0 : i64, scratch_operands = 0 : i64, tpu.core_type = #tpu.core_type<tc>, window_params = [{transform_indices = @transform_0, window_bounds = array<i64: 16, 32>}, {pipeline_mode = #tpu.pipeline_mode<synchronous>, transform_indices = @transform_1, window_bounds = array<i64: 32, 12>}, {pipeline_mode = #tpu.pipeline_mode<synchronous>, transform_indices = @transform_2, window_bounds = array<i64: 1, 12>}, {transform_indices = @transform_3, window_bounds = array<i64: 16, 12>}]} {
    %c0 = arith.constant 0 : index
    %c0_0 = arith.constant 0 : index
    %0 = vector.load %arg1[%c0, %c0_0] : memref<16x32xf32, #tpu.memory_space<vmem>>, vector<16x32xf32>
    %1 = arith.truncf %0 : vector<16x32xf32> to vector<16x32xbf16>
    %c0_1 = arith.constant 0 : index
    %c0_2 = arith.constant 0 : index
    %2 = vector.load %arg2[%c0_1, %c0_2] : memref<32x12xf32, #tpu.memory_space<vmem>>, vector<32x12xf32>
    %3 = arith.truncf %2 : vector<32x12xf32> to vector<32x12xbf16>
    %cst = arith.constant dense<0.000000e+00> : vector<16x12xf32>
    %4 = tpu.matmul %1, %3, %cst {dimension_numbers = #tpu.dot_dimension_numbers<[1], [0], [0], [1], [0, 0, 1, 1], [], []>} : vector<16x32xbf16>, vector<32x12xbf16>, vector<16x12xf32> -> vector<16x12xf32>
    %c0_3 = arith.constant 0 : index
    %c0_4 = arith.constant 0 : index
    %5 = vector.load %arg3[%c0_3, %c0_4] : memref<1x12xf32, #tpu.memory_space<vmem>>, vector<1x12xf32>
    %6 = vector.broadcast %5 : vector<1x12xf32> to vector<16x12xf32>
    %7 = arith.addf %4, %6 : vector<16x12xf32>
    %c0_5 = arith.constant 0 : index
    %c0_6 = arith.constant 0 : index
    %8 = vector.load %arg4[%c0_5, %c0_6] : memref<16x12xf32, #tpu.memory_space<vmem>>, vector<16x12xf32>
    tpu.vector_store %arg4[%c0_5, %c0_6], %7 {strides = array<i32>} : memref<16x12xf32, #tpu.memory_space<vmem>>, vector<16x12xf32>,
    return
  }
  func.func @transform_0(%arg0: i32) -> (i32, i32) {
    %c0_i32 = arith.constant 0 : i32
    %c0_i32_0 = arith.constant 0 : i32
    return %arg0, %c0_i32 : i32, i32
  }
  func.func @transform_1(%arg0: i32) -> (i32, i32) {
    %c0_i32 = arith.constant 0 : i32
    %c0_i32_0 = arith.constant 0 : i32
    %c0_i32_1 = arith.constant 0 : i32
    return %c0_i32, %c0_i32_0 : i32, i32
  }
  func.func @transform_2(%arg0: i32) -> (i32, i32) {
    %c0_i32 = arith.constant 0 : i32
    %c0_i32_0 = arith.constant 0 : i32
    %c0_i32_1 = arith.constant 0 : i32
    return %c0_i32, %c0_i32_0 : i32, i32
  }
  func.func @transform_3(%arg0: i32) -> (i32, i32) {
    %c0_i32 = arith.constant 0 : i32
    %c0_i32_0 = arith.constant 0 : i32
    return %arg0, %c0_i32 : i32, i32
  }
}

</mosaic_0001>

<llo_original>
// kernel: forward.56
$region0: #{forward.56}
  #allocation0 [shape = 'u32[]', space=smem, size = 0x4, offset = 0x4, fixed_abs, tag = 'smem constant byte address 0x4 - core index']
  #allocation1 [shape = 'u32[144,128]{1,0:T(1,128)}', space=vmem, size = 0x12000, scoped, tag = 'internal scratch']
  %s0 = inlined_call_operand.vmem [shape: f32[2,8,32], index: 0, kind: input, shape index: {}]
  %s1 = inlined_call_operand.vmem [shape: f32[32,64], index: 1, kind: input, shape index: {}]
  %s2 = inlined_call_operand.vmem [shape: f32[1,64], index: 2, kind: input, shape index: {}]
  %s3 = inlined_call_operand.vmem [shape: f32[64,32], index: 3, kind: input, shape index: {}]
  %s4 = inlined_call_operand.vmem [shape: f32[1,32], index: 4, kind: input, shape index: {}]
  %s5 = inlined_call_operand.vmem [shape: f32[1,32], index: 5, kind: input, shape index: {}]
  %s6 = inlined_call_operand.vmem [shape: f32[1,32], index: 6, kind: input, shape index: {}]
  %s7 = inlined_call_operand.vmem [shape: f32[2,8,32], index: 7, kind: output, shape index: {}]
  %s8 = sld [smem:[#allocation0]]
  $region61: #{forward.56} parent=0
    _
  %s10 = ssub.s32 1, %s8
  %s11 = scalar_select 0, %s10, %s8
  loop: start=0, step=1, limit=4
  $region2: #{forward.56} parent=0 // loop_pre_header
    _
  $region3: #{forward.56} parent=0 // loop_header
    %s13 = sphi 0, %s17
    %p14 = scmp.ge.s32.totalorder %s13, 4
    %s23 = sphi 0, %s25
    %s26 = sphi 0, %s23
    %s27 = sphi 0, %s26
    %s43 = sphi 0, %s27
    %s47 = sphi 0, %s47
    %s49 = sphi 0, %s47
    %s50 = sphi 0, %s49
    %s64 = sphi 0, %s50
    %s68 = sphi 0, %s68
    %s70 = sphi 0, %s68
    %s71 = sphi 0, %s70
    %s85 = sphi 0, %s71
    %s89 = sphi 0, %s89
    %s91 = sphi 0, %s89
    %s92 = sphi 0, %s91
    %s106 = sphi 0, %s92
    %s110 = sphi 0, %s110
    %s112 = sphi 0, %s110
    %s113 = sphi 0, %s112
    %s127 = sphi 0, %s113
    %s131 = sphi 0, %s131
    %s133 = sphi 0, %s131
    %s134 = sphi 0, %s133
    %s148 = sphi 0, %s134
    %s152 = sphi 0, %s152
    %s154 = sphi 0, %s152
    %s155 = sphi 0, %s154
    %s169 = sphi 0, %s155
    %s175 = sphi 0, %s177
    %s178 = sphi 0, %s175
    %s179 = sphi 0, %s178
    %s195 = sphi 0, %s179
  $region4: #{forward.56} parent=0 // loop_header_branch
    %16 = sbr.rel (%p14) target = $region8
  $region5: #{forward.56} parent=0 // loop_body
    %s18 = ssub.s32 %s13, 1
    %s19 = ssub.s32 %s13, 2
    %s20 = sadd.s32 %s13, 1
    %s21 = ssub.s32 %s13, %s20
    %p22 = scmp.eq.s32.totalorder %s21, 0
    %s24 = sadd.s32 %s23, 1
    %s25 = scalar_select %p22, %s23, %s24
    %p28 = pneg %p22
    %p29 = scmp.eq.s32.totalorder %s13, 1
    %p30 = por %p28, %p29
    %p31 = scmp.ne.s32.totalorder %s23, %s26
    %p32 = scmp.eq.s32.totalorder %s13, 0
    %p33 = por %p31, %p32
    %p34 = scmp.ne.s32.totalorder %s23, %s26
    %p35 = scmp.eq.s32.totalorder %s18, 1
    %p36 = por %p34, %p35
    %p37 = scmp.ne.s32.totalorder %s26, %s27
    %p38 = scmp.eq.s32.totalorder %s18, 0
    %p39 = por %p37, %p38
    %p40 = scmp.ne.s32.totalorder %s26, %s27
    %p41 = scmp.eq.s32.totalorder %s19, 1
    %p42 = por %p40, %p41
    %p44 = scmp.ne.s32.totalorder %s27, %s43
    %p45 = scmp.eq.s32.totalorder %s19, 0
    %p46 = por %p44, %p45
    %s48 = sadd.s32 %s47, 1
    %p51 = scmp.eq.s32.totalorder %s13, 1
    %p52 = scmp.ne.s32.totalorder %s47, %s49
    %p53 = scmp.eq.s32.totalorder %s13, 0
    %p54 = por %p52, %p53
    %p55 = scmp.ne.s32.totalorder %s47, %s49
    %p56 = scmp.eq.s32.totalorder %s18, 1
    %p57 = por %p55, %p56
    %p58 = scmp.ne.s32.totalorder %s49, %s50
    %p59 = scmp.eq.s32.totalorder %s18, 0
    %p60 = por %p58, %p59
    %p61 = scmp.ne.s32.totalorder %s49, %s50
    %p62 = scmp.eq.s32.totalorder %s19, 1
    %p63 = por %p61, %p62
    %p65 = scmp.ne.s32.totalorder %s50, %s64
    %p66 = scmp.eq.s32.totalorder %s19, 0
    %p67 = por %p65, %p66
    %s69 = sadd.s32 %s68, 1
    %p72 = scmp.eq.s32.totalorder %s13, 1
    %p73 = scmp.ne.s32.totalorder %s68, %s70
    %p74 = scmp.eq.s32.totalorder %s13, 0
    %p75 = por %p73, %p74
    %p76 = scmp.ne.s32.totalorder %s68, %s70
    %p77 = scmp.eq.s32.totalorder %s18, 1
    %p78 = por %p76, %p77
    %p79 = scmp.ne.s32.totalorder %s70, %s71
    %p80 = scmp.eq.s32.totalorder %s18, 0
    %p81 = por %p79, %p80
    %p82 = scmp.ne.s32.totalorder %s70, %s71
    %p83 = scmp.eq.s32.totalorder %s19, 1
    %p84 = por %p82, %p83
    %p86 = scmp.ne.s32.totalorder %s71, %s85
    %p87 = scmp.eq.s32.totalorder %s19, 0
    %p88 = por %p86, %p87
    %s90 = sadd.s32 %s89, 1
    %p93 = scmp.eq.s32.totalorder %s13, 1
    %p94 = scmp.ne.s32.totalorder %s89, %s91
    %p95 = scmp.eq.s32.totalorder %s13, 0
    %p96 = por %p94, %p95
    %p97 = scmp.ne.s32.totalorder %s89, %s91
    %p98 = scmp.eq.s32.totalorder %s18, 1
    %p99 = por %p97, %p98
    %p100 = scmp.ne.s32.totalorder %s91, %s92
    %p101 = scmp.eq.s32.totalorder %s18, 0
    %p102 = por %p100, %p101
    %p103 = scmp.ne.s32.totalorder %s91, %s92
    %p104 = scmp.eq.s32.totalorder %s19, 1
    %p105 = por %p103, %p104
    %p107 = scmp.ne.s32.totalorder %s92, %s106
    %p108 = scmp.eq.s32.totalorder %s19, 0
    %p109 = por %p107, %p108
    %s111 = sadd.s32 %s110, 1
    %p114 = scmp.eq.s32.totalorder %s13, 1
    %p115 = scmp.ne.s32.totalorder %s110, %s112
    %p116 = scmp.eq.s32.totalorder %s13, 0
    %p117 = por %p115, %p116
    %p118 = scmp.ne.s32.totalorder %s110, %s112
    %p119 = scmp.eq.s32.totalorder %s18, 1
    %p120 = por %p118, %p119
    %p121 = scmp.ne.s32.totalorder %s112, %s113
    %p122 = scmp.eq.s32.totalorder %s18, 0
    %p123 = por %p121, %p122
    %p124 = scmp.ne.s32.totalorder %s112, %s113
    %p125 = scmp.eq.s32.totalorder %s19, 1
    %p126 = por %p124, %p125
    %p128 = scmp.ne.s32.totalorder %s113, %s127
    %p129 = scmp.eq.s32.totalorder %s19, 0
    %p130 = por %p128, %p129
    %s132 = sadd.s32 %s131, 1
    %p135 = scmp.eq.s32.totalorder %s13, 1
    %p136 = scmp.ne.s32.totalorder %s131, %s133
    %p137 = scmp.eq.s32.totalorder %s13, 0
    %p138 = por %p136, %p137
    %p139 = scmp.ne.s32.totalorder %s131, %s133
    %p140 = scmp.eq.s32.totalorder %s18, 1
    %p141 = por %p139, %p140
    %p142 = scmp.ne.s32.totalorder %s133, %s134
    %p143 = scmp.eq.s32.totalorder %s18, 0
    %p144 = por %p142, %p143
    %p145 = scmp.ne.s32.totalorder %s133, %s134
    %p146 = scmp.eq.s32.totalorder %s19, 1
    %p147 = por %p145, %p146
    %p149 = scmp.ne.s32.totalorder %s134, %s148
    %p150 = scmp.eq.s32.totalorder %s19, 0
    %p151 = por %p149, %p150
    %s153 = sadd.s32 %s152, 1
    %p156 = scmp.eq.s32.totalorder %s13, 1
    %p157 = scmp.ne.s32.totalorder %s152, %s154
    %p158 = scmp.eq.s32.totalorder %s13, 0
    %p159 = por %p157, %p158
    %p160 = scmp.ne.s32.totalorder %s152, %s154
    %p161 = scmp.eq.s32.totalorder %s18, 1
    %p162 = por %p160, %p161
    %p163 = scmp.ne.s32.totalorder %s154, %s155
    %p164 = scmp.eq.s32.totalorder %s18, 0
    %p165 = por %p163, %p164
    %p166 = scmp.ne.s32.totalorder %s154, %s155
    %p167 = scmp.eq.s32.totalorder %s19, 1
    %p168 = por %p166, %p167
    %p170 = scmp.ne.s32.totalorder %s155, %s169
    %p171 = scmp.eq.s32.totalorder %s19, 0
    %p172 = por %p170, %p171
    %s173 = ssub.s32 %s13, %s20
    %p174 = scmp.eq.s32.totalorder %s173, 0
    %s176 = sadd.s32 %s175, 1
    %s177 = scalar_select %p174, %s175, %s176
    %p180 = pneg %p174
    %p181 = scmp.eq.s32.totalorder %s13, 1
    %p182 = por %p180, %p181
    %p183 = scmp.ne.s32.totalorder %s175, %s178
    %p184 = scmp.eq.s32.totalorder %s13, 0
    %p185 = por %p183, %p184
    %p186 = scmp.ne.s32.totalorder %s175, %s178
    %p187 = scmp.eq.s32.totalorder %s18, 1
    %p188 = por %p186, %p187
    %p189 = scmp.ne.s32.totalorder %s178, %s179
    %p190 = scmp.eq.s32.totalorder %s18, 0
    %p191 = por %p189, %p190
    %p192 = scmp.ne.s32.totalorder %s178, %s179
    %p193 = scmp.eq.s32.totalorder %s19, 1
    %p194 = por %p192, %p193
    %p196 = scmp.ne.s32.totalorder %s179, %s195
    %p197 = scmp.eq.s32.totalorder %s19, 0
    %p198 = por %p196, %p197
    %p199 = scmp.le.s32.totalorder 1, %s13
    %p200 = scmp.lt.s32.totalorder %s13, 3
    %p201 = pnand %p199, %p200
    %p202 = pneg %p201
    // Predicated region
    $region9: #{forward.56} parent=5 // pred_check
      _
    $region10: #{forward.56} parent=5 // pred_check_branch
      %204 = sbr.rel (%p201) target = $region12
    $region11: #{forward.56} parent=5 // pred_region
      %s205 = ssub.s32 %s13, 1
      // Predicated region
      $region13: #{forward.56} parent=11 // pred_check
        %p206 = pneg %p60
      $region14: #{forward.56} parent=11 // pred_check_branch
        %208 = sbr.rel (%p206) target = $region16
      $region15: #{forward.56} parent=11 // pred_region
        _
      $region16: #{forward.56} parent=11 // pred_fallthru
        _
      // Predicated region
      $region17: #{forward.56} parent=11 // pred_check
        %p209 = pneg %p81
      $region18: #{forward.56} parent=11 // pred_check_branch
        %211 = sbr.rel (%p209) target = $region20
      $region19: #{forward.56} parent=11 // pred_region
        _
      $region20: #{forward.56} parent=11 // pred_fallthru
        _
      // Predicated region
      $region21: #{forward.56} parent=11 // pred_check
        %p212 = pneg %p102
      $region22: #{forward.56} parent=11 // pred_check_branch
        %214 = sbr.rel (%p212) target = $region24
      $region23: #{forward.56} parent=11 // pred_region
        _
      $region24: #{forward.56} parent=11 // pred_fallthru
        _
      // Predicated region
      $region25: #{forward.56} parent=11 // pred_check
        %p215 = pneg %p123
      $region26: #{forward.56} parent=11 // pred_check_branch
        %217 = sbr.rel (%p215) target = $region28
      $region27: #{forward.56} parent=11 // pred_region
        _
      $region28: #{forward.56} parent=11 // pred_fallthru
        _
      // Predicated region
      $region29: #{forward.56} parent=11 // pred_check
        %p218 = pneg %p144
      $region30: #{forward.56} parent=11 // pred_check_branch
        %220 = sbr.rel (%p218) target = $region32
      $region31: #{forward.56} parent=11 // pred_region
        _
      $region32: #{forward.56} parent=11 // pred_fallthru
        _
      // Predicated region
      $region33: #{forward.56} parent=11 // pred_check
        %p221 = pneg %p165
      $region34: #{forward.56} parent=11 // pred_check_branch
        %223 = sbr.rel (%p221) target = $region36
      $region35: #{forward.56} parent=11 // pred_region
        _
      $region36: #{forward.56} parent=11 // pred_fallthru
        _
    $region12: #{forward.56} parent=5 // pred_fallthru
      _
    %p224 = scmp.lt.s32.totalorder %s13, 2
    // Predicated region
    $region37: #{forward.56} parent=5 // pred_check
      %p225 = pneg %p224
    $region38: #{forward.56} parent=5 // pred_check_branch
      %227 = sbr.rel (%p225) target = $region40
    $region39: #{forward.56} parent=5 // pred_region
      // Predicated region
      $region41: #{forward.56} parent=39 // pred_check
        %p228 = pneg %p33
      $region42: #{forward.56} parent=39 // pred_check_branch
        %230 = sbr.rel (%p228) target = $region44
      $region43: #{forward.56} parent=39 // pred_region
        %p231 = scmp.lt.s32.totalorder %s13, 1
        %s232 = scalar_select %p231, %s13, 1
        %s233 = smul.addr %s232, 8
        %s234 = scalar_lea.vmem %s0, %s233
      $region44: #{forward.56} parent=39 // pred_fallthru
        _
    $region40: #{forward.56} parent=5 // pred_fallthru
      _
    %p235 = scmp.le.s32.totalorder 1, %s13
    %p236 = scmp.lt.s32.totalorder %s13, 3
    %p237 = pnand %p235, %p236
    %p238 = pneg %p237
    // Predicated region
    $region45: #{forward.56} parent=5 // pred_check
      _
    $region46: #{forward.56} parent=5 // pred_check_branch
      %240 = sbr.rel (%p237) target = $region48
    $region47: #{forward.56} parent=5 // pred_region
      %s241 = ssub.s32 %s13, 1
      %p242 = scmp.lt.s32.totalorder %s18, 1
      %s243 = scalar_select %p242, %s18, 1
      %s244 = smul.addr %s243, 8
      %s245 = scalar_lea.vmem %s0, %s244
      %p246 = pneg %p39
      %p247 = pneg %p36
      %p248 = pneg %p60
      %p249 = pneg %p57
      %p250 = pneg %p81
      %p251 = pneg %p78
      %p252 = pneg %p102
      %p253 = pneg %p99
      %p254 = pneg %p123
      %p255 = pneg %p120
      %p256 = pneg %p144
      %p257 = pneg %p141
      %p258 = pneg %p165
      %p259 = pneg %p162
      %p260 = pneg %p191
      %p261 = pneg %p188
      %p262 = scmp.lt.s32.totalorder %s18, 1
      %s263 = scalar_select %p262, %s18, 1
      %s264 = smul.addr %s263, 8
      %s265 = scalar_lea.vmem %s7, %s264
      %p266 = scmp.lt.s32.totalorder %s18, 1
      %s267 = scalar_select %p266, %s18, 1
      %s268 = smul.addr %s267, 8
      %s269 = scalar_lea.vmem %s0, %s268
      %p270 = scmp.lt.s32.totalorder %s18, 1
      %s271 = scalar_select %p270, %s18, 1
      %s272 = smul.addr %s271, 8
      %s273 = scalar_lea.vmem %s7, %s272
      %v275 = vld [vmem:[%s269] sm:$0xff]
      %v276 = vpack.c.bf16 %v275, %v275
      %v277 = vld [vmem:[%s1] sm:$0xff]
      %v278 = vld [vmem:[%s1 + $0x8] sm:$0xff]
      %v279 = vld [vmem:[%s1 + $0x10] sm:$0xff]
      %v280 = vld [vmem:[%s1 + $0x18] sm:$0xff]
      %v281 = vpack.c.bf16 %v278, %v277
      %v282 = vpack.c.bf16 %v280, %v279
      %v283 = vld [vmem:[%s2] sm:$0x1]
      %v285 = vlaneseq
      %v286 = vshrl.u32 %v285, 7
      %v287 = vsub.s32 0, %v286
      %v288 = vrot.slane %v283, %v287
      %vm290 = vcmask 261120
      %v292 = vsel %vm290, %v276, 0
      %294 = vmatprep.subr.bf16.mxu0 0
      %295 = vmatpush1.bf16.msra.mxu0 %v281
      %296 = vmatprep.subr.bf16.mxu0 0
      %297 = vmatpush1.bf16.msra.mxu0 %v282
      %298 = vmatprep.subr.bf16.mxu0 0
      %299 = vmatpush1.bf16.msra.mxu0 0
      %300 = vmatprep.subr.bf16.mxu0 0
      %301 = vmatpush1.bf16.msra.mxu0 0
      %302 = vmatprep.subr.bf16.mxu0 0
      %303 = vmatpush1.bf16.msra.mxu0 0
      %304 = vmatprep.subr.bf16.mxu0 0
      %305 = vmatpush1.bf16.msra.mxu0 0
      %306 = vmatprep.subr.bf16.mxu0 0
      %307 = vmatpush1.bf16.msra.mxu0 0
      %308 = vmatprep.subr.bf16.mxu0 0
      %309 = vmatpush1.bf16.msra.mxu0 0
      %310 = vmatprep.subr.bf16.mxu0 0
      %311 = vmatpush1.bf16.msra.mxu0 0
      %312 = vmatprep.subr.bf16.mxu0 0
      %313 = vmatpush1.bf16.msra.mxu0 0
      %314 = vmatprep.subr.bf16.mxu0 0
      %315 = vmatpush1.bf16.msra.mxu0 0
      %316 = vmatprep.subr.bf16.mxu0 0
      %317 = vmatpush1.bf16.msra.mxu0 0
      %318 = vmatprep.subr.bf16.mxu0 0
      %319 = vmatpush1.bf16.msra.mxu0 0
      %320 = vmatprep.subr.bf16.mxu0 0
      %321 = vmatpush1.bf16.msra.mxu0 0
      %322 = vmatprep.subr.bf16.mxu0 0
      %323 = vmatpush1.bf16.msra.mxu0 0
      %324 = vmatprep.subr.bf16.mxu0 0
      %325 = vmatpush1.bf16.msra.mxu0 0
      %326 = vmatprep.mubr.bf16.mxu0 0
      %327 = vmatmul.mubr.bf16.gmra.mrb[0].mxu0 %v292
      %v328 = vpop.f32.mrb[0].mxu0
      %v329 = vadd.f32 %v288, %v328
      %v330 = vpop.f32.mrb[0].mxu0
      %v331 = vpop.f32.mrb[0].mxu0
      %v332 = vpop.f32.mrb[0].mxu0
      %333 = vdwg.mxu0
      %v334 = vmax.f32 %v329, 0.0
      %v335 = vpack.c.bf16 %v334, %v334
      %v336 = vld [vmem:[%s3] sm:$0xff]
      %v337 = vld [vmem:[%s3 + $0x8] sm:$0xff]
      %v338 = vld [vmem:[%s3 + $0x10] sm:$0xff]
      %v339 = vld [vmem:[%s3 + $0x18] sm:$0xff]
      %v340 = vld [vmem:[%s3 + $0x20] sm:$0xff]
      %v341 = vld [vmem:[%s3 + $0x28] sm:$0xff]
      %v342 = vld [vmem:[%s3 + $0x30] sm:$0xff]
      %v343 = vld [vmem:[%s3 + $0x38] sm:$0xff]
      %v344 = vpack.c.bf16 %v337, %v336
      %v345 = vpack.c.bf16 %v339, %v338
      %v346 = vpack.c.bf16 %v341, %v340
      %v347 = vpack.c.bf16 %v343, %v342
      %v348 = vld [vmem:[%s4] sm:$0x1]
      %v350 = vlaneseq
      %v351 = vshrl.u32 %v350, 7
      %v352 = vsub.s32 0, %v351
      %v353 = vrot.slane %v348, %v352
      %vm355 = vcmask 523264
      %v357 = vsel %vm355, %v335, 0
      %359 = vmatprep.subr.bf16.mxu0 0
      %360 = vmatpush1.bf16.msra.mxu0 %v344
      %361 = vmatprep.subr.bf16.mxu0 0
      %362 = vmatpush1.bf16.msra.mxu0 %v345
      %363 = vmatprep.subr.bf16.mxu0 0
      %364 = vmatpush1.bf16.msra.mxu0 %v346
      %365 = vmatprep.subr.bf16.mxu0 0
      %366 = vmatpush1.bf16.msra.mxu0 %v347
      %367 = vmatprep.subr.bf16.mxu0 0
      %368 = vmatpush1.bf16.msra.mxu0 0
      %369 = vmatprep.subr.bf16.mxu0 0
      %370 = vmatpush1.bf16.msra.mxu0 0
      %371 = vmatprep.subr.bf16.mxu0 0
      %372 = vmatpush1.bf16.msra.mxu0 0
      %373 = vmatprep.subr.bf16.mxu0 0
      %374 = vmatpush1.bf16.msra.mxu0 0
      %375 = vmatprep.subr.bf16.mxu0 0
      %376 = vmatpush1.bf16.msra.mxu0 0
      %377 = vmatprep.subr.bf16.mxu0 0
      %378 = vmatpush1.bf16.msra.mxu0 0
      %379 = vmatprep.subr.bf16.mxu0 0
      %380 = vmatpush1.bf16.msra.mxu0 0
      %381 = vmatprep.subr.bf16.mxu0 0
      %382 = vmatpush1.bf16.msra.mxu0 0
      %383 = vmatprep.subr.bf16.mxu0 0
      %384 = vmatpush1.bf16.msra.mxu0 0
      %385 = vmatprep.subr.bf16.mxu0 0
      %386 = vmatpush1.bf16.msra.mxu0 0
      %387 = vmatprep.subr.bf16.mxu0 0
      %388 = vmatpush1.bf16.msra.mxu0 0
      %389 = vmatprep.subr.bf16.mxu0 0
      %390 = vmatpush1.bf16.msra.mxu0 0
      %391 = vmatprep.mubr.bf16.mxu0 0
      %392 = vmatmul.mubr.bf16.gmra.mrb[0].mxu0 %v357
      %v393 = vpop.f32.mrb[0].mxu0
      %v394 = vadd.f32 %v353, %v393
      %v395 = vpop.f32.mrb[0].mxu0
      %v396 = vpop.f32.mrb[0].mxu0
      %v397 = vpop.f32.mrb[0].mxu0
      %398 = vdwg.mxu0
      %v399 = vadd.f32 %v275, %v394
      %v400 = vld [vmem:[%s5] sm:$0x1]
      %v401 = vld [vmem:[%s6] sm:$0x1]
      %v402 = vsel %vm290, %v399, 0.0
      %403 = vadd.xlane.f32.xlu0 %v402
      %v404 = vpop.xlane.xlu0 %403
      %v405 = vrcp.pop 32.0
      %v406 = vmul.f32 %v404, %v405
      %v407 = vsub.f32 %v399, %v406
      %v408 = vmul.f32 %v407, %v407
      %v409 = vsel %vm290, %v408, 0.0
      %410 = vadd.xlane.f32.xlu0 %v409
      %v411 = vpop.xlane.xlu0 %410
      %v412 = vmul.f32 %v411, %v405
      %v413 = vadd.f32 %v412, 1e-05
      %v414 = vrsqrt.pop %v413
      %v415 = vmul.f32 %v407, %v414
      %v417 = vlaneseq
      %v418 = vshrl.u32 %v417, 7
      %v419 = vsub.s32 0, %v418
      %v420 = vrot.slane %v400, %v419
      %v422 = vmul.f32 %v415, %v420
      %v424 = vlaneseq
      %v425 = vshrl.u32 %v424, 7
      %v426 = vsub.s32 0, %v425
      %v427 = vrot.slane %v401, %v426
      %v429 = vadd.f32 %v422, %v427
      %430 = vst.msk [vmem:[%s273] sm:$0xff] %vm290, %v429
      %p431 = scmp.lt.s32.totalorder %s18, 1
      %s432 = scalar_select %p431, %s18, 1
      %s433 = smul.addr %s432, 8
      %s434 = scalar_lea.vmem %s7, %s433
      // Predicated region
      $region49: #{forward.56} parent=47 // pred_check
        %p435 = pneg %p188
      $region50: #{forward.56} parent=47 // pred_check_branch
        %437 = sbr.rel (%p435) target = $region52
      $region51: #{forward.56} parent=47 // pred_region
        _
      $region52: #{forward.56} parent=47 // pred_fallthru
        _
    $region48: #{forward.56} parent=5 // pred_fallthru
      _
    %p438 = scmp.le.s32.totalorder 2, %s13
    // Predicated region
    $region53: #{forward.56} parent=5 // pred_check
      %p439 = pneg %p438
    $region54: #{forward.56} parent=5 // pred_check_branch
      %441 = sbr.rel (%p439) target = $region56
    $region55: #{forward.56} parent=5 // pred_region
      %s442 = ssub.s32 %s13, 2
      // Predicated region
      $region57: #{forward.56} parent=55 // pred_check
        %p443 = pneg %p194
      $region58: #{forward.56} parent=55 // pred_check_branch
        %445 = sbr.rel (%p443) target = $region60
      $region59: #{forward.56} parent=55 // pred_region
        %p446 = scmp.lt.s32.totalorder %s19, 1
        %s447 = scalar_select %p446, %s19, 1
        %s448 = smul.addr %s447, 8
        %s449 = scalar_lea.vmem %s7, %s448
      $region60: #{forward.56} parent=55 // pred_fallthru
        _
    $region56: #{forward.56} parent=5 // pred_fallthru
      _
  $region6: #{forward.56} parent=0 // loop_footer
    %s17 = sadd.s32 1, %s13
  $region7: #{forward.56} parent=0 // loop_footer_branch
    %12 = sbr.rel target = $region3
  $region8: #{forward.56} parent=0 // loop_exit
    _

// kernel: forward.55
$region0: #{forward.55}
  #allocation0 [shape = 'u32[]', space=smem, size = 0x4, offset = 0x4, fixed_abs, tag = 'smem constant byte address 0x4 - core index']
  #allocation1 [shape = 'u32[144,128]{1,0:T(1,128)}', space=vmem, size = 0x12000, scoped, tag = 'internal scratch']
  %s0 = inlined_call_operand.vmem [shape: f32[2,8,32], index: 0, kind: input, shape index: {}, may-alias: {0,1}]
  %s1 = inlined_call_operand.vmem [shape: f32[2,8,32], index: 1, kind: input, shape index: {}, may-alias: {0,1}]
  %s2 = inlined_call_operand.vmem [shape: f32[32,96], index: 2, kind: input, shape index: {}]
  %s3 = inlined_call_operand.vmem [shape: f32[1,96], index: 3, kind: input, shape index: {}]
  %s4 = inlined_call_operand.vmem [shape: f32[32,32], index: 4, kind: input, shape index: {}]
  %s5 = inlined_call_operand.vmem [shape: f32[1,32], index: 5, kind: input, shape index: {}]
  %s6 = inlined_call_operand.vmem [shape: f32[2,1,8], index: 6, kind: input, shape index: {}]
  %s7 = inlined_call_operand.vmem [shape: f32[1,32], index: 7, kind: input, shape index: {}]
  %s8 = inlined_call_operand.vmem [shape: f32[1,32], index: 8, kind: input, shape index: {}]
  %s9 = inlined_call_operand.vmem [shape: f32[2,8,32], index: 9, kind: output, shape index: {}]
  %s10 = sld [smem:[#allocation0]]
  $region69: #{forward.55} parent=0
    _
  %s12 = ssub.s32 1, %s10
  %s13 = scalar_select 0, %s12, %s10
  loop: start=0, step=1, limit=4
  $region2: #{forward.55} parent=0 // loop_pre_header
    _
  $region3: #{forward.55} parent=0 // loop_header
    %s15 = sphi 0, %s19
    %p16 = scmp.ge.s32.totalorder %s15, 4
    %s25 = sphi 0, %s27
    %s28 = sphi 0, %s25
    %s29 = sphi 0, %s28
    %s45 = sphi 0, %s29
    %s51 = sphi 0, %s53
    %s54 = sphi 0, %s51
    %s55 = sphi 0, %s54
    %s71 = sphi 0, %s55
    %s75 = sphi 0, %s75
    %s77 = sphi 0, %s75
    %s78 = sphi 0, %s77
    %s92 = sphi 0, %s78
    %s96 = sphi 0, %s96
    %s98 = sphi 0, %s96
    %s99 = sphi 0, %s98
    %s113 = sphi 0, %s99
    %s117 = sphi 0, %s117
    %s119 = sphi 0, %s117
    %s120 = sphi 0, %s119
    %s134 = sphi 0, %s120
    %s138 = sphi 0, %s138
    %s140 = sphi 0, %s138
    %s141 = sphi 0, %s140
    %s155 = sphi 0, %s141
    %s161 = sphi 0, %s163
    %s164 = sphi 0, %s161
    %s165 = sphi 0, %s164
    %s181 = sphi 0, %s165
    %s185 = sphi 0, %s185
    %s187 = sphi 0, %s185
    %s188 = sphi 0, %s187
    %s202 = sphi 0, %s188
    %s206 = sphi 0, %s206
    %s208 = sphi 0, %s206
    %s209 = sphi 0, %s208
    %s223 = sphi 0, %s209
    %s229 = sphi 0, %s231
    %s232 = sphi 0, %s229
    %s233 = sphi 0, %s232
    %s249 = sphi 0, %s233
  $region4: #{forward.55} parent=0 // loop_header_branch
    %18 = sbr.rel (%p16) target = $region8
  $region5: #{forward.55} parent=0 // loop_body
    %s20 = ssub.s32 %s15, 1
    %s21 = ssub.s32 %s15, 2
    %s22 = sadd.s32 %s15, 1
    %s23 = ssub.s32 %s15, %s22
    %p24 = scmp.eq.s32.totalorder %s23, 0
    %s26 = sadd.s32 %s25, 1
    %s27 = scalar_select %p24, %s25, %s26
    %p30 = pneg %p24
    %p31 = scmp.eq.s32.totalorder %s15, 1
    %p32 = por %p30, %p31
    %p33 = scmp.ne.s32.totalorder %s25, %s28
    %p34 = scmp.eq.s32.totalorder %s15, 0
    %p35 = por %p33, %p34
    %p36 = scmp.ne.s32.totalorder %s25, %s28
    %p37 = scmp.eq.s32.totalorder %s20, 1
    %p38 = por %p36, %p37
    %p39 = scmp.ne.s32.totalorder %s28, %s29
    %p40 = scmp.eq.s32.totalorder %s20, 0
    %p41 = por %p39, %p40
    %p42 = scmp.ne.s32.totalorder %s28, %s29
    %p43 = scmp.eq.s32.totalorder %s21, 1
    %p44 = por %p42, %p43
    %p46 = scmp.ne.s32.totalorder %s29, %s45
    %p47 = scmp.eq.s32.totalorder %s21, 0
    %p48 = por %p46, %p47
    %s49 = ssub.s32 %s15, %s22
    %p50 = scmp.eq.s32.totalorder %s49, 0
    %s52 = sadd.s32 %s51, 1
    %s53 = scalar_select %p50, %s51, %s52
    %p56 = pneg %p50
    %p57 = scmp.eq.s32.totalorder %s15, 1
    %p58 = por %p56, %p57
    %p59 = scmp.ne.s32.totalorder %s51, %s54
    %p60 = scmp.eq.s32.totalorder %s15, 0
    %p61 = por %p59, %p60
    %p62 = scmp.ne.s32.totalorder %s51, %s54
    %p63 = scmp.eq.s32.totalorder %s20, 1
    %p64 = por %p62, %p63
    %p65 = scmp.ne.s32.totalorder %s54, %s55
    %p66 = scmp.eq.s32.totalorder %s20, 0
    %p67 = por %p65, %p66
    %p68 = scmp.ne.s32.totalorder %s54, %s55
    %p69 = scmp.eq.s32.totalorder %s21, 1
    %p70 = por %p68, %p69
    %p72 = scmp.ne.s32.totalorder %s55, %s71
    %p73 = scmp.eq.s32.totalorder %s21, 0
    %p74 = por %p72, %p73
    %s76 = sadd.s32 %s75, 1
    %p79 = scmp.eq.s32.totalorder %s15, 1
    %p80 = scmp.ne.s32.totalorder %s75, %s77
    %p81 = scmp.eq.s32.totalorder %s15, 0
    %p82 = por %p80, %p81
    %p83 = scmp.ne.s32.totalorder %s75, %s77
    %p84 = scmp.eq.s32.totalorder %s20, 1
    %p85 = por %p83, %p84
    %p86 = scmp.ne.s32.totalorder %s77, %s78
    %p87 = scmp.eq.s32.totalorder %s20, 0
    %p88 = por %p86, %p87
    %p89 = scmp.ne.s32.totalorder %s77, %s78
    %p90 = scmp.eq.s32.totalorder %s21, 1
    %p91 = por %p89, %p90
    %p93 = scmp.ne.s32.totalorder %s78, %s92
    %p94 = scmp.eq.s32.totalorder %s21, 0
    %p95 = por %p93, %p94
    %s97 = sadd.s32 %s96, 1
    %p100 = scmp.eq.s32.totalorder %s15, 1
    %p101 = scmp.ne.s32.totalorder %s96, %s98
    %p102 = scmp.eq.s32.totalorder %s15, 0
    %p103 = por %p101, %p102
    %p104 = scmp.ne.s32.totalorder %s96, %s98
    %p105 = scmp.eq.s32.totalorder %s20, 1
    %p106 = por %p104, %p105
    %p107 = scmp.ne.s32.totalorder %s98, %s99
    %p108 = scmp.eq.s32.totalorder %s20, 0
    %p109 = por %p107, %p108
    %p110 = scmp.ne.s32.totalorder %s98, %s99
    %p111 = scmp.eq.s32.totalorder %s21, 1
    %p112 = por %p110, %p111
    %p114 = scmp.ne.s32.totalorder %s99, %s113
    %p115 = scmp.eq.s32.totalorder %s21, 0
    %p116 = por %p114, %p115
    %s118 = sadd.s32 %s117, 1
    %p121 = scmp.eq.s32.totalorder %s15, 1
    %p122 = scmp.ne.s32.totalorder %s117, %s119
    %p123 = scmp.eq.s32.totalorder %s15, 0
    %p124 = por %p122, %p123
    %p125 = scmp.ne.s32.totalorder %s117, %s119
    %p126 = scmp.eq.s32.totalorder %s20, 1
    %p127 = por %p125, %p126
    %p128 = scmp.ne.s32.totalorder %s119, %s120
    %p129 = scmp.eq.s32.totalorder %s20, 0
    %p130 = por %p128, %p129
    %p131 = scmp.ne.s32.totalorder %s119, %s120
    %p132 = scmp.eq.s32.totalorder %s21, 1
    %p133 = por %p131, %p132
    %p135 = scmp.ne.s32.totalorder %s120, %s134
    %p136 = scmp.eq.s32.totalorder %s21, 0
    %p137 = por %p135, %p136
    %s139 = sadd.s32 %s138, 1
    %p142 = scmp.eq.s32.totalorder %s15, 1
    %p143 = scmp.ne.s32.totalorder %s138, %s140
    %p144 = scmp.eq.s32.totalorder %s15, 0
    %p145 = por %p143, %p144
    %p146 = scmp.ne.s32.totalorder %s138, %s140
    %p147 = scmp.eq.s32.totalorder %s20, 1
    %p148 = por %p146, %p147
    %p149 = scmp.ne.s32.totalorder %s140, %s141
    %p150 = scmp.eq.s32.totalorder %s20, 0
    %p151 = por %p149, %p150
    %p152 = scmp.ne.s32.totalorder %s140, %s141
    %p153 = scmp.eq.s32.totalorder %s21, 1
    %p154 = por %p152, %p153
    %p156 = scmp.ne.s32.totalorder %s141, %s155
    %p157 = scmp.eq.s32.totalorder %s21, 0
    %p158 = por %p156, %p157
    %s159 = ssub.s32 %s15, %s22
    %p160 = scmp.eq.s32.totalorder %s159, 0
    %s162 = sadd.s32 %s161, 1
    %s163 = scalar_select %p160, %s161, %s162
    %p166 = pneg %p160
    %p167 = scmp.eq.s32.totalorder %s15, 1
    %p168 = por %p166, %p167
    %p169 = scmp.ne.s32.totalorder %s161, %s164
    %p170 = scmp.eq.s32.totalorder %s15, 0
    %p171 = por %p169, %p170
    %p172 = scmp.ne.s32.totalorder %s161, %s164
    %p173 = scmp.eq.s32.totalorder %s20, 1
    %p174 = por %p172, %p173
    %p175 = scmp.ne.s32.totalorder %s164, %s165
    %p176 = scmp.eq.s32.totalorder %s20, 0
    %p177 = por %p175, %p176
    %p178 = scmp.ne.s32.totalorder %s164, %s165
    %p179 = scmp.eq.s32.totalorder %s21, 1
    %p180 = por %p178, %p179
    %p182 = scmp.ne.s32.totalorder %s165, %s181
    %p183 = scmp.eq.s32.totalorder %s21, 0
    %p184 = por %p182, %p183
    %s186 = sadd.s32 %s185, 1
    %p189 = scmp.eq.s32.totalorder %s15, 1
    %p190 = scmp.ne.s32.totalorder %s185, %s187
    %p191 = scmp.eq.s32.totalorder %s15, 0
    %p192 = por %p190, %p191
    %p193 = scmp.ne.s32.totalorder %s185, %s187
    %p194 = scmp.eq.s32.totalorder %s20, 1
    %p195 = por %p193, %p194
    %p196 = scmp.ne.s32.totalorder %s187, %s188
    %p197 = scmp.eq.s32.totalorder %s20, 0
    %p198 = por %p196, %p197
    %p199 = scmp.ne.s32.totalorder %s187, %s188
    %p200 = scmp.eq.s32.totalorder %s21, 1
    %p201 = por %p199, %p200
    %p203 = scmp.ne.s32.totalorder %s188, %s202
    %p204 = scmp.eq.s32.totalorder %s21, 0
    %p205 = por %p203, %p204
    %s207 = sadd.s32 %s206, 1
    %p210 = scmp.eq.s32.totalorder %s15, 1
    %p211 = scmp.ne.s32.totalorder %s206, %s208
    %p212 = scmp.eq.s32.totalorder %s15, 0
    %p213 = por %p211, %p212
    %p214 = scmp.ne.s32.totalorder %s206, %s208
    %p215 = scmp.eq.s32.totalorder %s20, 1
    %p216 = por %p214, %p215
    %p217 = scmp.ne.s32.totalorder %s208, %s209
    %p218 = scmp.eq.s32.totalorder %s20, 0
    %p219 = por %p217, %p218
    %p220 = scmp.ne.s32.totalorder %s208, %s209
    %p221 = scmp.eq.s32.totalorder %s21, 1
    %p222 = por %p220, %p221
    %p224 = scmp.ne.s32.totalorder %s209, %s223
    %p225 = scmp.eq.s32.totalorder %s21, 0
    %p226 = por %p224, %p225
    %s227 = ssub.s32 %s15, %s22
    %p228 = scmp.eq.s32.totalorder %s227, 0
    %s230 = sadd.s32 %s229, 1
    %s231 = scalar_select %p228, %s229, %s230
    %p234 = pneg %p228
    %p235 = scmp.eq.s32.totalorder %s15, 1
    %p236 = por %p234, %p235
    %p237 = scmp.ne.s32.totalorder %s229, %s232
    %p238 = scmp.eq.s32.totalorder %s15, 0
    %p239 = por %p237, %p238
    %p240 = scmp.ne.s32.totalorder %s229, %s232
    %p241 = scmp.eq.s32.totalorder %s20, 1
    %p242 = por %p240, %p241
    %p243 = scmp.ne.s32.totalorder %s232, %s233
    %p244 = scmp.eq.s32.totalorder %s20, 0
    %p245 = por %p243, %p244
    %p246 = scmp.ne.s32.totalorder %s232, %s233
    %p247 = scmp.eq.s32.totalorder %s21, 1
    %p248 = por %p246, %p247
    %p250 = scmp.ne.s32.totalorder %s233, %s249
    %p251 = scmp.eq.s32.totalorder %s21, 0
    %p252 = por %p250, %p251
    %p253 = scmp.le.s32.totalorder 1, %s15
    %p254 = scmp.lt.s32.totalorder %s15, 3
    %p255 = pnand %p253, %p254
    %p256 = pneg %p255
    // Predicated region
    $region9: #{forward.55} parent=5 // pred_check
      _
    $region10: #{forward.55} parent=5 // pred_check_branch
      %258 = sbr.rel (%p255) target = $region12
    $region11: #{forward.55} parent=5 // pred_region
      %s259 = ssub.s32 %s15, 1
      // Predicated region
      $region13: #{forward.55} parent=11 // pred_check
        %p260 = pneg %p88
      $region14: #{forward.55} parent=11 // pred_check_branch
        %262 = sbr.rel (%p260) target = $region16
      $region15: #{forward.55} parent=11 // pred_region
        _
      $region16: #{forward.55} parent=11 // pred_fallthru
        _
      // Predicated region
      $region17: #{forward.55} parent=11 // pred_check
        %p263 = pneg %p109
      $region18: #{forward.55} parent=11 // pred_check_branch
        %265 = sbr.rel (%p263) target = $region20
      $region19: #{forward.55} parent=11 // pred_region
        _
      $region20: #{forward.55} parent=11 // pred_fallthru
        _
      // Predicated region
      $region21: #{forward.55} parent=11 // pred_check
        %p266 = pneg %p130
      $region22: #{forward.55} parent=11 // pred_check_branch
        %268 = sbr.rel (%p266) target = $region24
      $region23: #{forward.55} parent=11 // pred_region
        _
      $region24: #{forward.55} parent=11 // pred_fallthru
        _
      // Predicated region
      $region25: #{forward.55} parent=11 // pred_check
        %p269 = pneg %p151
      $region26: #{forward.55} parent=11 // pred_check_branch
        %271 = sbr.rel (%p269) target = $region28
      $region27: #{forward.55} parent=11 // pred_region
        _
      $region28: #{forward.55} parent=11 // pred_fallthru
        _
      // Predicated region
      $region29: #{forward.55} parent=11 // pred_check
        %p272 = pneg %p198
      $region30: #{forward.55} parent=11 // pred_check_branch
        %274 = sbr.rel (%p272) target = $region32
      $region31: #{forward.55} parent=11 // pred_region
        _
      $region32: #{forward.55} parent=11 // pred_fallthru
        _
      // Predicated region
      $region33: #{forward.55} parent=11 // pred_check
        %p275 = pneg %p219
      $region34: #{forward.55} parent=11 // pred_check_branch
        %277 = sbr.rel (%p275) target = $region36
      $region35: #{forward.55} parent=11 // pred_region
        _
      $region36: #{forward.55} parent=11 // pred_fallthru
        _
    $region12: #{forward.55} parent=5 // pred_fallthru
      _
    %p278 = scmp.lt.s32.totalorder %s15, 2
    // Predicated region
    $region37: #{forward.55} parent=5 // pred_check
      %p279 = pneg %p278
    $region38: #{forward.55} parent=5 // pred_check_branch
      %281 = sbr.rel (%p279) target = $region40
    $region39: #{forward.55} parent=5 // pred_region
      // Predicated region
      $region41: #{forward.55} parent=39 // pred_check
        %p282 = pneg %p35
      $region42: #{forward.55} parent=39 // pred_check_branch
        %284 = sbr.rel (%p282) target = $region44
      $region43: #{forward.55} parent=39 // pred_region
        %p285 = scmp.lt.s32.totalorder %s15, 1
        %s286 = scalar_select %p285, %s15, 1
        %s287 = smul.addr %s286, 8
        %s288 = scalar_lea.vmem %s0, %s287
      $region44: #{forward.55} parent=39 // pred_fallthru
        _
      // Predicated region
      $region45: #{forward.55} parent=39 // pred_check
        %p289 = pneg %p61
      $region46: #{forward.55} parent=39 // pred_check_branch
        %291 = sbr.rel (%p289) target = $region48
      $region47: #{forward.55} parent=39 // pred_region
        %p292 = scmp.lt.s32.totalorder %s15, 1
        %s293 = scalar_select %p292, %s15, 1
        %s294 = smul.addr %s293, 8
        %s295 = scalar_lea.vmem %s1, %s294
      $region48: #{forward.55} parent=39 // pred_fallthru
        _
      // Predicated region
      $region49: #{forward.55} parent=39 // pred_check
        %p296 = pneg %p171
      $region50: #{forward.55} parent=39 // pred_check_branch
        %298 = sbr.rel (%p296) target = $region52
      $region51: #{forward.55} parent=39 // pred_region
        %p299 = scmp.lt.s32.totalorder %s15, 1
        %s300 = scalar_select %p299, %s15, 1
        %s301 = scalar_lea.vmem %s6, %s300
      $region52: #{forward.55} parent=39 // pred_fallthru
        _
    $region40: #{forward.55} parent=5 // pred_fallthru
      _
    %p302 = scmp.le.s32.totalorder 1, %s15
    %p303 = scmp.lt.s32.totalorder %s15, 3
    %p304 = pnand %p302, %p303
    %p305 = pneg %p304
    // Predicated region
    $region53: #{forward.55} parent=5 // pred_check
      _
    $region54: #{forward.55} parent=5 // pred_check_branch
      %307 = sbr.rel (%p304) target = $region56
    $region55: #{forward.55} parent=5 // pred_region
      %s308 = ssub.s32 %s15, 1
      %p309 = scmp.lt.s32.totalorder %s20, 1
      %s310 = scalar_select %p309, %s20, 1
      %s311 = smul.addr %s310, 8
      %s312 = scalar_lea.vmem %s0, %s311
      %p313 = pneg %p41
      %p314 = pneg %p38
      %p315 = scmp.lt.s32.totalorder %s20, 1
      %s316 = scalar_select %p315, %s20, 1
      %s317 = smul.addr %s316, 8
      %s318 = scalar_lea.vmem %s1, %s317
      %p319 = pneg %p67
      %p320 = pneg %p64
      %p321 = pneg %p88
      %p322 = pneg %p85
      %p323 = pneg %p109
      %p324 = pneg %p106
      %p325 = pneg %p130
      %p326 = pneg %p127
      %p327 = pneg %p151
      %p328 = pneg %p148
      %p329 = scmp.lt.s32.totalorder %s20, 1
      %s330 = scalar_select %p329, %s20, 1
      %s331 = scalar_lea.vmem %s6, %s330
      %p332 = pneg %p177
      %p333 = pneg %p174
      %p334 = pneg %p198
      %p335 = pneg %p195
      %p336 = pneg %p219
      %p337 = pneg %p216
      %p338 = pneg %p245
      %p339 = pneg %p242
      %p340 = scmp.lt.s32.totalorder %s20, 1
      %s341 = scalar_select %p340, %s20, 1
      %s342 = smul.addr %s341, 8
      %s343 = scalar_lea.vmem %s9, %s342
      %p344 = scmp.lt.s32.totalorder %s20, 1
      %s345 = scalar_select %p344, %s20, 1
      %s346 = smul.addr %s345, 8
      %s347 = scalar_lea.vmem %s0, %s346
      %p348 = scmp.lt.s32.totalorder %s20, 1
      %s349 = scalar_select %p348, %s20, 1
      %s350 = smul.addr %s349, 8
      %s351 = scalar_lea.vmem %s1, %s350
      %p352 = scmp.lt.s32.totalorder %s20, 1
      %s353 = scalar_select %p352, %s20, 1
      %s354 = scalar_lea.vmem %s6, %s353
      %p355 = scmp.lt.s32.totalorder %s20, 1
      %s356 = scalar_select %p355, %s20, 1
      %s357 = smul.addr %s356, 8
      %s358 = scalar_lea.vmem %s9, %s357
      %v360 = vld [vmem:[%s347] sm:$0xff]
      %v361 = vpack.c.bf16 %v360, %v360
      %v362 = vld [vmem:[%s2] sm:$0xff]
      %v363 = vld [vmem:[%s2 + $0x8] sm:$0xff]
      %v364 = vld [vmem:[%s2 + $0x10] sm:$0xff]
      %v365 = vld [vmem:[%s2 + $0x18] sm:$0xff]
      %v366 = vpack.c.bf16 %v363, %v362
      %v367 = vpack.c.bf16 %v365, %v364
      %v368 = vld [vmem:[%s3] sm:$0x1]
      %v370 = vlaneseq
      %v371 = vshrl.u32 %v370, 7
      %v372 = vsub.s32 0, %v371
      %v373 = vrot.slane %v368, %v372
      %vm375 = vcmask 261120
      %v377 = vsel %vm375, %v361, 0
      %379 = vmatprep.subr.bf16.mxu0 0
      %380 = vmatpush1.bf16.msra.mxu0 %v366
      %381 = vmatprep.subr.bf16.mxu0 0
      %382 = vmatpush1.bf16.msra.mxu0 %v367
      %383 = vmatprep.subr.bf16.mxu0 0
      %384 = vmatpush1.bf16.msra.mxu0 0
      %385 = vmatprep.subr.bf16.mxu0 0
      %386 = vmatpush1.bf16.msra.mxu0 0
      %387 = vmatprep.subr.bf16.mxu0 0
      %388 = vmatpush1.bf16.msra.mxu0 0
      %389 = vmatprep.subr.bf16.mxu0 0
      %390 = vmatpush1.bf16.msra.mxu0 0
      %391 = vmatprep.subr.bf16.mxu0 0
      %392 = vmatpush1.bf16.msra.mxu0 0
      %393 = vmatprep.subr.bf16.mxu0 0
      %394 = vmatpush1.bf16.msra.mxu0 0
      %395 = vmatprep.subr.bf16.mxu0 0
      %396 = vmatpush1.bf16.msra.mxu0 0
      %397 = vmatprep.subr.bf16.mxu0 0
      %398 = vmatpush1.bf16.msra.mxu0 0
      %399 = vmatprep.subr.bf16.mxu0 0
      %400 = vmatpush1.bf16.msra.mxu0 0
      %401 = vmatprep.subr.bf16.mxu0 0
      %402 = vmatpush1.bf16.msra.mxu0 0
      %403 = vmatprep.subr.bf16.mxu0 0
      %404 = vmatpush1.bf16.msra.mxu0 0
      %405 = vmatprep.subr.bf16.mxu0 0
      %406 = vmatpush1.bf16.msra.mxu0 0
      %407 = vmatprep.subr.bf16.mxu0 0
      %408 = vmatpush1.bf16.msra.mxu0 0
      %409 = vmatprep.subr.bf16.mxu0 0
      %410 = vmatpush1.bf16.msra.mxu0 0
      %411 = vmatprep.mubr.bf16.mxu0 0
      %412 = vmatmul.mubr.bf16.gmra.mrb[0].mxu0 %v377
      %v413 = vpop.f32.mrb[0].mxu0
      %v414 = vadd.f32 %v373, %v413
      %v415 = vpop.f32.mrb[0].mxu0
      %v416 = vpop.f32.mrb[0].mxu0
      %v417 = vpop.f32.mrb[0].mxu0
      %418 = vdwg.mxu0
      %v419 = vld [vmem:[%s354] sm:$0x1]
      %v420 = vpack.c.bf16 %v414, %v414
      %422 = vrot.lane.b32.xlu0 %v420, 96
      %v423 = vpop.permute.xlu0 %422
      %vm424 = vcmask 64512
      %v426 = vsel %vm424, %v420, 0
      %v429 = vsel %vm424, %v423, 0
      %431 = vmatprep.subr.bf16.mxu0 0
      %432 = vmatpush1.bf16.xpose.msra.mxu0 %v429
      %433 = vmatprep.subr.bf16.mxu0 0
      %434 = vmatpush1.bf16.xpose.msra.mxu0 0
      %435 = vmatprep.subr.bf16.mxu0 0
      %436 = vmatpush1.bf16.xpose.msra.mxu0 0
      %437 = vmatprep.subr.bf16.mxu0 0
      %438 = vmatpush1.bf16.xpose.msra.mxu0 0
      %439 = vmatprep.subr.bf16.mxu0 0
      %440 = vmatpush1.bf16.xpose.msra.mxu0 0
      %441 = vmatprep.subr.bf16.mxu0 0
      %442 = vmatpush1.bf16.xpose.msra.mxu0 0
      %443 = vmatprep.subr.bf16.mxu0 0
      %444 = vmatpush1.bf16.xpose.msra.mxu0 0
      %445 = vmatprep.subr.bf16.mxu0 0
      %446 = vmatpush1.bf16.xpose.msra.mxu0 0
      %447 = vmatprep.subr.bf16.mxu0 0
      %448 = vmatpush1.bf16.xpose.msra.mxu0 0
      %449 = vmatprep.subr.bf16.mxu0 0
      %450 = vmatpush1.bf16.xpose.msra.mxu0 0
      %451 = vmatprep.subr.bf16.mxu0 0
      %452 = vmatpush1.bf16.xpose.msra.mxu0 0
      %453 = vmatprep.subr.bf16.mxu0 0
      %454 = vmatpush1.bf16.xpose.msra.mxu0 0
      %455 = vmatprep.subr.bf16.mxu0 0
      %456 = vmatpush1.bf16.xpose.msra.mxu0 0
      %457 = vmatprep.subr.bf16.mxu0 0
      %458 = vmatpush1.bf16.xpose.msra.mxu0 0
      %459 = vmatprep.subr.bf16.mxu0 0
      %460 = vmatpush1.bf16.xpose.msra.mxu0 0
      %461 = vmatprep.subr.bf16.mxu0 0
      %462 = vmatpush1.bf16.xpose.msra.mxu0 0
      %463 = vmatprep.mubr.bf16.mxu0 0
      %464 = vmatmul.mubr.bf16.gmra.mrb[0].mxu0 %v426
      %v465 = vpop.f32.mrb[0].mxu0
      %v466 = vadd.f32 0.0, %v465
      %v467 = vpop.f32.mrb[0].mxu0
      %v468 = vpop.f32.mrb[0].mxu0
      %v469 = vpop.f32.mrb[0].mxu0
      %470 = vdwg.mxu0
      %v471 = vmul.f32 %v466, 0.35355338
      %v473 = vlaneseq
      %v474 = vshrl.u32 %v473, 7
      %v475 = vsub.s32 0, %v474
      %v476 = vrot.slane %v419, %v475
      %v478 = vadd.f32 %v471, %v476
      %v479 = vsel %vm424, %v478, -inf
      %480 = vmax.xlane.f32.xlu0 %v479
      %v481 = vpop.xlane.xlu0 %480
      %v482 = vsub.f32 %v478, %v481
      %v483 = vmul.f32 %v482, 1.442695
      %v484 = vpow.pop %v483
      %v485 = vsel %vm424, %v484, 0.0
      %486 = vadd.xlane.f32.xlu0 %v485
      %v487 = vpop.xlane.xlu0 %486
      %v488 = vrcp.pop %v487
      %v489 = vmul.f32 %v484, %v488
      %v490 = vpack.c.bf16 %v489, %v489
      %491 = vrot.lane.b32.xlu0 %v420, 64
      %v492 = vpop.permute.xlu0 %491
      %v494 = vsel %vm424, %v490, 0
      %vm496 = vcmask 1043456
      %v498 = vsel %vm496, %v492, 0
      %500 = vmatprep.subr.bf16.mxu0 0
      %501 = vmatpush1.bf16.msra.mxu0 %v498
      %502 = vmatprep.subr.bf16.mxu0 0
      %503 = vmatpush1.bf16.msra.mxu0 0
      %504 = vmatprep.subr.bf16.mxu0 0
      %505 = vmatpush1.bf16.msra.mxu0 0
      %506 = vmatprep.subr.bf16.mxu0 0
      %507 = vmatpush1.bf16.msra.mxu0 0
      %508 = vmatprep.subr.bf16.mxu0 0
      %509 = vmatpush1.bf16.msra.mxu0 0
      %510 = vmatprep.subr.bf16.mxu0 0
      %511 = vmatpush1.bf16.msra.mxu0 0
      %512 = vmatprep.subr.bf16.mxu0 0
      %513 = vmatpush1.bf16.msra.mxu0 0
      %514 = vmatprep.subr.bf16.mxu0 0
      %515 = vmatpush1.bf16.msra.mxu0 0
      %516 = vmatprep.subr.bf16.mxu0 0
      %517 = vmatpush1.bf16.msra.mxu0 0
      %518 = vmatprep.subr.bf16.mxu0 0
      %519 = vmatpush1.bf16.msra.mxu0 0
      %520 = vmatprep.subr.bf16.mxu0 0
      %521 = vmatpush1.bf16.msra.mxu0 0
      %522 = vmatprep.subr.bf16.mxu0 0
      %523 = vmatpush1.bf16.msra.mxu0 0
      %524 = vmatprep.subr.bf16.mxu0 0
      %525 = vmatpush1.bf16.msra.mxu0 0
      %526 = vmatprep.subr.bf16.mxu0 0
      %527 = vmatpush1.bf16.msra.mxu0 0
      %528 = vmatprep.subr.bf16.mxu0 0
      %529 = vmatpush1.bf16.msra.mxu0 0
      %530 = vmatprep.subr.bf16.mxu0 0
      %531 = vmatpush1.bf16.msra.mxu0 0
      %532 = vmatprep.mubr.bf16.mxu0 0
      %533 = vmatmul.mubr.bf16.gmra.mrb[0].mxu0 %v494
      %v534 = vpop.f32.mrb[0].mxu0
      %v535 = vadd.f32 0.0, %v534
      %v536 = vpop.f32.mrb[0].mxu0
      %v537 = vpop.f32.mrb[0].mxu0
      %v538 = vpop.f32.mrb[0].mxu0
      %539 = vdwg.mxu0
      %540 = vrot.lane.b32.xlu0 %v420, 120
      %v541 = vpop.permute.xlu0 %540
      %542 = vrot.lane.b32.xlu0 %v420, 88
      %v543 = vpop.permute.xlu0 %542
      %v545 = vsel %vm424, %v541, 0
      %v548 = vsel %vm424, %v543, 0
      %550 = vmatprep.subr.bf16.mxu0 0
      %551 = vmatpush1.bf16.xpose.msra.mxu0 %v548
      %552 = vmatprep.subr.bf16.mxu0 0
      %553 = vmatpush1.bf16.xpose.msra.mxu0 0
      %554 = vmatprep.subr.bf16.mxu0 0
      %555 = vmatpush1.bf16.xpose.msra.mxu0 0
      %556 = vmatprep.subr.bf16.mxu0 0
      %557 = vmatpush1.bf16.xpose.msra.mxu0 0
      %558 = vmatprep.subr.bf16.mxu0 0
      %559 = vmatpush1.bf16.xpose.msra.mxu0 0
      %560 = vmatprep.subr.bf16.mxu0 0
      %561 = vmatpush1.bf16.xpose.msra.mxu0 0
      %562 = vmatprep.subr.bf16.mxu0 0
      %563 = vmatpush1.bf16.xpose.msra.mxu0 0
      %564 = vmatprep.subr.bf16.mxu0 0
      %565 = vmatpush1.bf16.xpose.msra.mxu0 0
      %566 = vmatprep.subr.bf16.mxu0 0
      %567 = vmatpush1.bf16.xpose.msra.mxu0 0
      %568 = vmatprep.subr.bf16.mxu0 0
      %569 = vmatpush1.bf16.xpose.msra.mxu0 0
      %570 = vmatprep.subr.bf16.mxu0 0
      %571 = vmatpush1.bf16.xpose.msra.mxu0 0
      %572 = vmatprep.subr.bf16.mxu0 0
      %573 = vmatpush1.bf16.xpose.msra.mxu0 0
      %574 = vmatprep.subr.bf16.mxu0 0
      %575 = vmatpush1.bf16.xpose.msra.mxu0 0
      %576 = vmatprep.subr.bf16.mxu0 0
      %577 = vmatpush1.bf16.xpose.msra.mxu0 0
      %578 = vmatprep.subr.bf16.mxu0 0
      %579 = vmatpush1.bf16.xpose.msra.mxu0 0
      %580 = vmatprep.subr.bf16.mxu0 0
      %581 = vmatpush1.bf16.xpose.msra.mxu0 0
      %582 = vmatprep.mubr.bf16.mxu0 0
      %583 = vmatmul.mubr.bf16.gmra.mrb[0].mxu0 %v545
      %v584 = vpop.f32.mrb[0].mxu0
      %v585 = vadd.f32 0.0, %v584
      %v586 = vpop.f32.mrb[0].mxu0
      %v587 = vpop.f32.mrb[0].mxu0
      %v588 = vpop.f32.mrb[0].mxu0
      %589 = vdwg.mxu0
      %v590 = vmul.f32 %v585, 0.35355338
      %v591 = vadd.f32 %v590, %v476
      %v592 = vsel %vm424, %v591, -inf
      %593 = vmax.xlane.f32.xlu0 %v592
      %v594 = vpop.xlane.xlu0 %593
      %v595 = vsub.f32 %v591, %v594
      %v596 = vmul.f32 %v595, 1.442695
      %v597 = vpow.pop %v596
      %v598 = vsel %vm424, %v597, 0.0
      %599 = vadd.xlane.f32.xlu0 %v598
      %v600 = vpop.xlane.xlu0 %599
      %v601 = vrcp.pop %v600
      %v602 = vmul.f32 %v597, %v601
      %v603 = vpack.c.bf16 %v602, %v602
      %604 = vrot.lane.b32.xlu0 %v420, 56
      %v605 = vpop.permute.xlu0 %604
      %v607 = vsel %vm424, %v603, 0
      %v610 = vsel %vm496, %v605, 0
      %612 = vmatprep.subr.bf16.mxu0 0
      %613 = vmatpush1.bf16.msra.mxu0 %v610
      %614 = vmatprep.subr.bf16.mxu0 0
      %615 = vmatpush1.bf16.msra.mxu0 0
      %616 = vmatprep.subr.bf16.mxu0 0
      %617 = vmatpush1.bf16.msra.mxu0 0
      %618 = vmatprep.subr.bf16.mxu0 0
      %619 = vmatpush1.bf16.msra.mxu0 0
      %620 = vmatprep.subr.bf16.mxu0 0
      %621 = vmatpush1.bf16.msra.mxu0 0
      %622 = vmatprep.subr.bf16.mxu0 0
      %623 = vmatpush1.bf16.msra.mxu0 0
      %624 = vmatprep.subr.bf16.mxu0 0
      %625 = vmatpush1.bf16.msra.mxu0 0
      %626 = vmatprep.subr.bf16.mxu0 0
      %627 = vmatpush1.bf16.msra.mxu0 0
      %628 = vmatprep.subr.bf16.mxu0 0
      %629 = vmatpush1.bf16.msra.mxu0 0
      %630 = vmatprep.subr.bf16.mxu0 0
      %631 = vmatpush1.bf16.msra.mxu0 0
      %632 = vmatprep.subr.bf16.mxu0 0
      %633 = vmatpush1.bf16.msra.mxu0 0
      %634 = vmatprep.subr.bf16.mxu0 0
      %635 = vmatpush1.bf16.msra.mxu0 0
      %636 = vmatprep.subr.bf16.mxu0 0
      %637 = vmatpush1.bf16.msra.mxu0 0
      %638 = vmatprep.subr.bf16.mxu0 0
      %639 = vmatpush1.bf16.msra.mxu0 0
      %640 = vmatprep.subr.bf16.mxu0 0
      %641 = vmatpush1.bf16.msra.mxu0 0
      %642 = vmatprep.subr.bf16.mxu0 0
      %643 = vmatpush1.bf16.msra.mxu0 0
      %644 = vmatprep.mubr.bf16.mxu0 0
      %645 = vmatmul.mubr.bf16.gmra.mrb[0].mxu0 %v607
      %v646 = vpop.f32.mrb[0].mxu0
      %v647 = vadd.f32 0.0, %v646
      %v648 = vpop.f32.mrb[0].mxu0
      %v649 = vpop.f32.mrb[0].mxu0
      %v650 = vpop.f32.mrb[0].mxu0
      %651 = vdwg.mxu0
      %652 = vrot.lane.b32.xlu0 %v420, 112
      %v653 = vpop.permute.xlu0 %652
      %654 = vrot.lane.b32.xlu0 %v420, 80
      %v655 = vpop.permute.xlu0 %654
      %v657 = vsel %vm424, %v653, 0
      %v660 = vsel %vm424, %v655, 0
      %662 = vmatprep.subr.bf16.mxu0 0
      %663 = vmatpush1.bf16.xpose.msra.mxu0 %v660
      %664 = vmatprep.subr.bf16.mxu0 0
      %665 = vmatpush1.bf16.xpose.msra.mxu0 0
      %666 = vmatprep.subr.bf16.mxu0 0
      %667 = vmatpush1.bf16.xpose.msra.mxu0 0
      %668 = vmatprep.subr.bf16.mxu0 0
      %669 = vmatpush1.bf16.xpose.msra.mxu0 0
      %670 = vmatprep.subr.bf16.mxu0 0
      %671 = vmatpush1.bf16.xpose.msra.mxu0 0
      %672 = vmatprep.subr.bf16.mxu0 0
      %673 = vmatpush1.bf16.xpose.msra.mxu0 0
      %674 = vmatprep.subr.bf16.mxu0 0
      %675 = vmatpush1.bf16.xpose.msra.mxu0 0
      %676 = vmatprep.subr.bf16.mxu0 0
      %677 = vmatpush1.bf16.xpose.msra.mxu0 0
      %678 = vmatprep.subr.bf16.mxu0 0
      %679 = vmatpush1.bf16.xpose.msra.mxu0 0
      %680 = vmatprep.subr.bf16.mxu0 0
      %681 = vmatpush1.bf16.xpose.msra.mxu0 0
      %682 = vmatprep.subr.bf16.mxu0 0
      %683 = vmatpush1.bf16.xpose.msra.mxu0 0
      %684 = vmatprep.subr.bf16.mxu0 0
      %685 = vmatpush1.bf16.xpose.msra.mxu0 0
      %686 = vmatprep.subr.bf16.mxu0 0
      %687 = vmatpush1.bf16.xpose.msra.mxu0 0
      %688 = vmatprep.subr.bf16.mxu0 0
      %689 = vmatpush1.bf16.xpose.msra.mxu0 0
      %690 = vmatprep.subr.bf16.mxu0 0
      %691 = vmatpush1.bf16.xpose.msra.mxu0 0
      %692 = vmatprep.subr.bf16.mxu0 0
      %693 = vmatpush1.bf16.xpose.msra.mxu0 0
      %694 = vmatprep.mubr.bf16.mxu0 0
      %695 = vmatmul.mubr.bf16.gmra.mrb[0].mxu0 %v657
      %v696 = vpop.f32.mrb[0].mxu0
      %v697 = vadd.f32 0.0, %v696
      %v698 = vpop.f32.mrb[0].mxu0
      %v699 = vpop.f32.mrb[0].mxu0
      %v700 = vpop.f32.mrb[0].mxu0
      %701 = vdwg.mxu0
      %v702 = vmul.f32 %v697, 0.35355338
      %v703 = vadd.f32 %v702, %v476
      %v704 = vsel %vm424, %v703, -inf
      %705 = vmax.xlane.f32.xlu0 %v704
      %v706 = vpop.xlane.xlu0 %705
      %v707 = vsub.f32 %v703, %v706
      %v708 = vmul.f32 %v707, 1.442695
      %v709 = vpow.pop %v708
      %v710 = vsel %vm424, %v709, 0.0
      %711 = vadd.xlane.f32.xlu0 %v710
      %v712 = vpop.xlane.xlu0 %711
      %v713 = vrcp.pop %v712
      %v714 = vmul.f32 %v709, %v713
      %v715 = vpack.c.bf16 %v714, %v714
      %716 = vrot.lane.b32.xlu0 %v420, 48
      %v717 = vpop.permute.xlu0 %716
      %v719 = vsel %vm424, %v715, 0
      %v722 = vsel %vm496, %v717, 0
      %724 = vmatprep.subr.bf16.mxu0 0
      %725 = vmatpush1.bf16.msra.mxu0 %v722
      %726 = vmatprep.subr.bf16.mxu0 0
      %727 = vmatpush1.bf16.msra.mxu0 0
      %728 = vmatprep.subr.bf16.mxu0 0
      %729 = vmatpush1.bf16.msra.mxu0 0
      %730 = vmatprep.subr.bf16.mxu0 0
      %731 = vmatpush1.bf16.msra.mxu0 0
      %732 = vmatprep.subr.bf16.mxu0 0
      %733 = vmatpush1.bf16.msra.mxu0 0
      %734 = vmatprep.subr.bf16.mxu0 0
      %735 = vmatpush1.bf16.msra.mxu0 0
      %736 = vmatprep.subr.bf16.mxu0 0
      %737 = vmatpush1.bf16.msra.mxu0 0
      %738 = vmatprep.subr.bf16.mxu0 0
      %739 = vmatpush1.bf16.msra.mxu0 0
      %740 = vmatprep.subr.bf16.mxu0 0
      %741 = vmatpush1.bf16.msra.mxu0 0
      %742 = vmatprep.subr.bf16.mxu0 0
      %743 = vmatpush1.bf16.msra.mxu0 0
      %744 = vmatprep.subr.bf16.mxu0 0
      %745 = vmatpush1.bf16.msra.mxu0 0
      %746 = vmatprep.subr.bf16.mxu0 0
      %747 = vmatpush1.bf16.msra.mxu0 0
      %748 = vmatprep.subr.bf16.mxu0 0
      %749 = vmatpush1.bf16.msra.mxu0 0
      %750 = vmatprep.subr.bf16.mxu0 0
      %751 = vmatpush1.bf16.msra.mxu0 0
      %752 = vmatprep.subr.bf16.mxu0 0
      %753 = vmatpush1.bf16.msra.mxu0 0
      %754 = vmatprep.subr.bf16.mxu0 0
      %755 = vmatpush1.bf16.msra.mxu0 0
      %756 = vmatprep.mubr.bf16.mxu0 0
      %757 = vmatmul.mubr.bf16.gmra.mrb[0].mxu0 %v719
      %v758 = vpop.f32.mrb[0].mxu0
      %v759 = vadd.f32 0.0, %v758
      %v760 = vpop.f32.mrb[0].mxu0
      %v761 = vpop.f32.mrb[0].mxu0
      %v762 = vpop.f32.mrb[0].mxu0
      %763 = vdwg.mxu0
      %764 = vrot.lane.b32.xlu0 %v420, 104
      %v765 = vpop.permute.xlu0 %764
      %766 = vrot.lane.b32.xlu0 %v420, 72
      %v767 = vpop.permute.xlu0 %766
      %v769 = vsel %vm424, %v765, 0
      %v772 = vsel %vm424, %v767, 0
      %774 = vmatprep.subr.bf16.mxu0 0
      %775 = vmatpush1.bf16.xpose.msra.mxu0 %v772
      %776 = vmatprep.subr.bf16.mxu0 0
      %777 = vmatpush1.bf16.xpose.msra.mxu0 0
      %778 = vmatprep.subr.bf16.mxu0 0
      %779 = vmatpush1.bf16.xpose.msra.mxu0 0
      %780 = vmatprep.subr.bf16.mxu0 0
      %781 = vmatpush1.bf16.xpose.msra.mxu0 0
      %782 = vmatprep.subr.bf16.mxu0 0
      %783 = vmatpush1.bf16.xpose.msra.mxu0 0
      %784 = vmatprep.subr.bf16.mxu0 0
      %785 = vmatpush1.bf16.xpose.msra.mxu0 0
      %786 = vmatprep.subr.bf16.mxu0 0
      %787 = vmatpush1.bf16.xpose.msra.mxu0 0
      %788 = vmatprep.subr.bf16.mxu0 0
      %789 = vmatpush1.bf16.xpose.msra.mxu0 0
      %790 = vmatprep.subr.bf16.mxu0 0
      %791 = vmatpush1.bf16.xpose.msra.mxu0 0
      %792 = vmatprep.subr.bf16.mxu0 0
      %793 = vmatpush1.bf16.xpose.msra.mxu0 0
      %794 = vmatprep.subr.bf16.mxu0 0
      %795 = vmatpush1.bf16.xpose.msra.mxu0 0
      %796 = vmatprep.subr.bf16.mxu0 0
      %797 = vmatpush1.bf16.xpose.msra.mxu0 0
      %798 = vmatprep.subr.bf16.mxu0 0
      %799 = vmatpush1.bf16.xpose.msra.mxu0 0
      %800 = vmatprep.subr.bf16.mxu0 0
      %801 = vmatpush1.bf16.xpose.msra.mxu0 0
      %802 = vmatprep.subr.bf16.mxu0 0
      %803 = vmatpush1.bf16.xpose.msra.mxu0 0
      %804 = vmatprep.subr.bf16.mxu0 0
      %805 = vmatpush1.bf16.xpose.msra.mxu0 0
      %806 = vmatprep.mubr.bf16.mxu0 0
      %807 = vmatmul.mubr.bf16.gmra.mrb[0].mxu0 %v769
      %v808 = vpop.f32.mrb[0].mxu0
      %v809 = vadd.f32 0.0, %v808
      %v810 = vpop.f32.mrb[0].mxu0
      %v811 = vpop.f32.mrb[0].mxu0
      %v812 = vpop.f32.mrb[0].mxu0
      %813 = vdwg.mxu0
      %v814 = vmul.f32 %v809, 0.35355338
      %v815 = vadd.f32 %v814, %v476
      %v816 = vsel %vm424, %v815, -inf
      %817 = vmax.xlane.f32.xlu0 %v816
      %v818 = vpop.xlane.xlu0 %817
      %v819 = vsub.f32 %v815, %v818
      %v820 = vmul.f32 %v819, 1.442695
      %v821 = vpow.pop %v820
      %v822 = vsel %vm424, %v821, 0.0
      %823 = vadd.xlane.f32.xlu0 %v822
      %v824 = vpop.xlane.xlu0 %823
      %v825 = vrcp.pop %v824
      %v826 = vmul.f32 %v821, %v825
      %v827 = vpack.c.bf16 %v826, %v826
      %828 = vrot.lane.b32.xlu0 %v420, 40
      %v829 = vpop.permute.xlu0 %828
      %v831 = vsel %vm424, %v827, 0
      %v834 = vsel %vm496, %v829, 0
      %836 = vmatprep.subr.bf16.mxu0 0
      %837 = vmatpush1.bf16.msra.mxu0 %v834
      %838 = vmatprep.subr.bf16.mxu0 0
      %839 = vmatpush1.bf16.msra.mxu0 0
      %840 = vmatprep.subr.bf16.mxu0 0
      %841 = vmatpush1.bf16.msra.mxu0 0
      %842 = vmatprep.subr.bf16.mxu0 0
      %843 = vmatpush1.bf16.msra.mxu0 0
      %844 = vmatprep.subr.bf16.mxu0 0
      %845 = vmatpush1.bf16.msra.mxu0 0
      %846 = vmatprep.subr.bf16.mxu0 0
      %847 = vmatpush1.bf16.msra.mxu0 0
      %848 = vmatprep.subr.bf16.mxu0 0
      %849 = vmatpush1.bf16.msra.mxu0 0
      %850 = vmatprep.subr.bf16.mxu0 0
      %851 = vmatpush1.bf16.msra.mxu0 0
      %852 = vmatprep.subr.bf16.mxu0 0
      %853 = vmatpush1.bf16.msra.mxu0 0
      %854 = vmatprep.subr.bf16.mxu0 0
      %855 = vmatpush1.bf16.msra.mxu0 0
      %856 = vmatprep.subr.bf16.mxu0 0
      %857 = vmatpush1.bf16.msra.mxu0 0
      %858 = vmatprep.subr.bf16.mxu0 0
      %859 = vmatpush1.bf16.msra.mxu0 0
      %860 = vmatprep.subr.bf16.mxu0 0
      %861 = vmatpush1.bf16.msra.mxu0 0
      %862 = vmatprep.subr.bf16.mxu0 0
      %863 = vmatpush1.bf16.msra.mxu0 0
      %864 = vmatprep.subr.bf16.mxu0 0
      %865 = vmatpush1.bf16.msra.mxu0 0
      %866 = vmatprep.subr.bf16.mxu0 0
      %867 = vmatpush1.bf16.msra.mxu0 0
      %868 = vmatprep.mubr.bf16.mxu0 0
      %869 = vmatmul.mubr.bf16.gmra.mrb[0].mxu0 %v831
      %v870 = vpop.f32.mrb[0].mxu0
      %v871 = vadd.f32 0.0, %v870
      %v872 = vpop.f32.mrb[0].mxu0
      %v873 = vpop.f32.mrb[0].mxu0
      %v874 = vpop.f32.mrb[0].mxu0
      %875 = vdwg.mxu0
      %877 = vrot.lane.b32.xlu0 %v647, 8
      %v878 = vpop.permute.xlu0 %877
      %881 = vrot.lane.b32.xlu0 %v759, 16
      %v882 = vpop.permute.xlu0 %881
      %885 = vrot.lane.b32.xlu0 %v871, 24
      %v886 = vpop.permute.xlu0 %885
      %v888 = vsel %vm424, %v535, %v878
      %vm889 = vcmask 130048
      %v890 = vsel %vm889, %v888, %v882
      %vm891 = vcmask 195584
      %v892 = vsel %vm891, %v890, %v886
      %v893 = vpack.c.bf16 %v892, %v892
      %v894 = vld [vmem:[%s4] sm:$0xff]
      %v895 = vld [vmem:[%s4 + $0x8] sm:$0xff]
      %v896 = vld [vmem:[%s4 + $0x10] sm:$0xff]
      %v897 = vld [vmem:[%s4 + $0x18] sm:$0xff]
      %v898 = vpack.c.bf16 %v895, %v894
      %v899 = vpack.c.bf16 %v897, %v896
      %v900 = vld [vmem:[%s5] sm:$0x1]
      %v902 = vlaneseq
      %v903 = vshrl.u32 %v902, 7
      %v904 = vsub.s32 0, %v903
      %v905 = vrot.slane %v900, %v904
      %v908 = vsel %vm375, %v893, 0
      %910 = vmatprep.subr.bf16.mxu0 0
      %911 = vmatpush1.bf16.msra.mxu0 %v898
      %912 = vmatprep.subr.bf16.mxu0 0
      %913 = vmatpush1.bf16.msra.mxu0 %v899
      %914 = vmatprep.subr.bf16.mxu0 0
      %915 = vmatpush1.bf16.msra.mxu0 0
      %916 = vmatprep.subr.bf16.mxu0 0
      %917 = vmatpush1.bf16.msra.mxu0 0
      %918 = vmatprep.subr.bf16.mxu0 0
      %919 = vmatpush1.bf16.msra.mxu0 0
      %920 = vmatprep.subr.bf16.mxu0 0
      %921 = vmatpush1.bf16.msra.mxu0 0
      %922 = vmatprep.subr.bf16.mxu0 0
      %923 = vmatpush1.bf16.msra.mxu0 0
      %924 = vmatprep.subr.bf16.mxu0 0
      %925 = vmatpush1.bf16.msra.mxu0 0
      %926 = vmatprep.subr.bf16.mxu0 0
      %927 = vmatpush1.bf16.msra.mxu0 0
      %928 = vmatprep.subr.bf16.mxu0 0
      %929 = vmatpush1.bf16.msra.mxu0 0
      %930 = vmatprep.subr.bf16.mxu0 0
      %931 = vmatpush1.bf16.msra.mxu0 0
      %932 = vmatprep.subr.bf16.mxu0 0
      %933 = vmatpush1.bf16.msra.mxu0 0
      %934 = vmatprep.subr.bf16.mxu0 0
      %935 = vmatpush1.bf16.msra.mxu0 0
      %936 = vmatprep.subr.bf16.mxu0 0
      %937 = vmatpush1.bf16.msra.mxu0 0
      %938 = vmatprep.subr.bf16.mxu0 0
      %939 = vmatpush1.bf16.msra.mxu0 0
      %940 = vmatprep.subr.bf16.mxu0 0
      %941 = vmatpush1.bf16.msra.mxu0 0
      %942 = vmatprep.mubr.bf16.mxu0 0
      %943 = vmatmul.mubr.bf16.gmra.mrb[0].mxu0 %v908
      %v944 = vpop.f32.mrb[0].mxu0
      %v945 = vadd.f32 %v905, %v944
      %v946 = vpop.f32.mrb[0].mxu0
      %v947 = vpop.f32.mrb[0].mxu0
      %v948 = vpop.f32.mrb[0].mxu0
      %949 = vdwg.mxu0
      %v950 = vadd.f32 %v360, %v945
      %v951 = vld [vmem:[%s7] sm:$0x1]
      %v952 = vld [vmem:[%s8] sm:$0x1]
      %v953 = vsel %vm375, %v950, 0.0
      %954 = vadd.xlane.f32.xlu0 %v953
      %v955 = vpop.xlane.xlu0 %954
      %v956 = vrcp.pop 32.0
      %v957 = vmul.f32 %v955, %v956
      %v958 = vsub.f32 %v950, %v957
      %v959 = vmul.f32 %v958, %v958
      %v960 = vsel %vm375, %v959, 0.0
      %961 = vadd.xlane.f32.xlu0 %v960
      %v962 = vpop.xlane.xlu0 %961
      %v963 = vmul.f32 %v962, %v956
      %v964 = vadd.f32 %v963, 1e-05
      %v965 = vrsqrt.pop %v964
      %v966 = vmul.f32 %v958, %v965
      %v968 = vlaneseq
      %v969 = vshrl.u32 %v968, 7
      %v970 = vsub.s32 0, %v969
      %v971 = vrot.slane %v951, %v970
      %v973 = vmul.f32 %v966, %v971
      %v975 = vlaneseq
      %v976 = vshrl.u32 %v975, 7
      %v977 = vsub.s32 0, %v976
      %v978 = vrot.slane %v952, %v977
      %v980 = vadd.f32 %v973, %v978
      %981 = vst.msk [vmem:[%s358] sm:$0xff] %vm375, %v980
      %p982 = scmp.lt.s32.totalorder %s20, 1
      %s983 = scalar_select %p982, %s20, 1
      %s984 = smul.addr %s983, 8
      %s985 = scalar_lea.vmem %s9, %s984
      // Predicated region
      $region57: #{forward.55} parent=55 // pred_check
        %p986 = pneg %p242
      $region58: #{forward.55} parent=55 // pred_check_branch
        %988 = sbr.rel (%p986) target = $region60
      $region59: #{forward.55} parent=55 // pred_region
        _
      $region60: #{forward.55} parent=55 // pred_fallthru
        _
    $region56: #{forward.55} parent=5 // pred_fallthru
      _
    %p989 = scmp.le.s32.totalorder 2, %s15
    // Predicated region
    $region61: #{forward.55} parent=5 // pred_check
      %p990 = pneg %p989
    $region62: #{forward.55} parent=5 // pred_check_branch
      %992 = sbr.rel (%p990) target = $region64
    $region63: #{forward.55} parent=5 // pred_region
      %s993 = ssub.s32 %s15, 2
      // Predicated region
      $region65: #{forward.55} parent=63 // pred_check
        %p994 = pneg %p248
      $region66: #{forward.55} parent=63 // pred_check_branch
        %996 = sbr.rel (%p994) target = $region68
      $region67: #{forward.55} parent=63 // pred_region
        %p997 = scmp.lt.s32.totalorder %s21, 1
        %s998 = scalar_select %p997, %s21, 1
        %s999 = smul.addr %s998, 8
        %s1000 = scalar_lea.vmem %s9, %s999
      $region68: #{forward.55} parent=63 // pred_fallthru
        _
    $region64: #{forward.55} parent=5 // pred_fallthru
      _
  $region6: #{forward.55} parent=0 // loop_footer
    %s19 = sadd.s32 1, %s15
  $region7: #{forward.55} parent=0 // loop_footer_branch
    %14 = sbr.rel target = $region3
  $region8: #{forward.55} parent=0 // loop_exit
    _

// kernel: forward.104
$region0: #{forward.104}
  #allocation0 [shape = 'u32[]', space=smem, size = 0x4, offset = 0x4, fixed_abs, tag = 'smem constant byte address 0x4 - core index']
  #allocation1 [shape = 'u32[144,128]{1,0:T(1,128)}', space=vmem, size = 0x12000, scoped, tag = 'internal scratch']
  %s0 = inlined_call_operand.vmem [shape: f32[2,8,32], index: 0, kind: input, shape index: {}]
  %s1 = inlined_call_operand.vmem [shape: f32[2,8,32], index: 1, kind: input, shape index: {}]
  %s2 = inlined_call_operand.vmem [shape: f32[32,96], index: 2, kind: input, shape index: {}]
  %s3 = inlined_call_operand.vmem [shape: f32[1,96], index: 3, kind: input, shape index: {}]
  %s4 = inlined_call_operand.vmem [shape: f32[32,32], index: 4, kind: input, shape index: {}]
  %s5 = inlined_call_operand.vmem [shape: f32[1,32], index: 5, kind: input, shape index: {}]
  %s6 = inlined_call_operand.vmem [shape: f32[2,1,8], index: 6, kind: input, shape index: {}]
  %s7 = inlined_call_operand.vmem [shape: f32[1,32], index: 7, kind: input, shape index: {}]
  %s8 = inlined_call_operand.vmem [shape: f32[1,32], index: 8, kind: input, shape index: {}]
  %s9 = inlined_call_operand.vmem [shape: f32[2,8,32], index: 9, kind: output, shape index: {}]
  %s10 = sld [smem:[#allocation0]]
  $region69: #{forward.104} parent=0
    _
  %s12 = ssub.s32 1, %s10
  %s13 = scalar_select 0, %s12, %s10
  loop: start=0, step=1, limit=4
  $region2: #{forward.104} parent=0 // loop_pre_header
    _
  $region3: #{forward.104} parent=0 // loop_header
    %s15 = sphi 0, %s19
    %p16 = scmp.ge.s32.totalorder %s15, 4
    %s25 = sphi 0, %s27
    %s28 = sphi 0, %s25
    %s29 = sphi 0, %s28
    %s45 = sphi 0, %s29
    %s51 = sphi 0, %s53
    %s54 = sphi 0, %s51
    %s55 = sphi 0, %s54
    %s71 = sphi 0, %s55
    %s75 = sphi 0, %s75
    %s77 = sphi 0, %s75
    %s78 = sphi 0, %s77
    %s92 = sphi 0, %s78
    %s96 = sphi 0, %s96
    %s98 = sphi 0, %s96
    %s99 = sphi 0, %s98
    %s113 = sphi 0, %s99
    %s117 = sphi 0, %s117
    %s119 = sphi 0, %s117
    %s120 = sphi 0, %s119
    %s134 = sphi 0, %s120
    %s138 = sphi 0, %s138
    %s140 = sphi 0, %s138
    %s141 = sphi 0, %s140
    %s155 = sphi 0, %s141
    %s161 = sphi 0, %s163
    %s164 = sphi 0, %s161
    %s165 = sphi 0, %s164
    %s181 = sphi 0, %s165
    %s185 = sphi 0, %s185
    %s187 = sphi 0, %s185
    %s188 = sphi 0, %s187
    %s202 = sphi 0, %s188
    %s206 = sphi 0, %s206
    %s208 = sphi 0, %s206
    %s209 = sphi 0, %s208
    %s223 = sphi 0, %s209
    %s229 = sphi 0, %s231
    %s232 = sphi 0, %s229
    %s233 = sphi 0, %s232
    %s249 = sphi 0, %s233
  $region4: #{forward.104} parent=0 // loop_header_branch
    %18 = sbr.rel (%p16) target = $region8
  $region5: #{forward.104} parent=0 // loop_body
    %s20 = ssub.s32 %s15, 1
    %s21 = ssub.s32 %s15, 2
    %s22 = sadd.s32 %s15, 1
    %s23 = ssub.s32 %s15, %s22
    %p24 = scmp.eq.s32.totalorder %s23, 0
    %s26 = sadd.s32 %s25, 1
    %s27 = scalar_select %p24, %s25, %s26
    %p30 = pneg %p24
    %p31 = scmp.eq.s32.totalorder %s15, 1
    %p32 = por %p30, %p31
    %p33 = scmp.ne.s32.totalorder %s25, %s28
    %p34 = scmp.eq.s32.totalorder %s15, 0
    %p35 = por %p33, %p34
    %p36 = scmp.ne.s32.totalorder %s25, %s28
    %p37 = scmp.eq.s32.totalorder %s20, 1
    %p38 = por %p36, %p37
    %p39 = scmp.ne.s32.totalorder %s28, %s29
    %p40 = scmp.eq.s32.totalorder %s20, 0
    %p41 = por %p39, %p40
    %p42 = scmp.ne.s32.totalorder %s28, %s29
    %p43 = scmp.eq.s32.totalorder %s21, 1
    %p44 = por %p42, %p43
    %p46 = scmp.ne.s32.totalorder %s29, %s45
    %p47 = scmp.eq.s32.totalorder %s21, 0
    %p48 = por %p46, %p47
    %s49 = ssub.s32 %s15, %s22
    %p50 = scmp.eq.s32.totalorder %s49, 0
    %s52 = sadd.s32 %s51, 1
    %s53 = scalar_select %p50, %s51, %s52
    %p56 = pneg %p50
    %p57 = scmp.eq.s32.totalorder %s15, 1
    %p58 = por %p56, %p57
    %p59 = scmp.ne.s32.totalorder %s51, %s54
    %p60 = scmp.eq.s32.totalorder %s15, 0
    %p61 = por %p59, %p60
    %p62 = scmp.ne.s32.totalorder %s51, %s54
    %p63 = scmp.eq.s32.totalorder %s20, 1
    %p64 = por %p62, %p63
    %p65 = scmp.ne.s32.totalorder %s54, %s55
    %p66 = scmp.eq.s32.totalorder %s20, 0
    %p67 = por %p65, %p66
    %p68 = scmp.ne.s32.totalorder %s54, %s55
    %p69 = scmp.eq.s32.totalorder %s21, 1
    %p70 = por %p68, %p69
    %p72 = scmp.ne.s32.totalorder %s55, %s71
    %p73 = scmp.eq.s32.totalorder %s21, 0
    %p74 = por %p72, %p73
    %s76 = sadd.s32 %s75, 1
    %p79 = scmp.eq.s32.totalorder %s15, 1
    %p80 = scmp.ne.s32.totalorder %s75, %s77
    %p81 = scmp.eq.s32.totalorder %s15, 0
    %p82 = por %p80, %p81
    %p83 = scmp.ne.s32.totalorder %s75, %s77
    %p84 = scmp.eq.s32.totalorder %s20, 1
    %p85 = por %p83, %p84
    %p86 = scmp.ne.s32.totalorder %s77, %s78
    %p87 = scmp.eq.s32.totalorder %s20, 0
    %p88 = por %p86, %p87
    %p89 = scmp.ne.s32.totalorder %s77, %s78
    %p90 = scmp.eq.s32.totalorder %s21, 1
    %p91 = por %p89, %p90
    %p93 = scmp.ne.s32.totalorder %s78, %s92
    %p94 = scmp.eq.s32.totalorder %s21, 0
    %p95 = por %p93, %p94
    %s97 = sadd.s32 %s96, 1
    %p100 = scmp.eq.s32.totalorder %s15, 1
    %p101 = scmp.ne.s32.totalorder %s96, %s98
    %p102 = scmp.eq.s32.totalorder %s15, 0
    %p103 = por %p101, %p102
    %p104 = scmp.ne.s32.totalorder %s96, %s98
    %p105 = scmp.eq.s32.totalorder %s20, 1
    %p106 = por %p104, %p105
    %p107 = scmp.ne.s32.totalorder %s98, %s99
    %p108 = scmp.eq.s32.totalorder %s20, 0
    %p109 = por %p107, %p108
    %p110 = scmp.ne.s32.totalorder %s98, %s99
    %p111 = scmp.eq.s32.totalorder %s21, 1
    %p112 = por %p110, %p111
    %p114 = scmp.ne.s32.totalorder %s99, %s113
    %p115 = scmp.eq.s32.totalorder %s21, 0
    %p116 = por %p114, %p115
    %s118 = sadd.s32 %s117, 1
    %p121 = scmp.eq.s32.totalorder %s15, 1
    %p122 = scmp.ne.s32.totalorder %s117, %s119
    %p123 = scmp.eq.s32.totalorder %s15, 0
    %p124 = por %p122, %p123
    %p125 = scmp.ne.s32.totalorder %s117, %s119
    %p126 = scmp.eq.s32.totalorder %s20, 1
    %p127 = por %p125, %p126
    %p128 = scmp.ne.s32.totalorder %s119, %s120
    %p129 = scmp.eq.s32.totalorder %s20, 0
    %p130 = por %p128, %p129
    %p131 = scmp.ne.s32.totalorder %s119, %s120
    %p132 = scmp.eq.s32.totalorder %s21, 1
    %p133 = por %p131, %p132
    %p135 = scmp.ne.s32.totalorder %s120, %s134
    %p136 = scmp.eq.s32.totalorder %s21, 0
    %p137 = por %p135, %p136
    %s139 = sadd.s32 %s138, 1
    %p142 = scmp.eq.s32.totalorder %s15, 1
    %p143 = scmp.ne.s32.totalorder %s138, %s140
    %p144 = scmp.eq.s32.totalorder %s15, 0
    %p145 = por %p143, %p144
    %p146 = scmp.ne.s32.totalorder %s138, %s140
    %p147 = scmp.eq.s32.totalorder %s20, 1
    %p148 = por %p146, %p147
    %p149 = scmp.ne.s32.totalorder %s140, %s141
    %p150 = scmp.eq.s32.totalorder %s20, 0
    %p151 = por %p149, %p150
    %p152 = scmp.ne.s32.totalorder %s140, %s141
    %p153 = scmp.eq.s32.totalorder %s21, 1
    %p154 = por %p152, %p153
    %p156 = scmp.ne.s32.totalorder %s141, %s155
    %p157 = scmp.eq.s32.totalorder %s21, 0
    %p158 = por %p156, %p157
    %s159 = ssub.s32 %s15, %s22
    %p160 = scmp.eq.s32.totalorder %s159, 0
    %s162 = sadd.s32 %s161, 1
    %s163 = scalar_select %p160, %s161, %s162
    %p166 = pneg %p160
    %p167 = scmp.eq.s32.totalorder %s15, 1
    %p168 = por %p166, %p167
    %p169 = scmp.ne.s32.totalorder %s161, %s164
    %p170 = scmp.eq.s32.totalorder %s15, 0
    %p171 = por %p169, %p170
    %p172 = scmp.ne.s32.totalorder %s161, %s164
    %p173 = scmp.eq.s32.totalorder %s20, 1
    %p174 = por %p172, %p173
    %p175 = scmp.ne.s32.totalorder %s164, %s165
    %p176 = scmp.eq.s32.totalorder %s20, 0
    %p177 = por %p175, %p176
    %p178 = scmp.ne.s32.totalorder %s164, %s165
    %p179 = scmp.eq.s32.totalorder %s21, 1
    %p180 = por %p178, %p179
    %p182 = scmp.ne.s32.totalorder %s165, %s181
    %p183 = scmp.eq.s32.totalorder %s21, 0
    %p184 = por %p182, %p183
    %s186 = sadd.s32 %s185, 1
    %p189 = scmp.eq.s32.totalorder %s15, 1
    %p190 = scmp.ne.s32.totalorder %s185, %s187
    %p191 = scmp.eq.s32.totalorder %s15, 0
    %p192 = por %p190, %p191
    %p193 = scmp.ne.s32.totalorder %s185, %s187
    %p194 = scmp.eq.s32.totalorder %s20, 1
    %p195 = por %p193, %p194
    %p196 = scmp.ne.s32.totalorder %s187, %s188
    %p197 = scmp.eq.s32.totalorder %s20, 0
    %p198 = por %p196, %p197
    %p199 = scmp.ne.s32.totalorder %s187, %s188
    %p200 = scmp.eq.s32.totalorder %s21, 1
    %p201 = por %p199, %p200
    %p203 = scmp.ne.s32.totalorder %s188, %s202
    %p204 = scmp.eq.s32.totalorder %s21, 0
    %p205 = por %p203, %p204
    %s207 = sadd.s32 %s206, 1
    %p210 = scmp.eq.s32.totalorder %s15, 1
    %p211 = scmp.ne.s32.totalorder %s206, %s208
    %p212 = scmp.eq.s32.totalorder %s15, 0
    %p213 = por %p211, %p212
    %p214 = scmp.ne.s32.totalorder %s206, %s208
    %p215 = scmp.eq.s32.totalorder %s20, 1
    %p216 = por %p214, %p215
    %p217 = scmp.ne.s32.totalorder %s208, %s209
    %p218 = scmp.eq.s32.totalorder %s20, 0
    %p219 = por %p217, %p218
    %p220 = scmp.ne.s32.totalorder %s208, %s209
    %p221 = scmp.eq.s32.totalorder %s21, 1
    %p222 = por %p220, %p221
    %p224 = scmp.ne.s32.totalorder %s209, %s223
    %p225 = scmp.eq.s32.totalorder %s21, 0
    %p226 = por %p224, %p225
    %s227 = ssub.s32 %s15, %s22
    %p228 = scmp.eq.s32.totalorder %s227, 0
    %s230 = sadd.s32 %s229, 1
    %s231 = scalar_select %p228, %s229, %s230
    %p234 = pneg %p228
    %p235 = scmp.eq.s32.totalorder %s15, 1
    %p236 = por %p234, %p235
    %p237 = scmp.ne.s32.totalorder %s229, %s232
    %p238 = scmp.eq.s32.totalorder %s15, 0
    %p239 = por %p237, %p238
    %p240 = scmp.ne.s32.totalorder %s229, %s232
    %p241 = scmp.eq.s32.totalorder %s20, 1
    %p242 = por %p240, %p241
    %p243 = scmp.ne.s32.totalorder %s232, %s233
    %p244 = scmp.eq.s32.totalorder %s20, 0
    %p245 = por %p243, %p244
    %p246 = scmp.ne.s32.totalorder %s232, %s233
    %p247 = scmp.eq.s32.totalorder %s21, 1
    %p248 = por %p246, %p247
    %p250 = scmp.ne.s32.totalorder %s233, %s249
    %p251 = scmp.eq.s32.totalorder %s21, 0
    %p252 = por %p250, %p251
    %p253 = scmp.le.s32.totalorder 1, %s15
    %p254 = scmp.lt.s32.totalorder %s15, 3
    %p255 = pnand %p253, %p254
    %p256 = pneg %p255
    // Predicated region
    $region9: #{forward.104} parent=5 // pred_check
      _
    $region10: #{forward.104} parent=5 // pred_check_branch
      %258 = sbr.rel (%p255) target = $region12
    $region11: #{forward.104} parent=5 // pred_region
      %s259 = ssub.s32 %s15, 1
      // Predicated region
      $region13: #{forward.104} parent=11 // pred_check
        %p260 = pneg %p88
      $region14: #{forward.104} parent=11 // pred_check_branch
        %262 = sbr.rel (%p260) target = $region16
      $region15: #{forward.104} parent=11 // pred_region
        _
      $region16: #{forward.104} parent=11 // pred_fallthru
        _
      // Predicated region
      $region17: #{forward.104} parent=11 // pred_check
        %p263 = pneg %p109
      $region18: #{forward.104} parent=11 // pred_check_branch
        %265 = sbr.rel (%p263) target = $region20
      $region19: #{forward.104} parent=11 // pred_region
        _
      $region20: #{forward.104} parent=11 // pred_fallthru
        _
      // Predicated region
      $region21: #{forward.104} parent=11 // pred_check
        %p266 = pneg %p130
      $region22: #{forward.104} parent=11 // pred_check_branch
        %268 = sbr.rel (%p266) target = $region24
      $region23: #{forward.104} parent=11 // pred_region
        _
      $region24: #{forward.104} parent=11 // pred_fallthru
        _
      // Predicated region
      $region25: #{forward.104} parent=11 // pred_check
        %p269 = pneg %p151
      $region26: #{forward.104} parent=11 // pred_check_branch
        %271 = sbr.rel (%p269) target = $region28
      $region27: #{forward.104} parent=11 // pred_region
        _
      $region28: #{forward.104} parent=11 // pred_fallthru
        _
      // Predicated region
      $region29: #{forward.104} parent=11 // pred_check
        %p272 = pneg %p198
      $region30: #{forward.104} parent=11 // pred_check_branch
        %274 = sbr.rel (%p272) target = $region32
      $region31: #{forward.104} parent=11 // pred_region
        _
      $region32: #{forward.104} parent=11 // pred_fallthru
        _
      // Predicated region
      $region33: #{forward.104} parent=11 // pred_check
        %p275 = pneg %p219
      $region34: #{forward.104} parent=11 // pred_check_branch
        %277 = sbr.rel (%p275) target = $region36
      $region35: #{forward.104} parent=11 // pred_region
        _
      $region36: #{forward.104} parent=11 // pred_fallthru
        _
    $region12: #{forward.104} parent=5 // pred_fallthru
      _
    %p278 = scmp.lt.s32.totalorder %s15, 2
    // Predicated region
    $region37: #{forward.104} parent=5 // pred_check
      %p279 = pneg %p278
    $region38: #{forward.104} parent=5 // pred_check_branch
      %281 = sbr.rel (%p279) target = $region40
    $region39: #{forward.104} parent=5 // pred_region
      // Predicated region
      $region41: #{forward.104} parent=39 // pred_check
        %p282 = pneg %p35
      $region42: #{forward.104} parent=39 // pred_check_branch
        %284 = sbr.rel (%p282) target = $region44
      $region43: #{forward.104} parent=39 // pred_region
        %p285 = scmp.lt.s32.totalorder %s15, 1
        %s286 = scalar_select %p285, %s15, 1
        %s287 = smul.addr %s286, 8
        %s288 = scalar_lea.vmem %s0, %s287
      $region44: #{forward.104} parent=39 // pred_fallthru
        _
      // Predicated region
      $region45: #{forward.104} parent=39 // pred_check
        %p289 = pneg %p61
      $region46: #{forward.104} parent=39 // pred_check_branch
        %291 = sbr.rel (%p289) target = $region48
      $region47: #{forward.104} parent=39 // pred_region
        %p292 = scmp.lt.s32.totalorder %s15, 1
        %s293 = scalar_select %p292, %s15, 1
        %s294 = smul.addr %s293, 8
        %s295 = scalar_lea.vmem %s1, %s294
      $region48: #{forward.104} parent=39 // pred_fallthru
        _
      // Predicated region
      $region49: #{forward.104} parent=39 // pred_check
        %p296 = pneg %p171
      $region50: #{forward.104} parent=39 // pred_check_branch
        %298 = sbr.rel (%p296) target = $region52
      $region51: #{forward.104} parent=39 // pred_region
        %p299 = scmp.lt.s32.totalorder %s15, 1
        %s300 = scalar_select %p299, %s15, 1
        %s301 = scalar_lea.vmem %s6, %s300
      $region52: #{forward.104} parent=39 // pred_fallthru
        _
    $region40: #{forward.104} parent=5 // pred_fallthru
      _
    %p302 = scmp.le.s32.totalorder 1, %s15
    %p303 = scmp.lt.s32.totalorder %s15, 3
    %p304 = pnand %p302, %p303
    %p305 = pneg %p304
    // Predicated region
    $region53: #{forward.104} parent=5 // pred_check
      _
    $region54: #{forward.104} parent=5 // pred_check_branch
      %307 = sbr.rel (%p304) target = $region56
    $region55: #{forward.104} parent=5 // pred_region
      %s308 = ssub.s32 %s15, 1
      %p309 = scmp.lt.s32.totalorder %s20, 1
      %s310 = scalar_select %p309, %s20, 1
      %s311 = smul.addr %s310, 8
      %s312 = scalar_lea.vmem %s0, %s311
      %p313 = pneg %p41
      %p314 = pneg %p38
      %p315 = scmp.lt.s32.totalorder %s20, 1
      %s316 = scalar_select %p315, %s20, 1
      %s317 = smul.addr %s316, 8
      %s318 = scalar_lea.vmem %s1, %s317
      %p319 = pneg %p67
      %p320 = pneg %p64
      %p321 = pneg %p88
      %p322 = pneg %p85
      %p323 = pneg %p109
      %p324 = pneg %p106
      %p325 = pneg %p130
      %p326 = pneg %p127
      %p327 = pneg %p151
      %p328 = pneg %p148
      %p329 = scmp.lt.s32.totalorder %s20, 1
      %s330 = scalar_select %p329, %s20, 1
      %s331 = scalar_lea.vmem %s6, %s330
      %p332 = pneg %p177
      %p333 = pneg %p174
      %p334 = pneg %p198
      %p335 = pneg %p195
      %p336 = pneg %p219
      %p337 = pneg %p216
      %p338 = pneg %p245
      %p339 = pneg %p242
      %p340 = scmp.lt.s32.totalorder %s20, 1
      %s341 = scalar_select %p340, %s20, 1
      %s342 = smul.addr %s341, 8
      %s343 = scalar_lea.vmem %s9, %s342
      %p344 = scmp.lt.s32.totalorder %s20, 1
      %s345 = scalar_select %p344, %s20, 1
      %s346 = smul.addr %s345, 8
      %s347 = scalar_lea.vmem %s0, %s346
      %p348 = scmp.lt.s32.totalorder %s20, 1
      %s349 = scalar_select %p348, %s20, 1
      %s350 = smul.addr %s349, 8
      %s351 = scalar_lea.vmem %s1, %s350
      %p352 = scmp.lt.s32.totalorder %s20, 1
      %s353 = scalar_select %p352, %s20, 1
      %s354 = scalar_lea.vmem %s6, %s353
      %p355 = scmp.lt.s32.totalorder %s20, 1
      %s356 = scalar_select %p355, %s20, 1
      %s357 = smul.addr %s356, 8
      %s358 = scalar_lea.vmem %s9, %s357
      %v360 = vld [vmem:[%s347] sm:$0xff]
      %v361 = vld [vmem:[%s351] sm:$0xff]
      %v362 = vpack.c.bf16 %v360, %v360
      %v363 = vld [vmem:[%s2] sm:$0xff]
      %v364 = vld [vmem:[%s2 + $0x8] sm:$0xff]
      %v365 = vld [vmem:[%s2 + $0x10] sm:$0xff]
      %v366 = vld [vmem:[%s2 + $0x18] sm:$0xff]
      %v367 = vpack.c.bf16 %v364, %v363
      %v368 = vpack.c.bf16 %v366, %v365
      %v369 = vld [vmem:[%s3] sm:$0x1]
      %v371 = vlaneseq
      %v372 = vshrl.u32 %v371, 7
      %v373 = vsub.s32 0, %v372
      %v374 = vrot.slane %v369, %v373
      %vm376 = vcmask 261120
      %v378 = vsel %vm376, %v362, 0
      %380 = vmatprep.subr.bf16.mxu0 0
      %381 = vmatpush1.bf16.msra.mxu0 %v367
      %382 = vmatprep.subr.bf16.mxu0 0
      %383 = vmatpush1.bf16.msra.mxu0 %v368
      %384 = vmatprep.subr.bf16.mxu0 0
      %385 = vmatpush1.bf16.msra.mxu0 0
      %386 = vmatprep.subr.bf16.mxu0 0
      %387 = vmatpush1.bf16.msra.mxu0 0
      %388 = vmatprep.subr.bf16.mxu0 0
      %389 = vmatpush1.bf16.msra.mxu0 0
      %390 = vmatprep.subr.bf16.mxu0 0
      %391 = vmatpush1.bf16.msra.mxu0 0
      %392 = vmatprep.subr.bf16.mxu0 0
      %393 = vmatpush1.bf16.msra.mxu0 0
      %394 = vmatprep.subr.bf16.mxu0 0
      %395 = vmatpush1.bf16.msra.mxu0 0
      %396 = vmatprep.subr.bf16.mxu0 0
      %397 = vmatpush1.bf16.msra.mxu0 0
      %398 = vmatprep.subr.bf16.mxu0 0
      %399 = vmatpush1.bf16.msra.mxu0 0
      %400 = vmatprep.subr.bf16.mxu0 0
      %401 = vmatpush1.bf16.msra.mxu0 0
      %402 = vmatprep.subr.bf16.mxu0 0
      %403 = vmatpush1.bf16.msra.mxu0 0
      %404 = vmatprep.subr.bf16.mxu0 0
      %405 = vmatpush1.bf16.msra.mxu0 0
      %406 = vmatprep.subr.bf16.mxu0 0
      %407 = vmatpush1.bf16.msra.mxu0 0
      %408 = vmatprep.subr.bf16.mxu0 0
      %409 = vmatpush1.bf16.msra.mxu0 0
      %410 = vmatprep.subr.bf16.mxu0 0
      %411 = vmatpush1.bf16.msra.mxu0 0
      %412 = vmatprep.mubr.bf16.mxu0 0
      %413 = vmatmul.mubr.bf16.gmra.mrb[0].mxu0 %v378
      %v414 = vpop.f32.mrb[0].mxu0
      %v415 = vadd.f32 %v374, %v414
      %v416 = vpop.f32.mrb[0].mxu0
      %v417 = vpop.f32.mrb[0].mxu0
      %v418 = vpop.f32.mrb[0].mxu0
      %419 = vdwg.mxu0
      %v420 = vpack.c.bf16 %v361, %v361
      %423 = vrot.lane.b32.xlu0 %v367, 96
      %v424 = vpop.permute.xlu0 %423
      %425 = vrot.lane.b32.xlu0 %v368, 96
      %v426 = vpop.permute.xlu0 %425
      %429 = vrot.lane.b32.xlu0 %v374, 96
      %v430 = vpop.permute.xlu0 %429
      %v433 = vsel %vm376, %v420, 0
      %435 = vmatprep.subr.bf16.mxu0 0
      %436 = vmatpush1.bf16.msra.mxu0 %v424
      %437 = vmatprep.subr.bf16.mxu0 0
      %438 = vmatpush1.bf16.msra.mxu0 %v426
      %439 = vmatprep.subr.bf16.mxu0 0
      %440 = vmatpush1.bf16.msra.mxu0 0
      %441 = vmatprep.subr.bf16.mxu0 0
      %442 = vmatpush1.bf16.msra.mxu0 0
      %443 = vmatprep.subr.bf16.mxu0 0
      %444 = vmatpush1.bf16.msra.mxu0 0
      %445 = vmatprep.subr.bf16.mxu0 0
      %446 = vmatpush1.bf16.msra.mxu0 0
      %447 = vmatprep.subr.bf16.mxu0 0
      %448 = vmatpush1.bf16.msra.mxu0 0
      %449 = vmatprep.subr.bf16.mxu0 0
      %450 = vmatpush1.bf16.msra.mxu0 0
      %451 = vmatprep.subr.bf16.mxu0 0
      %452 = vmatpush1.bf16.msra.mxu0 0
      %453 = vmatprep.subr.bf16.mxu0 0
      %454 = vmatpush1.bf16.msra.mxu0 0
      %455 = vmatprep.subr.bf16.mxu0 0
      %456 = vmatpush1.bf16.msra.mxu0 0
      %457 = vmatprep.subr.bf16.mxu0 0
      %458 = vmatpush1.bf16.msra.mxu0 0
      %459 = vmatprep.subr.bf16.mxu0 0
      %460 = vmatpush1.bf16.msra.mxu0 0
      %461 = vmatprep.subr.bf16.mxu0 0
      %462 = vmatpush1.bf16.msra.mxu0 0
      %463 = vmatprep.subr.bf16.mxu0 0
      %464 = vmatpush1.bf16.msra.mxu0 0
      %465 = vmatprep.subr.bf16.mxu0 0
      %466 = vmatpush1.bf16.msra.mxu0 0
      %467 = vmatprep.mubr.bf16.mxu0 0
      %468 = vmatmul.mubr.bf16.gmra.mrb[0].mxu0 %v433
      %v469 = vpop.f32.mrb[0].mxu0
      %v470 = vadd.f32 %v430, %v469
      %v471 = vpop.f32.mrb[0].mxu0
      %v472 = vpop.f32.mrb[0].mxu0
      %v473 = vpop.f32.mrb[0].mxu0
      %474 = vdwg.mxu0
      %v475 = vld [vmem:[%s354] sm:$0x1]
      %v476 = vpack.c.bf16 %v415, %v415
      %v477 = vpack.c.bf16 %v470, %v470
      %vm478 = vcmask 64512
      %v480 = vsel %vm478, %v476, 0
      %v483 = vsel %vm478, %v477, 0
      %485 = vmatprep.subr.bf16.mxu0 0
      %486 = vmatpush1.bf16.xpose.msra.mxu0 %v483
      %487 = vmatprep.subr.bf16.mxu0 0
      %488 = vmatpush1.bf16.xpose.msra.mxu0 0
      %489 = vmatprep.subr.bf16.mxu0 0
      %490 = vmatpush1.bf16.xpose.msra.mxu0 0
      %491 = vmatprep.subr.bf16.mxu0 0
      %492 = vmatpush1.bf16.xpose.msra.mxu0 0
      %493 = vmatprep.subr.bf16.mxu0 0
      %494 = vmatpush1.bf16.xpose.msra.mxu0 0
      %495 = vmatprep.subr.bf16.mxu0 0
      %496 = vmatpush1.bf16.xpose.msra.mxu0 0
      %497 = vmatprep.subr.bf16.mxu0 0
      %498 = vmatpush1.bf16.xpose.msra.mxu0 0
      %499 = vmatprep.subr.bf16.mxu0 0
      %500 = vmatpush1.bf16.xpose.msra.mxu0 0
      %501 = vmatprep.subr.bf16.mxu0 0
      %502 = vmatpush1.bf16.xpose.msra.mxu0 0
      %503 = vmatprep.subr.bf16.mxu0 0
      %504 = vmatpush1.bf16.xpose.msra.mxu0 0
      %505 = vmatprep.subr.bf16.mxu0 0
      %506 = vmatpush1.bf16.xpose.msra.mxu0 0
      %507 = vmatprep.subr.bf16.mxu0 0
      %508 = vmatpush1.bf16.xpose.msra.mxu0 0
      %509 = vmatprep.subr.bf16.mxu0 0
      %510 = vmatpush1.bf16.xpose.msra.mxu0 0
      %511 = vmatprep.subr.bf16.mxu0 0
      %512 = vmatpush1.bf16.xpose.msra.mxu0 0
      %513 = vmatprep.subr.bf16.mxu0 0
      %514 = vmatpush1.bf16.xpose.msra.mxu0 0
      %515 = vmatprep.subr.bf16.mxu0 0
      %516 = vmatpush1.bf16.xpose.msra.mxu0 0
      %517 = vmatprep.mubr.bf16.mxu0 0
      %518 = vmatmul.mubr.bf16.gmra.mrb[0].mxu0 %v480
      %v519 = vpop.f32.mrb[0].mxu0
      %v520 = vadd.f32 0.0, %v519
      %v521 = vpop.f32.mrb[0].mxu0
      %v522 = vpop.f32.mrb[0].mxu0
      %v523 = vpop.f32.mrb[0].mxu0
      %524 = vdwg.mxu0
      %v525 = vmul.f32 %v520, 0.35355338
      %v527 = vlaneseq
      %v528 = vshrl.u32 %v527, 7
      %v529 = vsub.s32 0, %v528
      %v530 = vrot.slane %v475, %v529
      %v532 = vadd.f32 %v525, %v530
      %v533 = vsel %vm478, %v532, -inf
      %534 = vmax.xlane.f32.xlu0 %v533
      %v535 = vpop.xlane.xlu0 %534
      %v536 = vsub.f32 %v532, %v535
      %v537 = vmul.f32 %v536, 1.442695
      %v538 = vpow.pop %v537
      %v539 = vsel %vm478, %v538, 0.0
      %540 = vadd.xlane.f32.xlu0 %v539
      %v541 = vpop.xlane.xlu0 %540
      %v542 = vrcp.pop %v541
      %v543 = vmul.f32 %v538, %v542
      %v544 = vpack.c.bf16 %v543, %v543
      %546 = vrot.lane.b32.xlu0 %v477, 96
      %v547 = vpop.permute.xlu0 %546
      %v549 = vsel %vm478, %v544, 0
      %vm551 = vcmask 1043456
      %v553 = vsel %vm551, %v547, 0
      %555 = vmatprep.subr.bf16.mxu0 0
      %556 = vmatpush1.bf16.msra.mxu0 %v553
      %557 = vmatprep.subr.bf16.mxu0 0
      %558 = vmatpush1.bf16.msra.mxu0 0
      %559 = vmatprep.subr.bf16.mxu0 0
      %560 = vmatpush1.bf16.msra.mxu0 0
      %561 = vmatprep.subr.bf16.mxu0 0
      %562 = vmatpush1.bf16.msra.mxu0 0
      %563 = vmatprep.subr.bf16.mxu0 0
      %564 = vmatpush1.bf16.msra.mxu0 0
      %565 = vmatprep.subr.bf16.mxu0 0
      %566 = vmatpush1.bf16.msra.mxu0 0
      %567 = vmatprep.subr.bf16.mxu0 0
      %568 = vmatpush1.bf16.msra.mxu0 0
      %569 = vmatprep.subr.bf16.mxu0 0
      %570 = vmatpush1.bf16.msra.mxu0 0
      %571 = vmatprep.subr.bf16.mxu0 0
      %572 = vmatpush1.bf16.msra.mxu0 0
      %573 = vmatprep.subr.bf16.mxu0 0
      %574 = vmatpush1.bf16.msra.mxu0 0
      %575 = vmatprep.subr.bf16.mxu0 0
      %576 = vmatpush1.bf16.msra.mxu0 0
      %577 = vmatprep.subr.bf16.mxu0 0
      %578 = vmatpush1.bf16.msra.mxu0 0
      %579 = vmatprep.subr.bf16.mxu0 0
      %580 = vmatpush1.bf16.msra.mxu0 0
      %581 = vmatprep.subr.bf16.mxu0 0
      %582 = vmatpush1.bf16.msra.mxu0 0
      %583 = vmatprep.subr.bf16.mxu0 0
      %584 = vmatpush1.bf16.msra.mxu0 0
      %585 = vmatprep.subr.bf16.mxu0 0
      %586 = vmatpush1.bf16.msra.mxu0 0
      %587 = vmatprep.mubr.bf16.mxu0 0
      %588 = vmatmul.mubr.bf16.gmra.mrb[0].mxu0 %v549
      %v589 = vpop.f32.mrb[0].mxu0
      %v590 = vadd.f32 0.0, %v589
      %v591 = vpop.f32.mrb[0].mxu0
      %v592 = vpop.f32.mrb[0].mxu0
      %v593 = vpop.f32.mrb[0].mxu0
      %594 = vdwg.mxu0
      %596 = vrot.lane.b32.xlu0 %v476, 120
      %v597 = vpop.permute.xlu0 %596
      %598 = vrot.lane.b32.xlu0 %v477, 120
      %v599 = vpop.permute.xlu0 %598
      %v601 = vsel %vm478, %v597, 0
      %v604 = vsel %vm478, %v599, 0
      %606 = vmatprep.subr.bf16.mxu0 0
      %607 = vmatpush1.bf16.xpose.msra.mxu0 %v604
      %608 = vmatprep.subr.bf16.mxu0 0
      %609 = vmatpush1.bf16.xpose.msra.mxu0 0
      %610 = vmatprep.subr.bf16.mxu0 0
      %611 = vmatpush1.bf16.xpose.msra.mxu0 0
      %612 = vmatprep.subr.bf16.mxu0 0
      %613 = vmatpush1.bf16.xpose.msra.mxu0 0
      %614 = vmatprep.subr.bf16.mxu0 0
      %615 = vmatpush1.bf16.xpose.msra.mxu0 0
      %616 = vmatprep.subr.bf16.mxu0 0
      %617 = vmatpush1.bf16.xpose.msra.mxu0 0
      %618 = vmatprep.subr.bf16.mxu0 0
      %619 = vmatpush1.bf16.xpose.msra.mxu0 0
      %620 = vmatprep.subr.bf16.mxu0 0
      %621 = vmatpush1.bf16.xpose.msra.mxu0 0
      %622 = vmatprep.subr.bf16.mxu0 0
      %623 = vmatpush1.bf16.xpose.msra.mxu0 0
      %624 = vmatprep.subr.bf16.mxu0 0
      %625 = vmatpush1.bf16.xpose.msra.mxu0 0
      %626 = vmatprep.subr.bf16.mxu0 0
      %627 = vmatpush1.bf16.xpose.msra.mxu0 0
      %628 = vmatprep.subr.bf16.mxu0 0
      %629 = vmatpush1.bf16.xpose.msra.mxu0 0
      %630 = vmatprep.subr.bf16.mxu0 0
      %631 = vmatpush1.bf16.xpose.msra.mxu0 0
      %632 = vmatprep.subr.bf16.mxu0 0
      %633 = vmatpush1.bf16.xpose.msra.mxu0 0
      %634 = vmatprep.subr.bf16.mxu0 0
      %635 = vmatpush1.bf16.xpose.msra.mxu0 0
      %636 = vmatprep.subr.bf16.mxu0 0
      %637 = vmatpush1.bf16.xpose.msra.mxu0 0
      %638 = vmatprep.mubr.bf16.mxu0 0
      %639 = vmatmul.mubr.bf16.gmra.mrb[0].mxu0 %v601
      %v640 = vpop.f32.mrb[0].mxu0
      %v641 = vadd.f32 0.0, %v640
      %v642 = vpop.f32.mrb[0].mxu0
      %v643 = vpop.f32.mrb[0].mxu0
      %v644 = vpop.f32.mrb[0].mxu0
      %645 = vdwg.mxu0
      %v646 = vmul.f32 %v641, 0.35355338
      %v647 = vadd.f32 %v646, %v530
      %v648 = vsel %vm478, %v647, -inf
      %649 = vmax.xlane.f32.xlu0 %v648
      %v650 = vpop.xlane.xlu0 %649
      %v651 = vsub.f32 %v647, %v650
      %v652 = vmul.f32 %v651, 1.442695
      %v653 = vpow.pop %v652
      %v654 = vsel %vm478, %v653, 0.0
      %655 = vadd.xlane.f32.xlu0 %v654
      %v656 = vpop.xlane.xlu0 %655
      %v657 = vrcp.pop %v656
      %v658 = vmul.f32 %v653, %v657
      %v659 = vpack.c.bf16 %v658, %v658
      %660 = vrot.lane.b32.xlu0 %v477, 88
      %v661 = vpop.permute.xlu0 %660
      %v663 = vsel %vm478, %v659, 0
      %v666 = vsel %vm551, %v661, 0
      %668 = vmatprep.subr.bf16.mxu0 0
      %669 = vmatpush1.bf16.msra.mxu0 %v666
      %670 = vmatprep.subr.bf16.mxu0 0
      %671 = vmatpush1.bf16.msra.mxu0 0
      %672 = vmatprep.subr.bf16.mxu0 0
      %673 = vmatpush1.bf16.msra.mxu0 0
      %674 = vmatprep.subr.bf16.mxu0 0
      %675 = vmatpush1.bf16.msra.mxu0 0
      %676 = vmatprep.subr.bf16.mxu0 0
      %677 = vmatpush1.bf16.msra.mxu0 0
      %678 = vmatprep.subr.bf16.mxu0 0
      %679 = vmatpush1.bf16.msra.mxu0 0
      %680 = vmatprep.subr.bf16.mxu0 0
      %681 = vmatpush1.bf16.msra.mxu0 0
      %682 = vmatprep.subr.bf16.mxu0 0
      %683 = vmatpush1.bf16.msra.mxu0 0
      %684 = vmatprep.subr.bf16.mxu0 0
      %685 = vmatpush1.bf16.msra.mxu0 0
      %686 = vmatprep.subr.bf16.mxu0 0
      %687 = vmatpush1.bf16.msra.mxu0 0
      %688 = vmatprep.subr.bf16.mxu0 0
      %689 = vmatpush1.bf16.msra.mxu0 0
      %690 = vmatprep.subr.bf16.mxu0 0
      %691 = vmatpush1.bf16.msra.mxu0 0
      %692 = vmatprep.subr.bf16.mxu0 0
      %693 = vmatpush1.bf16.msra.mxu0 0
      %694 = vmatprep.subr.bf16.mxu0 0
      %695 = vmatpush1.bf16.msra.mxu0 0
      %696 = vmatprep.subr.bf16.mxu0 0
      %697 = vmatpush1.bf16.msra.mxu0 0
      %698 = vmatprep.subr.bf16.mxu0 0
      %699 = vmatpush1.bf16.msra.mxu0 0
      %700 = vmatprep.mubr.bf16.mxu0 0
      %701 = vmatmul.mubr.bf16.gmra.mrb[0].mxu0 %v663
      %v702 = vpop.f32.mrb[0].mxu0
      %v703 = vadd.f32 0.0, %v702
      %v704 = vpop.f32.mrb[0].mxu0
      %v705 = vpop.f32.mrb[0].mxu0
      %v706 = vpop.f32.mrb[0].mxu0
      %707 = vdwg.mxu0
      %708 = vrot.lane.b32.xlu0 %v476, 112
      %v709 = vpop.permute.xlu0 %708
      %710 = vrot.lane.b32.xlu0 %v477, 112
      %v711 = vpop.permute.xlu0 %710
      %v713 = vsel %vm478, %v709, 0
      %v716 = vsel %vm478, %v711, 0
      %718 = vmatprep.subr.bf16.mxu0 0
      %719 = vmatpush1.bf16.xpose.msra.mxu0 %v716
      %720 = vmatprep.subr.bf16.mxu0 0
      %721 = vmatpush1.bf16.xpose.msra.mxu0 0
      %722 = vmatprep.subr.bf16.mxu0 0
      %723 = vmatpush1.bf16.xpose.msra.mxu0 0
      %724 = vmatprep.subr.bf16.mxu0 0
      %725 = vmatpush1.bf16.xpose.msra.mxu0 0
      %726 = vmatprep.subr.bf16.mxu0 0
      %727 = vmatpush1.bf16.xpose.msra.mxu0 0
      %728 = vmatprep.subr.bf16.mxu0 0
      %729 = vmatpush1.bf16.xpose.msra.mxu0 0
      %730 = vmatprep.subr.bf16.mxu0 0
      %731 = vmatpush1.bf16.xpose.msra.mxu0 0
      %732 = vmatprep.subr.bf16.mxu0 0
      %733 = vmatpush1.bf16.xpose.msra.mxu0 0
      %734 = vmatprep.subr.bf16.mxu0 0
      %735 = vmatpush1.bf16.xpose.msra.mxu0 0
      %736 = vmatprep.subr.bf16.mxu0 0
      %737 = vmatpush1.bf16.xpose.msra.mxu0 0
      %738 = vmatprep.subr.bf16.mxu0 0
      %739 = vmatpush1.bf16.xpose.msra.mxu0 0
      %740 = vmatprep.subr.bf16.mxu0 0
      %741 = vmatpush1.bf16.xpose.msra.mxu0 0
      %742 = vmatprep.subr.bf16.mxu0 0
      %743 = vmatpush1.bf16.xpose.msra.mxu0 0
      %744 = vmatprep.subr.bf16.mxu0 0
      %745 = vmatpush1.bf16.xpose.msra.mxu0 0
      %746 = vmatprep.subr.bf16.mxu0 0
      %747 = vmatpush1.bf16.xpose.msra.mxu0 0
      %748 = vmatprep.subr.bf16.mxu0 0
      %749 = vmatpush1.bf16.xpose.msra.mxu0 0
      %750 = vmatprep.mubr.bf16.mxu0 0
      %751 = vmatmul.mubr.bf16.gmra.mrb[0].mxu0 %v713
      %v752 = vpop.f32.mrb[0].mxu0
      %v753 = vadd.f32 0.0, %v752
      %v754 = vpop.f32.mrb[0].mxu0
      %v755 = vpop.f32.mrb[0].mxu0
      %v756 = vpop.f32.mrb[0].mxu0
      %757 = vdwg.mxu0
      %v758 = vmul.f32 %v753, 0.35355338
      %v759 = vadd.f32 %v758, %v530
      %v760 = vsel %vm478, %v759, -inf
      %761 = vmax.xlane.f32.xlu0 %v760
      %v762 = vpop.xlane.xlu0 %761
      %v763 = vsub.f32 %v759, %v762
      %v764 = vmul.f32 %v763, 1.442695
      %v765 = vpow.pop %v764
      %v766 = vsel %vm478, %v765, 0.0
      %767 = vadd.xlane.f32.xlu0 %v766
      %v768 = vpop.xlane.xlu0 %767
      %v769 = vrcp.pop %v768
      %v770 = vmul.f32 %v765, %v769
      %v771 = vpack.c.bf16 %v770, %v770
      %772 = vrot.lane.b32.xlu0 %v477, 80
      %v773 = vpop.permute.xlu0 %772
      %v775 = vsel %vm478, %v771, 0
      %v778 = vsel %vm551, %v773, 0
      %780 = vmatprep.subr.bf16.mxu0 0
      %781 = vmatpush1.bf16.msra.mxu0 %v778
      %782 = vmatprep.subr.bf16.mxu0 0
      %783 = vmatpush1.bf16.msra.mxu0 0
      %784 = vmatprep.subr.bf16.mxu0 0
      %785 = vmatpush1.bf16.msra.mxu0 0
      %786 = vmatprep.subr.bf16.mxu0 0
      %787 = vmatpush1.bf16.msra.mxu0 0
      %788 = vmatprep.subr.bf16.mxu0 0
      %789 = vmatpush1.bf16.msra.mxu0 0
      %790 = vmatprep.subr.bf16.mxu0 0
      %791 = vmatpush1.bf16.msra.mxu0 0
      %792 = vmatprep.subr.bf16.mxu0 0
      %793 = vmatpush1.bf16.msra.mxu0 0
      %794 = vmatprep.subr.bf16.mxu0 0
      %795 = vmatpush1.bf16.msra.mxu0 0
      %796 = vmatprep.subr.bf16.mxu0 0
      %797 = vmatpush1.bf16.msra.mxu0 0
      %798 = vmatprep.subr.bf16.mxu0 0
      %799 = vmatpush1.bf16.msra.mxu0 0
      %800 = vmatprep.subr.bf16.mxu0 0
      %801 = vmatpush1.bf16.msra.mxu0 0
      %802 = vmatprep.subr.bf16.mxu0 0
      %803 = vmatpush1.bf16.msra.mxu0 0
      %804 = vmatprep.subr.bf16.mxu0 0
      %805 = vmatpush1.bf16.msra.mxu0 0
      %806 = vmatprep.subr.bf16.mxu0 0
      %807 = vmatpush1.bf16.msra.mxu0 0
      %808 = vmatprep.subr.bf16.mxu0 0
      %809 = vmatpush1.bf16.msra.mxu0 0
      %810 = vmatprep.subr.bf16.mxu0 0
      %811 = vmatpush1.bf16.msra.mxu0 0
      %812 = vmatprep.mubr.bf16.mxu0 0
      %813 = vmatmul.mubr.bf16.gmra.mrb[0].mxu0 %v775
      %v814 = vpop.f32.mrb[0].mxu0
      %v815 = vadd.f32 0.0, %v814
      %v816 = vpop.f32.mrb[0].mxu0
      %v817 = vpop.f32.mrb[0].mxu0
      %v818 = vpop.f32.mrb[0].mxu0
      %819 = vdwg.mxu0
      %820 = vrot.lane.b32.xlu0 %v476, 104
      %v821 = vpop.permute.xlu0 %820
      %822 = vrot.lane.b32.xlu0 %v477, 104
      %v823 = vpop.permute.xlu0 %822
      %v825 = vsel %vm478, %v821, 0
      %v828 = vsel %vm478, %v823, 0
      %830 = vmatprep.subr.bf16.mxu0 0
      %831 = vmatpush1.bf16.xpose.msra.mxu0 %v828
      %832 = vmatprep.subr.bf16.mxu0 0
      %833 = vmatpush1.bf16.xpose.msra.mxu0 0
      %834 = vmatprep.subr.bf16.mxu0 0
      %835 = vmatpush1.bf16.xpose.msra.mxu0 0
      %836 = vmatprep.subr.bf16.mxu0 0
      %837 = vmatpush1.bf16.xpose.msra.mxu0 0
      %838 = vmatprep.subr.bf16.mxu0 0
      %839 = vmatpush1.bf16.xpose.msra.mxu0 0
      %840 = vmatprep.subr.bf16.mxu0 0
      %841 = vmatpush1.bf16.xpose.msra.mxu0 0
      %842 = vmatprep.subr.bf16.mxu0 0
      %843 = vmatpush1.bf16.xpose.msra.mxu0 0
      %844 = vmatprep.subr.bf16.mxu0 0
      %845 = vmatpush1.bf16.xpose.msra.mxu0 0
      %846 = vmatprep.subr.bf16.mxu0 0
      %847 = vmatpush1.bf16.xpose.msra.mxu0 0
      %848 = vmatprep.subr.bf16.mxu0 0
      %849 = vmatpush1.bf16.xpose.msra.mxu0 0
      %850 = vmatprep.subr.bf16.mxu0 0
      %851 = vmatpush1.bf16.xpose.msra.mxu0 0
      %852 = vmatprep.subr.bf16.mxu0 0
      %853 = vmatpush1.bf16.xpose.msra.mxu0 0
      %854 = vmatprep.subr.bf16.mxu0 0
      %855 = vmatpush1.bf16.xpose.msra.mxu0 0
      %856 = vmatprep.subr.bf16.mxu0 0
      %857 = vmatpush1.bf16.xpose.msra.mxu0 0
      %858 = vmatprep.subr.bf16.mxu0 0
      %859 = vmatpush1.bf16.xpose.msra.mxu0 0
      %860 = vmatprep.subr.bf16.mxu0 0
      %861 = vmatpush1.bf16.xpose.msra.mxu0 0
      %862 = vmatprep.mubr.bf16.mxu0 0
      %863 = vmatmul.mubr.bf16.gmra.mrb[0].mxu0 %v825
      %v864 = vpop.f32.mrb[0].mxu0
      %v865 = vadd.f32 0.0, %v864
      %v866 = vpop.f32.mrb[0].mxu0
      %v867 = vpop.f32.mrb[0].mxu0
      %v868 = vpop.f32.mrb[0].mxu0
      %869 = vdwg.mxu0
      %v870 = vmul.f32 %v865, 0.35355338
      %v871 = vadd.f32 %v870, %v530
      %v872 = vsel %vm478, %v871, -inf
      %873 = vmax.xlane.f32.xlu0 %v872
      %v874 = vpop.xlane.xlu0 %873
      %v875 = vsub.f32 %v871, %v874
      %v876 = vmul.f32 %v875, 1.442695
      %v877 = vpow.pop %v876
      %v878 = vsel %vm478, %v877, 0.0
      %879 = vadd.xlane.f32.xlu0 %v878
      %v880 = vpop.xlane.xlu0 %879
      %v881 = vrcp.pop %v880
      %v882 = vmul.f32 %v877, %v881
      %v883 = vpack.c.bf16 %v882, %v882
      %884 = vrot.lane.b32.xlu0 %v477, 72
      %v885 = vpop.permute.xlu0 %884
      %v887 = vsel %vm478, %v883, 0
      %v890 = vsel %vm551, %v885, 0
      %892 = vmatprep.subr.bf16.mxu0 0
      %893 = vmatpush1.bf16.msra.mxu0 %v890
      %894 = vmatprep.subr.bf16.mxu0 0
      %895 = vmatpush1.bf16.msra.mxu0 0
      %896 = vmatprep.subr.bf16.mxu0 0
      %897 = vmatpush1.bf16.msra.mxu0 0
      %898 = vmatprep.subr.bf16.mxu0 0
      %899 = vmatpush1.bf16.msra.mxu0 0
      %900 = vmatprep.subr.bf16.mxu0 0
      %901 = vmatpush1.bf16.msra.mxu0 0
      %902 = vmatprep.subr.bf16.mxu0 0
      %903 = vmatpush1.bf16.msra.mxu0 0
      %904 = vmatprep.subr.bf16.mxu0 0
      %905 = vmatpush1.bf16.msra.mxu0 0
      %906 = vmatprep.subr.bf16.mxu0 0
      %907 = vmatpush1.bf16.msra.mxu0 0
      %908 = vmatprep.subr.bf16.mxu0 0
      %909 = vmatpush1.bf16.msra.mxu0 0
      %910 = vmatprep.subr.bf16.mxu0 0
      %911 = vmatpush1.bf16.msra.mxu0 0
      %912 = vmatprep.subr.bf16.mxu0 0
      %913 = vmatpush1.bf16.msra.mxu0 0
      %914 = vmatprep.subr.bf16.mxu0 0
      %915 = vmatpush1.bf16.msra.mxu0 0
      %916 = vmatprep.subr.bf16.mxu0 0
      %917 = vmatpush1.bf16.msra.mxu0 0
      %918 = vmatprep.subr.bf16.mxu0 0
      %919 = vmatpush1.bf16.msra.mxu0 0
      %920 = vmatprep.subr.bf16.mxu0 0
      %921 = vmatpush1.bf16.msra.mxu0 0
      %922 = vmatprep.subr.bf16.mxu0 0
      %923 = vmatpush1.bf16.msra.mxu0 0
      %924 = vmatprep.mubr.bf16.mxu0 0
      %925 = vmatmul.mubr.bf16.gmra.mrb[0].mxu0 %v887
      %v926 = vpop.f32.mrb[0].mxu0
      %v927 = vadd.f32 0.0, %v926
      %v928 = vpop.f32.mrb[0].mxu0
      %v929 = vpop.f32.mrb[0].mxu0
      %v930 = vpop.f32.mrb[0].mxu0
      %931 = vdwg.mxu0
      %933 = vrot.lane.b32.xlu0 %v703, 8
      %v934 = vpop.permute.xlu0 %933
      %937 = vrot.lane.b32.xlu0 %v815, 16
      %v938 = vpop.permute.xlu0 %937
      %941 = vrot.lane.b32.xlu0 %v927, 24
      %v942 = vpop.permute.xlu0 %941
      %v944 = vsel %vm478, %v590, %v934
      %vm945 = vcmask 130048
      %v946 = vsel %vm945, %v944, %v938
      %vm947 = vcmask 195584
      %v948 = vsel %vm947, %v946, %v942
      %v949 = vpack.c.bf16 %v948, %v948
      %v950 = vld [vmem:[%s4] sm:$0xff]
      %v951 = vld [vmem:[%s4 + $0x8] sm:$0xff]
      %v952 = vld [vmem:[%s4 + $0x10] sm:$0xff]
      %v953 = vld [vmem:[%s4 + $0x18] sm:$0xff]
      %v954 = vpack.c.bf16 %v951, %v950
      %v955 = vpack.c.bf16 %v953, %v952
      %v956 = vld [vmem:[%s5] sm:$0x1]
      %v958 = vlaneseq
      %v959 = vshrl.u32 %v958, 7
      %v960 = vsub.s32 0, %v959
      %v961 = vrot.slane %v956, %v960
      %v964 = vsel %vm376, %v949, 0
      %966 = vmatprep.subr.bf16.mxu0 0
      %967 = vmatpush1.bf16.msra.mxu0 %v954
      %968 = vmatprep.subr.bf16.mxu0 0
      %969 = vmatpush1.bf16.msra.mxu0 %v955
      %970 = vmatprep.subr.bf16.mxu0 0
      %971 = vmatpush1.bf16.msra.mxu0 0
      %972 = vmatprep.subr.bf16.mxu0 0
      %973 = vmatpush1.bf16.msra.mxu0 0
      %974 = vmatprep.subr.bf16.mxu0 0
      %975 = vmatpush1.bf16.msra.mxu0 0
      %976 = vmatprep.subr.bf16.mxu0 0
      %977 = vmatpush1.bf16.msra.mxu0 0
      %978 = vmatprep.subr.bf16.mxu0 0
      %979 = vmatpush1.bf16.msra.mxu0 0
      %980 = vmatprep.subr.bf16.mxu0 0
      %981 = vmatpush1.bf16.msra.mxu0 0
      %982 = vmatprep.subr.bf16.mxu0 0
      %983 = vmatpush1.bf16.msra.mxu0 0
      %984 = vmatprep.subr.bf16.mxu0 0
      %985 = vmatpush1.bf16.msra.mxu0 0
      %986 = vmatprep.subr.bf16.mxu0 0
      %987 = vmatpush1.bf16.msra.mxu0 0
      %988 = vmatprep.subr.bf16.mxu0 0
      %989 = vmatpush1.bf16.msra.mxu0 0
      %990 = vmatprep.subr.bf16.mxu0 0
      %991 = vmatpush1.bf16.msra.mxu0 0
      %992 = vmatprep.subr.bf16.mxu0 0
      %993 = vmatpush1.bf16.msra.mxu0 0
      %994 = vmatprep.subr.bf16.mxu0 0
      %995 = vmatpush1.bf16.msra.mxu0 0
      %996 = vmatprep.subr.bf16.mxu0 0
      %997 = vmatpush1.bf16.msra.mxu0 0
      %998 = vmatprep.mubr.bf16.mxu0 0
      %999 = vmatmul.mubr.bf16.gmra.mrb[0].mxu0 %v964
      %v1000 = vpop.f32.mrb[0].mxu0
      %v1001 = vadd.f32 %v961, %v1000
      %v1002 = vpop.f32.mrb[0].mxu0
      %v1003 = vpop.f32.mrb[0].mxu0
      %v1004 = vpop.f32.mrb[0].mxu0
      %1005 = vdwg.mxu0
      %v1006 = vadd.f32 %v360, %v1001
      %v1007 = vld [vmem:[%s7] sm:$0x1]
      %v1008 = vld [vmem:[%s8] sm:$0x1]
      %v1009 = vsel %vm376, %v1006, 0.0
      %1010 = vadd.xlane.f32.xlu0 %v1009
      %v1011 = vpop.xlane.xlu0 %1010
      %v1012 = vrcp.pop 32.0
      %v1013 = vmul.f32 %v1011, %v1012
      %v1014 = vsub.f32 %v1006, %v1013
      %v1015 = vmul.f32 %v1014, %v1014
      %v1016 = vsel %vm376, %v1015, 0.0
      %1017 = vadd.xlane.f32.xlu0 %v1016
      %v1018 = vpop.xlane.xlu0 %1017
      %v1019 = vmul.f32 %v1018, %v1012
      %v1020 = vadd.f32 %v1019, 1e-05
      %v1021 = vrsqrt.pop %v1020
      %v1022 = vmul.f32 %v1014, %v1021
      %v1024 = vlaneseq
      %v1025 = vshrl.u32 %v1024, 7
      %v1026 = vsub.s32 0, %v1025
      %v1027 = vrot.slane %v1007, %v1026
      %v1029 = vmul.f32 %v1022, %v1027
      %v1031 = vlaneseq
      %v1032 = vshrl.u32 %v1031, 7
      %v1033 = vsub.s32 0, %v1032
      %v1034 = vrot.slane %v1008, %v1033
      %v1036 = vadd.f32 %v1029, %v1034
      %1037 = vst.msk [vmem:[%s358] sm:$0xff] %vm376, %v1036
      %p1038 = scmp.lt.s32.totalorder %s20, 1
      %s1039 = scalar_select %p1038, %s20, 1
      %s1040 = smul.addr %s1039, 8
      %s1041 = scalar_lea.vmem %s9, %s1040
      // Predicated region
      $region57: #{forward.104} parent=55 // pred_check
        %p1042 = pneg %p242
      $region58: #{forward.104} parent=55 // pred_check_branch
        %1044 = sbr.rel (%p1042) target = $region60
      $region59: #{forward.104} parent=55 // pred_region
        _
      $region60: #{forward.104} parent=55 // pred_fallthru
        _
    $region56: #{forward.104} parent=5 // pred_fallthru
      _
    %p1045 = scmp.le.s32.totalorder 2, %s15
    // Predicated region
    $region61: #{forward.104} parent=5 // pred_check
      %p1046 = pneg %p1045
    $region62: #{forward.104} parent=5 // pred_check_branch
      %1048 = sbr.rel (%p1046) target = $region64
    $region63: #{forward.104} parent=5 // pred_region
      %s1049 = ssub.s32 %s15, 2
      // Predicated region
      $region65: #{forward.104} parent=63 // pred_check
        %p1050 = pneg %p248
      $region66: #{forward.104} parent=63 // pred_check_branch
        %1052 = sbr.rel (%p1050) target = $region68
      $region67: #{forward.104} parent=63 // pred_region
        %p1053 = scmp.lt.s32.totalorder %s21, 1
        %s1054 = scalar_select %p1053, %s21, 1
        %s1055 = smul.addr %s1054, 8
        %s1056 = scalar_lea.vmem %s9, %s1055
      $region68: #{forward.104} parent=63 // pred_fallthru
        _
    $region64: #{forward.104} parent=5 // pred_fallthru
      _
  $region6: #{forward.104} parent=0 // loop_footer
    %s19 = sadd.s32 1, %s15
  $region7: #{forward.104} parent=0 // loop_footer_branch
    %14 = sbr.rel target = $region3
  $region8: #{forward.104} parent=0 // loop_exit
    _

// kernel: forward.103
$region0: #{forward.103}
  #allocation0 [shape = 'u32[]', space=smem, size = 0x4, offset = 0x4, fixed_abs, tag = 'smem constant byte address 0x4 - core index']
  #allocation1 [shape = 'u32[144,128]{1,0:T(1,128)}', space=vmem, size = 0x12000, scoped, tag = 'internal scratch']
  %s0 = inlined_call_operand.vmem [shape: f32[2,8,32], index: 0, kind: input, shape index: {}, may-alias: {0,1}]
  %s1 = inlined_call_operand.vmem [shape: f32[2,8,32], index: 1, kind: input, shape index: {}, may-alias: {0,1}]
  %s2 = inlined_call_operand.vmem [shape: f32[32,96], index: 2, kind: input, shape index: {}]
  %s3 = inlined_call_operand.vmem [shape: f32[1,96], index: 3, kind: input, shape index: {}]
  %s4 = inlined_call_operand.vmem [shape: f32[32,32], index: 4, kind: input, shape index: {}]
  %s5 = inlined_call_operand.vmem [shape: f32[1,32], index: 5, kind: input, shape index: {}]
  %s6 = inlined_call_operand.vmem [shape: f32[2,1,8], index: 6, kind: input, shape index: {}]
  %s7 = inlined_call_operand.vmem [shape: f32[1,32], index: 7, kind: input, shape index: {}]
  %s8 = inlined_call_operand.vmem [shape: f32[1,32], index: 8, kind: input, shape index: {}]
  %s9 = inlined_call_operand.vmem [shape: f32[2,8,32], index: 9, kind: output, shape index: {}]
  %s10 = sld [smem:[#allocation0]]
  $region69: #{forward.103} parent=0
    _
  %s12 = ssub.s32 1, %s10
  %s13 = scalar_select 0, %s12, %s10
  loop: start=0, step=1, limit=4
  $region2: #{forward.103} parent=0 // loop_pre_header
    _
  $region3: #{forward.103} parent=0 // loop_header
    %s15 = sphi 0, %s19
    %p16 = scmp.ge.s32.totalorder %s15, 4
    %s25 = sphi 0, %s27
    %s28 = sphi 0, %s25
    %s29 = sphi 0, %s28
    %s45 = sphi 0, %s29
    %s51 = sphi 0, %s53
    %s54 = sphi 0, %s51
    %s55 = sphi 0, %s54
    %s71 = sphi 0, %s55
    %s75 = sphi 0, %s75
    %s77 = sphi 0, %s75
    %s78 = sphi 0, %s77
    %s92 = sphi 0, %s78
    %s96 = sphi 0, %s96
    %s98 = sphi 0, %s96
    %s99 = sphi 0, %s98
    %s113 = sphi 0, %s99
    %s117 = sphi 0, %s117
    %s119 = sphi 0, %s117
    %s120 = sphi 0, %s119
    %s134 = sphi 0, %s120
    %s138 = sphi 0, %s138
    %s140 = sphi 0, %s138
    %s141 = sphi 0, %s140
    %s155 = sphi 0, %s141
    %s161 = sphi 0, %s163
    %s164 = sphi 0, %s161
    %s165 = sphi 0, %s164
    %s181 = sphi 0, %s165
    %s185 = sphi 0, %s185
    %s187 = sphi 0, %s185
    %s188 = sphi 0, %s187
    %s202 = sphi 0, %s188
    %s206 = sphi 0, %s206
    %s208 = sphi 0, %s206
    %s209 = sphi 0, %s208
    %s223 = sphi 0, %s209
    %s229 = sphi 0, %s231
    %s232 = sphi 0, %s229
    %s233 = sphi 0, %s232
    %s249 = sphi 0, %s233
  $region4: #{forward.103} parent=0 // loop_header_branch
    %18 = sbr.rel (%p16) target = $region8
  $region5: #{forward.103} parent=0 // loop_body
    %s20 = ssub.s32 %s15, 1
    %s21 = ssub.s32 %s15, 2
    %s22 = sadd.s32 %s15, 1
    %s23 = ssub.s32 %s15, %s22
    %p24 = scmp.eq.s32.totalorder %s23, 0
    %s26 = sadd.s32 %s25, 1
    %s27 = scalar_select %p24, %s25, %s26
    %p30 = pneg %p24
    %p31 = scmp.eq.s32.totalorder %s15, 1
    %p32 = por %p30, %p31
    %p33 = scmp.ne.s32.totalorder %s25, %s28
    %p34 = scmp.eq.s32.totalorder %s15, 0
    %p35 = por %p33, %p34
    %p36 = scmp.ne.s32.totalorder %s25, %s28
    %p37 = scmp.eq.s32.totalorder %s20, 1
    %p38 = por %p36, %p37
    %p39 = scmp.ne.s32.totalorder %s28, %s29
    %p40 = scmp.eq.s32.totalorder %s20, 0
    %p41 = por %p39, %p40
    %p42 = scmp.ne.s32.totalorder %s28, %s29
    %p43 = scmp.eq.s32.totalorder %s21, 1
    %p44 = por %p42, %p43
    %p46 = scmp.ne.s32.totalorder %s29, %s45
    %p47 = scmp.eq.s32.totalorder %s21, 0
    %p48 = por %p46, %p47
    %s49 = ssub.s32 %s15, %s22
    %p50 = scmp.eq.s32.totalorder %s49, 0
    %s52 = sadd.s32 %s51, 1
    %s53 = scalar_select %p50, %s51, %s52
    %p56 = pneg %p50
    %p57 = scmp.eq.s32.totalorder %s15, 1
    %p58 = por %p56, %p57
    %p59 = scmp.ne.s32.totalorder %s51, %s54
    %p60 = scmp.eq.s32.totalorder %s15, 0
    %p61 = por %p59, %p60
    %p62 = scmp.ne.s32.totalorder %s51, %s54
    %p63 = scmp.eq.s32.totalorder %s20, 1
    %p64 = por %p62, %p63
    %p65 = scmp.ne.s32.totalorder %s54, %s55
    %p66 = scmp.eq.s32.totalorder %s20, 0
    %p67 = por %p65, %p66
    %p68 = scmp.ne.s32.totalorder %s54, %s55
    %p69 = scmp.eq.s32.totalorder %s21, 1
    %p70 = por %p68, %p69
    %p72 = scmp.ne.s32.totalorder %s55, %s71
    %p73 = scmp.eq.s32.totalorder %s21, 0
    %p74 = por %p72, %p73
    %s76 = sadd.s32 %s75, 1
    %p79 = scmp.eq.s32.totalorder %s15, 1
    %p80 = scmp.ne.s32.totalorder %s75, %s77
    %p81 = scmp.eq.s32.totalorder %s15, 0
    %p82 = por %p80, %p81
    %p83 = scmp.ne.s32.totalorder %s75, %s77
    %p84 = scmp.eq.s32.totalorder %s20, 1
    %p85 = por %p83, %p84
    %p86 = scmp.ne.s32.totalorder %s77, %s78
    %p87 = scmp.eq.s32.totalorder %s20, 0
    %p88 = por %p86, %p87
    %p89 = scmp.ne.s32.totalorder %s77, %s78
    %p90 = scmp.eq.s32.totalorder %s21, 1
    %p91 = por %p89, %p90
    %p93 = scmp.ne.s32.totalorder %s78, %s92
    %p94 = scmp.eq.s32.totalorder %s21, 0
    %p95 = por %p93, %p94
    %s97 = sadd.s32 %s96, 1
    %p100 = scmp.eq.s32.totalorder %s15, 1
    %p101 = scmp.ne.s32.totalorder %s96, %s98
    %p102 = scmp.eq.s32.totalorder %s15, 0
    %p103 = por %p101, %p102
    %p104 = scmp.ne.s32.totalorder %s96, %s98
    %p105 = scmp.eq.s32.totalorder %s20, 1
    %p106 = por %p104, %p105
    %p107 = scmp.ne.s32.totalorder %s98, %s99
    %p108 = scmp.eq.s32.totalorder %s20, 0
    %p109 = por %p107, %p108
    %p110 = scmp.ne.s32.totalorder %s98, %s99
    %p111 = scmp.eq.s32.totalorder %s21, 1
    %p112 = por %p110, %p111
    %p114 = scmp.ne.s32.totalorder %s99, %s113
    %p115 = scmp.eq.s32.totalorder %s21, 0
    %p116 = por %p114, %p115
    %s118 = sadd.s32 %s117, 1
    %p121 = scmp.eq.s32.totalorder %s15, 1
    %p122 = scmp.ne.s32.totalorder %s117, %s119
    %p123 = scmp.eq.s32.totalorder %s15, 0
    %p124 = por %p122, %p123
    %p125 = scmp.ne.s32.totalorder %s117, %s119
    %p126 = scmp.eq.s32.totalorder %s20, 1
    %p127 = por %p125, %p126
    %p128 = scmp.ne.s32.totalorder %s119, %s120
    %p129 = scmp.eq.s32.totalorder %s20, 0
    %p130 = por %p128, %p129
    %p131 = scmp.ne.s32.totalorder %s119, %s120
    %p132 = scmp.eq.s32.totalorder %s21, 1
    %p133 = por %p131, %p132
    %p135 = scmp.ne.s32.totalorder %s120, %s134
    %p136 = scmp.eq.s32.totalorder %s21, 0
    %p137 = por %p135, %p136
    %s139 = sadd.s32 %s138, 1
    %p142 = scmp.eq.s32.totalorder %s15, 1
    %p143 = scmp.ne.s32.totalorder %s138, %s140
    %p144 = scmp.eq.s32.totalorder %s15, 0
    %p145 = por %p143, %p144
    %p146 = scmp.ne.s32.totalorder %s138, %s140
    %p147 = scmp.eq.s32.totalorder %s20, 1
    %p148 = por %p146, %p147
    %p149 = scmp.ne.s32.totalorder %s140, %s141
    %p150 = scmp.eq.s32.totalorder %s20, 0
    %p151 = por %p149, %p150
    %p152 = scmp.ne.s32.totalorder %s140, %s141
    %p153 = scmp.eq.s32.totalorder %s21, 1
    %p154 = por %p152, %p153
    %p156 = scmp.ne.s32.totalorder %s141, %s155
    %p157 = scmp.eq.s32.totalorder %s21, 0
    %p158 = por %p156, %p157
    %s159 = ssub.s32 %s15, %s22
    %p160 = scmp.eq.s32.totalorder %s159, 0
    %s162 = sadd.s32 %s161, 1
    %s163 = scalar_select %p160, %s161, %s162
    %p166 = pneg %p160
    %p167 = scmp.eq.s32.totalorder %s15, 1
    %p168 = por %p166, %p167
    %p169 = scmp.ne.s32.totalorder %s161, %s164
    %p170 = scmp.eq.s32.totalorder %s15, 0
    %p171 = por %p169, %p170
    %p172 = scmp.ne.s32.totalorder %s161, %s164
    %p173 = scmp.eq.s32.totalorder %s20, 1
    %p174 = por %p172, %p173
    %p175 = scmp.ne.s32.totalorder %s164, %s165
    %p176 = scmp.eq.s32.totalorder %s20, 0
    %p177 = por %p175, %p176
    %p178 = scmp.ne.s32.totalorder %s164, %s165
    %p179 = scmp.eq.s32.totalorder %s21, 1
    %p180 = por %p178, %p179
    %p182 = scmp.ne.s32.totalorder %s165, %s181
    %p183 = scmp.eq.s32.totalorder %s21, 0
    %p184 = por %p182, %p183
    %s186 = sadd.s32 %s185, 1
    %p189 = scmp.eq.s32.totalorder %s15, 1
    %p190 = scmp.ne.s32.totalorder %s185, %s187
    %p191 = scmp.eq.s32.totalorder %s15, 0
    %p192 = por %p190, %p191
    %p193 = scmp.ne.s32.totalorder %s185, %s187
    %p194 = scmp.eq.s32.totalorder %s20, 1
    %p195 = por %p193, %p194
    %p196 = scmp.ne.s32.totalorder %s187, %s188
    %p197 = scmp.eq.s32.totalorder %s20, 0
    %p198 = por %p196, %p197
    %p199 = scmp.ne.s32.totalorder %s187, %s188
    %p200 = scmp.eq.s32.totalorder %s21, 1
    %p201 = por %p199, %p200
    %p203 = scmp.ne.s32.totalorder %s188, %s202
    %p204 = scmp.eq.s32.totalorder %s21, 0
    %p205 = por %p203, %p204
    %s207 = sadd.s32 %s206, 1
    %p210 = scmp.eq.s32.totalorder %s15, 1
    %p211 = scmp.ne.s32.totalorder %s206, %s208
    %p212 = scmp.eq.s32.totalorder %s15, 0
    %p213 = por %p211, %p212
    %p214 = scmp.ne.s32.totalorder %s206, %s208
    %p215 = scmp.eq.s32.totalorder %s20, 1
    %p216 = por %p214, %p215
    %p217 = scmp.ne.s32.totalorder %s208, %s209
    %p218 = scmp.eq.s32.totalorder %s20, 0
    %p219 = por %p217, %p218
    %p220 = scmp.ne.s32.totalorder %s208, %s209
    %p221 = scmp.eq.s32.totalorder %s21, 1
    %p222 = por %p220, %p221
    %p224 = scmp.ne.s32.totalorder %s209, %s223
    %p225 = scmp.eq.s32.totalorder %s21, 0
    %p226 = por %p224, %p225
    %s227 = ssub.s32 %s15, %s22
    %p228 = scmp.eq.s32.totalorder %s227, 0
    %s230 = sadd.s32 %s229, 1
    %s231 = scalar_select %p228, %s229, %s230
    %p234 = pneg %p228
    %p235 = scmp.eq.s32.totalorder %s15, 1
    %p236 = por %p234, %p235
    %p237 = scmp.ne.s32.totalorder %s229, %s232
    %p238 = scmp.eq.s32.totalorder %s15, 0
    %p239 = por %p237, %p238
    %p240 = scmp.ne.s32.totalorder %s229, %s232
    %p241 = scmp.eq.s32.totalorder %s20, 1
    %p242 = por %p240, %p241
    %p243 = scmp.ne.s32.totalorder %s232, %s233
    %p244 = scmp.eq.s32.totalorder %s20, 0
    %p245 = por %p243, %p244
    %p246 = scmp.ne.s32.totalorder %s232, %s233
    %p247 = scmp.eq.s32.totalorder %s21, 1
    %p248 = por %p246, %p247
    %p250 = scmp.ne.s32.totalorder %s233, %s249
    %p251 = scmp.eq.s32.totalorder %s21, 0
    %p252 = por %p250, %p251
    %p253 = scmp.le.s32.totalorder 1, %s15
    %p254 = scmp.lt.s32.totalorder %s15, 3
    %p255 = pnand %p253, %p254
    %p256 = pneg %p255
    // Predicated region
    $region9: #{forward.103} parent=5 // pred_check
      _
    $region10: #{forward.103} parent=5 // pred_check_branch
      %258 = sbr.rel (%p255) target = $region12
    $region11: #{forward.103} parent=5 // pred_region
      %s259 = ssub.s32 %s15, 1
      // Predicated region
      $region13: #{forward.103} parent=11 // pred_check
        %p260 = pneg %p88
      $region14: #{forward.103} parent=11 // pred_check_branch
        %262 = sbr.rel (%p260) target = $region16
      $region15: #{forward.103} parent=11 // pred_region
        _
      $region16: #{forward.103} parent=11 // pred_fallthru
        _
      // Predicated region
      $region17: #{forward.103} parent=11 // pred_check
        %p263 = pneg %p109
      $region18: #{forward.103} parent=11 // pred_check_branch
        %265 = sbr.rel (%p263) target = $region20
      $region19: #{forward.103} parent=11 // pred_region
        _
      $region20: #{forward.103} parent=11 // pred_fallthru
        _
      // Predicated region
      $region21: #{forward.103} parent=11 // pred_check
        %p266 = pneg %p130
      $region22: #{forward.103} parent=11 // pred_check_branch
        %268 = sbr.rel (%p266) target = $region24
      $region23: #{forward.103} parent=11 // pred_region
        _
      $region24: #{forward.103} parent=11 // pred_fallthru
        _
      // Predicated region
      $region25: #{forward.103} parent=11 // pred_check
        %p269 = pneg %p151
      $region26: #{forward.103} parent=11 // pred_check_branch
        %271 = sbr.rel (%p269) target = $region28
      $region27: #{forward.103} parent=11 // pred_region
        _
      $region28: #{forward.103} parent=11 // pred_fallthru
        _
      // Predicated region
      $region29: #{forward.103} parent=11 // pred_check
        %p272 = pneg %p198
      $region30: #{forward.103} parent=11 // pred_check_branch
        %274 = sbr.rel (%p272) target = $region32
      $region31: #{forward.103} parent=11 // pred_region
        _
      $region32: #{forward.103} parent=11 // pred_fallthru
        _
      // Predicated region
      $region33: #{forward.103} parent=11 // pred_check
        %p275 = pneg %p219
      $region34: #{forward.103} parent=11 // pred_check_branch
        %277 = sbr.rel (%p275) target = $region36
      $region35: #{forward.103} parent=11 // pred_region
        _
      $region36: #{forward.103} parent=11 // pred_fallthru
        _
    $region12: #{forward.103} parent=5 // pred_fallthru
      _
    %p278 = scmp.lt.s32.totalorder %s15, 2
    // Predicated region
    $region37: #{forward.103} parent=5 // pred_check
      %p279 = pneg %p278
    $region38: #{forward.103} parent=5 // pred_check_branch
      %281 = sbr.rel (%p279) target = $region40
    $region39: #{forward.103} parent=5 // pred_region
      // Predicated region
      $region41: #{forward.103} parent=39 // pred_check
        %p282 = pneg %p35
      $region42: #{forward.103} parent=39 // pred_check_branch
        %284 = sbr.rel (%p282) target = $region44
      $region43: #{forward.103} parent=39 // pred_region
        %p285 = scmp.lt.s32.totalorder %s15, 1
        %s286 = scalar_select %p285, %s15, 1
        %s287 = smul.addr %s286, 8
        %s288 = scalar_lea.vmem %s0, %s287
      $region44: #{forward.103} parent=39 // pred_fallthru
        _
      // Predicated region
      $region45: #{forward.103} parent=39 // pred_check
        %p289 = pneg %p61
      $region46: #{forward.103} parent=39 // pred_check_branch
        %291 = sbr.rel (%p289) target = $region48
      $region47: #{forward.103} parent=39 // pred_region
        %p292 = scmp.lt.s32.totalorder %s15, 1
        %s293 = scalar_select %p292, %s15, 1
        %s294 = smul.addr %s293, 8
        %s295 = scalar_lea.vmem %s1, %s294
      $region48: #{forward.103} parent=39 // pred_fallthru
        _
      // Predicated region
      $region49: #{forward.103} parent=39 // pred_check
        %p296 = pneg %p171
      $region50: #{forward.103} parent=39 // pred_check_branch
        %298 = sbr.rel (%p296) target = $region52
      $region51: #{forward.103} parent=39 // pred_region
        %p299 = scmp.lt.s32.totalorder %s15, 1
        %s300 = scalar_select %p299, %s15, 1
        %s301 = scalar_lea.vmem %s6, %s300
      $region52: #{forward.103} parent=39 // pred_fallthru
        _
    $region40: #{forward.103} parent=5 // pred_fallthru
      _
    %p302 = scmp.le.s32.totalorder 1, %s15
    %p303 = scmp.lt.s32.totalorder %s15, 3
    %p304 = pnand %p302, %p303
    %p305 = pneg %p304
    // Predicated region
    $region53: #{forward.103} parent=5 // pred_check
      _
    $region54: #{forward.103} parent=5 // pred_check_branch
      %307 = sbr.rel (%p304) target = $region56
    $region55: #{forward.103} parent=5 // pred_region
      %s308 = ssub.s32 %s15, 1
      %p309 = scmp.lt.s32.totalorder %s20, 1
      %s310 = scalar_select %p309, %s20, 1
      %s311 = smul.addr %s310, 8
      %s312 = scalar_lea.vmem %s0, %s311
      %p313 = pneg %p41
      %p314 = pneg %p38
      %p315 = scmp.lt.s32.totalorder %s20, 1
      %s316 = scalar_select %p315, %s20, 1
      %s317 = smul.addr %s316, 8
      %s318 = scalar_lea.vmem %s1, %s317
      %p319 = pneg %p67
      %p320 = pneg %p64
      %p321 = pneg %p88
      %p322 = pneg %p85
      %p323 = pneg %p109
      %p324 = pneg %p106
      %p325 = pneg %p130
      %p326 = pneg %p127
      %p327 = pneg %p151
      %p328 = pneg %p148
      %p329 = scmp.lt.s32.totalorder %s20, 1
      %s330 = scalar_select %p329, %s20, 1
      %s331 = scalar_lea.vmem %s6, %s330
      %p332 = pneg %p177
      %p333 = pneg %p174
      %p334 = pneg %p198
      %p335 = pneg %p195
      %p336 = pneg %p219
      %p337 = pneg %p216
      %p338 = pneg %p245
      %p339 = pneg %p242
      %p340 = scmp.lt.s32.totalorder %s20, 1
      %s341 = scalar_select %p340, %s20, 1
      %s342 = smul.addr %s341, 8
      %s343 = scalar_lea.vmem %s9, %s342
      %p344 = scmp.lt.s32.totalorder %s20, 1
      %s345 = scalar_select %p344, %s20, 1
      %s346 = smul.addr %s345, 8
      %s347 = scalar_lea.vmem %s0, %s346
      %p348 = scmp.lt.s32.totalorder %s20, 1
      %s349 = scalar_select %p348, %s20, 1
      %s350 = smul.addr %s349, 8
      %s351 = scalar_lea.vmem %s1, %s350
      %p352 = scmp.lt.s32.totalorder %s20, 1
      %s353 = scalar_select %p352, %s20, 1
      %s354 = scalar_lea.vmem %s6, %s353
      %p355 = scmp.lt.s32.totalorder %s20, 1
      %s356 = scalar_select %p355, %s20, 1
      %s357 = smul.addr %s356, 8
      %s358 = scalar_lea.vmem %s9, %s357
      %v360 = vld [vmem:[%s347] sm:$0xff]
      %v361 = vpack.c.bf16 %v360, %v360
      %v362 = vld [vmem:[%s2] sm:$0xff]
      %v363 = vld [vmem:[%s2 + $0x8] sm:$0xff]
      %v364 = vld [vmem:[%s2 + $0x10] sm:$0xff]
      %v365 = vld [vmem:[%s2 + $0x18] sm:$0xff]
      %v366 = vpack.c.bf16 %v363, %v362
      %v367 = vpack.c.bf16 %v365, %v364
      %v368 = vld [vmem:[%s3] sm:$0x1]
      %v370 = vlaneseq
      %v371 = vshrl.u32 %v370, 7
      %v372 = vsub.s32 0, %v371
      %v373 = vrot.slane %v368, %v372
      %vm375 = vcmask 261120
      %v377 = vsel %vm375, %v361, 0
      %379 = vmatprep.subr.bf16.mxu0 0
      %380 = vmatpush1.bf16.msra.mxu0 %v366
      %381 = vmatprep.subr.bf16.mxu0 0
      %382 = vmatpush1.bf16.msra.mxu0 %v367
      %383 = vmatprep.subr.bf16.mxu0 0
      %384 = vmatpush1.bf16.msra.mxu0 0
      %385 = vmatprep.subr.bf16.mxu0 0
      %386 = vmatpush1.bf16.msra.mxu0 0
      %387 = vmatprep.subr.bf16.mxu0 0
      %388 = vmatpush1.bf16.msra.mxu0 0
      %389 = vmatprep.subr.bf16.mxu0 0
      %390 = vmatpush1.bf16.msra.mxu0 0
      %391 = vmatprep.subr.bf16.mxu0 0
      %392 = vmatpush1.bf16.msra.mxu0 0
      %393 = vmatprep.subr.bf16.mxu0 0
      %394 = vmatpush1.bf16.msra.mxu0 0
      %395 = vmatprep.subr.bf16.mxu0 0
      %396 = vmatpush1.bf16.msra.mxu0 0
      %397 = vmatprep.subr.bf16.mxu0 0
      %398 = vmatpush1.bf16.msra.mxu0 0
      %399 = vmatprep.subr.bf16.mxu0 0
      %400 = vmatpush1.bf16.msra.mxu0 0
      %401 = vmatprep.subr.bf16.mxu0 0
      %402 = vmatpush1.bf16.msra.mxu0 0
      %403 = vmatprep.subr.bf16.mxu0 0
      %404 = vmatpush1.bf16.msra.mxu0 0
      %405 = vmatprep.subr.bf16.mxu0 0
      %406 = vmatpush1.bf16.msra.mxu0 0
      %407 = vmatprep.subr.bf16.mxu0 0
      %408 = vmatpush1.bf16.msra.mxu0 0
      %409 = vmatprep.subr.bf16.mxu0 0
      %410 = vmatpush1.bf16.msra.mxu0 0
      %411 = vmatprep.mubr.bf16.mxu0 0
      %412 = vmatmul.mubr.bf16.gmra.mrb[0].mxu0 %v377
      %v413 = vpop.f32.mrb[0].mxu0
      %v414 = vadd.f32 %v373, %v413
      %v415 = vpop.f32.mrb[0].mxu0
      %v416 = vpop.f32.mrb[0].mxu0
      %v417 = vpop.f32.mrb[0].mxu0
      %418 = vdwg.mxu0
      %v419 = vld [vmem:[%s354] sm:$0x1]
      %v420 = vlaneseq
      %v421 = vshrl.u32 %v420, 7
      %v422 = vlaneseq
      %v423 = vand.u32 %v422, 127
      %vm424 = vcmp.gt.s32.totalorder %v423, %v421
      %v425 = vsel %vm424, -1e+09, 0.0
      %v427 = vlaneseq
      %v428 = vshrl.u32 %v427, 7
      %v429 = vsub.s32 0, %v428
      %v430 = vrot.slane %v419, %v429
      %v432 = vadd.f32 %v430, %v425
      %v433 = vpack.c.bf16 %v414, %v414
      %435 = vrot.lane.b32.xlu0 %v433, 96
      %v436 = vpop.permute.xlu0 %435
      %vm437 = vcmask 64512
      %v439 = vsel %vm437, %v433, 0
      %v442 = vsel %vm437, %v436, 0
      %444 = vmatprep.subr.bf16.mxu0 0
      %445 = vmatpush1.bf16.xpose.msra.mxu0 %v442
      %446 = vmatprep.subr.bf16.mxu0 0
      %447 = vmatpush1.bf16.xpose.msra.mxu0 0
      %448 = vmatprep.subr.bf16.mxu0 0
      %449 = vmatpush1.bf16.xpose.msra.mxu0 0
      %450 = vmatprep.subr.bf16.mxu0 0
      %451 = vmatpush1.bf16.xpose.msra.mxu0 0
      %452 = vmatprep.subr.bf16.mxu0 0
      %453 = vmatpush1.bf16.xpose.msra.mxu0 0
      %454 = vmatprep.subr.bf16.mxu0 0
      %455 = vmatpush1.bf16.xpose.msra.mxu0 0
      %456 = vmatprep.subr.bf16.mxu0 0
      %457 = vmatpush1.bf16.xpose.msra.mxu0 0
      %458 = vmatprep.subr.bf16.mxu0 0
      %459 = vmatpush1.bf16.xpose.msra.mxu0 0
      %460 = vmatprep.subr.bf16.mxu0 0
      %461 = vmatpush1.bf16.xpose.msra.mxu0 0
      %462 = vmatprep.subr.bf16.mxu0 0
      %463 = vmatpush1.bf16.xpose.msra.mxu0 0
      %464 = vmatprep.subr.bf16.mxu0 0
      %465 = vmatpush1.bf16.xpose.msra.mxu0 0
      %466 = vmatprep.subr.bf16.mxu0 0
      %467 = vmatpush1.bf16.xpose.msra.mxu0 0
      %468 = vmatprep.subr.bf16.mxu0 0
      %469 = vmatpush1.bf16.xpose.msra.mxu0 0
      %470 = vmatprep.subr.bf16.mxu0 0
      %471 = vmatpush1.bf16.xpose.msra.mxu0 0
      %472 = vmatprep.subr.bf16.mxu0 0
      %473 = vmatpush1.bf16.xpose.msra.mxu0 0
      %474 = vmatprep.subr.bf16.mxu0 0
      %475 = vmatpush1.bf16.xpose.msra.mxu0 0
      %476 = vmatprep.mubr.bf16.mxu0 0
      %477 = vmatmul.mubr.bf16.gmra.mrb[0].mxu0 %v439
      %v478 = vpop.f32.mrb[0].mxu0
      %v479 = vadd.f32 0.0, %v478
      %v480 = vpop.f32.mrb[0].mxu0
      %v481 = vpop.f32.mrb[0].mxu0
      %v482 = vpop.f32.mrb[0].mxu0
      %483 = vdwg.mxu0
      %v484 = vmul.f32 %v479, 0.35355338
      %v485 = vadd.f32 %v484, %v432
      %v486 = vsel %vm437, %v485, -inf
      %487 = vmax.xlane.f32.xlu0 %v486
      %v488 = vpop.xlane.xlu0 %487
      %v489 = vsub.f32 %v485, %v488
      %v490 = vmul.f32 %v489, 1.442695
      %v491 = vpow.pop %v490
      %v492 = vsel %vm437, %v491, 0.0
      %493 = vadd.xlane.f32.xlu0 %v492
      %v494 = vpop.xlane.xlu0 %493
      %v495 = vrcp.pop %v494
      %v496 = vmul.f32 %v491, %v495
      %v497 = vpack.c.bf16 %v496, %v496
      %498 = vrot.lane.b32.xlu0 %v433, 64
      %v499 = vpop.permute.xlu0 %498
      %v501 = vsel %vm437, %v497, 0
      %vm503 = vcmask 1043456
      %v505 = vsel %vm503, %v499, 0
      %507 = vmatprep.subr.bf16.mxu0 0
      %508 = vmatpush1.bf16.msra.mxu0 %v505
      %509 = vmatprep.subr.bf16.mxu0 0
      %510 = vmatpush1.bf16.msra.mxu0 0
      %511 = vmatprep.subr.bf16.mxu0 0
      %512 = vmatpush1.bf16.msra.mxu0 0
      %513 = vmatprep.subr.bf16.mxu0 0
      %514 = vmatpush1.bf16.msra.mxu0 0
      %515 = vmatprep.subr.bf16.mxu0 0
      %516 = vmatpush1.bf16.msra.mxu0 0
      %517 = vmatprep.subr.bf16.mxu0 0
      %518 = vmatpush1.bf16.msra.mxu0 0
      %519 = vmatprep.subr.bf16.mxu0 0
      %520 = vmatpush1.bf16.msra.mxu0 0
      %521 = vmatprep.subr.bf16.mxu0 0
      %522 = vmatpush1.bf16.msra.mxu0 0
      %523 = vmatprep.subr.bf16.mxu0 0
      %524 = vmatpush1.bf16.msra.mxu0 0
      %525 = vmatprep.subr.bf16.mxu0 0
      %526 = vmatpush1.bf16.msra.mxu0 0
      %527 = vmatprep.subr.bf16.mxu0 0
      %528 = vmatpush1.bf16.msra.mxu0 0
      %529 = vmatprep.subr.bf16.mxu0 0
      %530 = vmatpush1.bf16.msra.mxu0 0
      %531 = vmatprep.subr.bf16.mxu0 0
      %532 = vmatpush1.bf16.msra.mxu0 0
      %533 = vmatprep.subr.bf16.mxu0 0
      %534 = vmatpush1.bf16.msra.mxu0 0
      %535 = vmatprep.subr.bf16.mxu0 0
      %536 = vmatpush1.bf16.msra.mxu0 0
      %537 = vmatprep.subr.bf16.mxu0 0
      %538 = vmatpush1.bf16.msra.mxu0 0
      %539 = vmatprep.mubr.bf16.mxu0 0
      %540 = vmatmul.mubr.bf16.gmra.mrb[0].mxu0 %v501
      %v541 = vpop.f32.mrb[0].mxu0
      %v542 = vadd.f32 0.0, %v541
      %v543 = vpop.f32.mrb[0].mxu0
      %v544 = vpop.f32.mrb[0].mxu0
      %v545 = vpop.f32.mrb[0].mxu0
      %546 = vdwg.mxu0
      %547 = vrot.lane.b32.xlu0 %v433, 120
      %v548 = vpop.permute.xlu0 %547
      %549 = vrot.lane.b32.xlu0 %v433, 88
      %v550 = vpop.permute.xlu0 %549
      %v552 = vsel %vm437, %v548, 0
      %v555 = vsel %vm437, %v550, 0
      %557 = vmatprep.subr.bf16.mxu0 0
      %558 = vmatpush1.bf16.xpose.msra.mxu0 %v555
      %559 = vmatprep.subr.bf16.mxu0 0
      %560 = vmatpush1.bf16.xpose.msra.mxu0 0
      %561 = vmatprep.subr.bf16.mxu0 0
      %562 = vmatpush1.bf16.xpose.msra.mxu0 0
      %563 = vmatprep.subr.bf16.mxu0 0
      %564 = vmatpush1.bf16.xpose.msra.mxu0 0
      %565 = vmatprep.subr.bf16.mxu0 0
      %566 = vmatpush1.bf16.xpose.msra.mxu0 0
      %567 = vmatprep.subr.bf16.mxu0 0
      %568 = vmatpush1.bf16.xpose.msra.mxu0 0
      %569 = vmatprep.subr.bf16.mxu0 0
      %570 = vmatpush1.bf16.xpose.msra.mxu0 0
      %571 = vmatprep.subr.bf16.mxu0 0
      %572 = vmatpush1.bf16.xpose.msra.mxu0 0
      %573 = vmatprep.subr.bf16.mxu0 0
      %574 = vmatpush1.bf16.xpose.msra.mxu0 0
      %575 = vmatprep.subr.bf16.mxu0 0
      %576 = vmatpush1.bf16.xpose.msra.mxu0 0
      %577 = vmatprep.subr.bf16.mxu0 0
      %578 = vmatpush1.bf16.xpose.msra.mxu0 0
      %579 = vmatprep.subr.bf16.mxu0 0
      %580 = vmatpush1.bf16.xpose.msra.mxu0 0
      %581 = vmatprep.subr.bf16.mxu0 0
      %582 = vmatpush1.bf16.xpose.msra.mxu0 0
      %583 = vmatprep.subr.bf16.mxu0 0
      %584 = vmatpush1.bf16.xpose.msra.mxu0 0
      %585 = vmatprep.subr.bf16.mxu0 0
      %586 = vmatpush1.bf16.xpose.msra.mxu0 0
      %587 = vmatprep.subr.bf16.mxu0 0
      %588 = vmatpush1.bf16.xpose.msra.mxu0 0
      %589 = vmatprep.mubr.bf16.mxu0 0
      %590 = vmatmul.mubr.bf16.gmra.mrb[0].mxu0 %v552
      %v591 = vpop.f32.mrb[0].mxu0
      %v592 = vadd.f32 0.0, %v591
      %v593 = vpop.f32.mrb[0].mxu0
      %v594 = vpop.f32.mrb[0].mxu0
      %v595 = vpop.f32.mrb[0].mxu0
      %596 = vdwg.mxu0
      %v597 = vmul.f32 %v592, 0.35355338
      %v598 = vadd.f32 %v597, %v432
      %v599 = vsel %vm437, %v598, -inf
      %600 = vmax.xlane.f32.xlu0 %v599
      %v601 = vpop.xlane.xlu0 %600
      %v602 = vsub.f32 %v598, %v601
      %v603 = vmul.f32 %v602, 1.442695
      %v604 = vpow.pop %v603
      %v605 = vsel %vm437, %v604, 0.0
      %606 = vadd.xlane.f32.xlu0 %v605
      %v607 = vpop.xlane.xlu0 %606
      %v608 = vrcp.pop %v607
      %v609 = vmul.f32 %v604, %v608
      %v610 = vpack.c.bf16 %v609, %v609
      %611 = vrot.lane.b32.xlu0 %v433, 56
      %v612 = vpop.permute.xlu0 %611
      %v614 = vsel %vm437, %v610, 0
      %v617 = vsel %vm503, %v612, 0
      %619 = vmatprep.subr.bf16.mxu0 0
      %620 = vmatpush1.bf16.msra.mxu0 %v617
      %621 = vmatprep.subr.bf16.mxu0 0
      %622 = vmatpush1.bf16.msra.mxu0 0
      %623 = vmatprep.subr.bf16.mxu0 0
      %624 = vmatpush1.bf16.msra.mxu0 0
      %625 = vmatprep.subr.bf16.mxu0 0
      %626 = vmatpush1.bf16.msra.mxu0 0
      %627 = vmatprep.subr.bf16.mxu0 0
      %628 = vmatpush1.bf16.msra.mxu0 0
      %629 = vmatprep.subr.bf16.mxu0 0
      %630 = vmatpush1.bf16.msra.mxu0 0
      %631 = vmatprep.subr.bf16.mxu0 0
      %632 = vmatpush1.bf16.msra.mxu0 0
      %633 = vmatprep.subr.bf16.mxu0 0
      %634 = vmatpush1.bf16.msra.mxu0 0
      %635 = vmatprep.subr.bf16.mxu0 0
      %636 = vmatpush1.bf16.msra.mxu0 0
      %637 = vmatprep.subr.bf16.mxu0 0
      %638 = vmatpush1.bf16.msra.mxu0 0
      %639 = vmatprep.subr.bf16.mxu0 0
      %640 = vmatpush1.bf16.msra.mxu0 0
      %641 = vmatprep.subr.bf16.mxu0 0
      %642 = vmatpush1.bf16.msra.mxu0 0
      %643 = vmatprep.subr.bf16.mxu0 0
      %644 = vmatpush1.bf16.msra.mxu0 0
      %645 = vmatprep.subr.bf16.mxu0 0
      %646 = vmatpush1.bf16.msra.mxu0 0
      %647 = vmatprep.subr.bf16.mxu0 0
      %648 = vmatpush1.bf16.msra.mxu0 0
      %649 = vmatprep.subr.bf16.mxu0 0
      %650 = vmatpush1.bf16.msra.mxu0 0
      %651 = vmatprep.mubr.bf16.mxu0 0
      %652 = vmatmul.mubr.bf16.gmra.mrb[0].mxu0 %v614
      %v653 = vpop.f32.mrb[0].mxu0
      %v654 = vadd.f32 0.0, %v653
      %v655 = vpop.f32.mrb[0].mxu0
      %v656 = vpop.f32.mrb[0].mxu0
      %v657 = vpop.f32.mrb[0].mxu0
      %658 = vdwg.mxu0
      %659 = vrot.lane.b32.xlu0 %v433, 112
      %v660 = vpop.permute.xlu0 %659
      %661 = vrot.lane.b32.xlu0 %v433, 80
      %v662 = vpop.permute.xlu0 %661
      %v664 = vsel %vm437, %v660, 0
      %v667 = vsel %vm437, %v662, 0
      %669 = vmatprep.subr.bf16.mxu0 0
      %670 = vmatpush1.bf16.xpose.msra.mxu0 %v667
      %671 = vmatprep.subr.bf16.mxu0 0
      %672 = vmatpush1.bf16.xpose.msra.mxu0 0
      %673 = vmatprep.subr.bf16.mxu0 0
      %674 = vmatpush1.bf16.xpose.msra.mxu0 0
      %675 = vmatprep.subr.bf16.mxu0 0
      %676 = vmatpush1.bf16.xpose.msra.mxu0 0
      %677 = vmatprep.subr.bf16.mxu0 0
      %678 = vmatpush1.bf16.xpose.msra.mxu0 0
      %679 = vmatprep.subr.bf16.mxu0 0
      %680 = vmatpush1.bf16.xpose.msra.mxu0 0
      %681 = vmatprep.subr.bf16.mxu0 0
      %682 = vmatpush1.bf16.xpose.msra.mxu0 0
      %683 = vmatprep.subr.bf16.mxu0 0
      %684 = vmatpush1.bf16.xpose.msra.mxu0 0
      %685 = vmatprep.subr.bf16.mxu0 0
      %686 = vmatpush1.bf16.xpose.msra.mxu0 0
      %687 = vmatprep.subr.bf16.mxu0 0
      %688 = vmatpush1.bf16.xpose.msra.mxu0 0
      %689 = vmatprep.subr.bf16.mxu0 0
      %690 = vmatpush1.bf16.xpose.msra.mxu0 0
      %691 = vmatprep.subr.bf16.mxu0 0
      %692 = vmatpush1.bf16.xpose.msra.mxu0 0
      %693 = vmatprep.subr.bf16.mxu0 0
      %694 = vmatpush1.bf16.xpose.msra.mxu0 0
      %695 = vmatprep.subr.bf16.mxu0 0
      %696 = vmatpush1.bf16.xpose.msra.mxu0 0
      %697 = vmatprep.subr.bf16.mxu0 0
      %698 = vmatpush1.bf16.xpose.msra.mxu0 0
      %699 = vmatprep.subr.bf16.mxu0 0
      %700 = vmatpush1.bf16.xpose.msra.mxu0 0
      %701 = vmatprep.mubr.bf16.mxu0 0
      %702 = vmatmul.mubr.bf16.gmra.mrb[0].mxu0 %v664
      %v703 = vpop.f32.mrb[0].mxu0
      %v704 = vadd.f32 0.0, %v703
      %v705 = vpop.f32.mrb[0].mxu0
      %v706 = vpop.f32.mrb[0].mxu0
      %v707 = vpop.f32.mrb[0].mxu0
      %708 = vdwg.mxu0
      %v709 = vmul.f32 %v704, 0.35355338
      %v710 = vadd.f32 %v709, %v432
      %v711 = vsel %vm437, %v710, -inf
      %712 = vmax.xlane.f32.xlu0 %v711
      %v713 = vpop.xlane.xlu0 %712
      %v714 = vsub.f32 %v710, %v713
      %v715 = vmul.f32 %v714, 1.442695
      %v716 = vpow.pop %v715
      %v717 = vsel %vm437, %v716, 0.0
      %718 = vadd.xlane.f32.xlu0 %v717
      %v719 = vpop.xlane.xlu0 %718
      %v720 = vrcp.pop %v719
      %v721 = vmul.f32 %v716, %v720
      %v722 = vpack.c.bf16 %v721, %v721
      %723 = vrot.lane.b32.xlu0 %v433, 48
      %v724 = vpop.permute.xlu0 %723
      %v726 = vsel %vm437, %v722, 0
      %v729 = vsel %vm503, %v724, 0
      %731 = vmatprep.subr.bf16.mxu0 0
      %732 = vmatpush1.bf16.msra.mxu0 %v729
      %733 = vmatprep.subr.bf16.mxu0 0
      %734 = vmatpush1.bf16.msra.mxu0 0
      %735 = vmatprep.subr.bf16.mxu0 0
      %736 = vmatpush1.bf16.msra.mxu0 0
      %737 = vmatprep.subr.bf16.mxu0 0
      %738 = vmatpush1.bf16.msra.mxu0 0
      %739 = vmatprep.subr.bf16.mxu0 0
      %740 = vmatpush1.bf16.msra.mxu0 0
      %741 = vmatprep.subr.bf16.mxu0 0
      %742 = vmatpush1.bf16.msra.mxu0 0
      %743 = vmatprep.subr.bf16.mxu0 0
      %744 = vmatpush1.bf16.msra.mxu0 0
      %745 = vmatprep.subr.bf16.mxu0 0
      %746 = vmatpush1.bf16.msra.mxu0 0
      %747 = vmatprep.subr.bf16.mxu0 0
      %748 = vmatpush1.bf16.msra.mxu0 0
      %749 = vmatprep.subr.bf16.mxu0 0
      %750 = vmatpush1.bf16.msra.mxu0 0
      %751 = vmatprep.subr.bf16.mxu0 0
      %752 = vmatpush1.bf16.msra.mxu0 0
      %753 = vmatprep.subr.bf16.mxu0 0
      %754 = vmatpush1.bf16.msra.mxu0 0
      %755 = vmatprep.subr.bf16.mxu0 0
      %756 = vmatpush1.bf16.msra.mxu0 0
      %757 = vmatprep.subr.bf16.mxu0 0
      %758 = vmatpush1.bf16.msra.mxu0 0
      %759 = vmatprep.subr.bf16.mxu0 0
      %760 = vmatpush1.bf16.msra.mxu0 0
      %761 = vmatprep.subr.bf16.mxu0 0
      %762 = vmatpush1.bf16.msra.mxu0 0
      %763 = vmatprep.mubr.bf16.mxu0 0
      %764 = vmatmul.mubr.bf16.gmra.mrb[0].mxu0 %v726
      %v765 = vpop.f32.mrb[0].mxu0
      %v766 = vadd.f32 0.0, %v765
      %v767 = vpop.f32.mrb[0].mxu0
      %v768 = vpop.f32.mrb[0].mxu0
      %v769 = vpop.f32.mrb[0].mxu0
      %770 = vdwg.mxu0
      %771 = vrot.lane.b32.xlu0 %v433, 104
      %v772 = vpop.permute.xlu0 %771
      %773 = vrot.lane.b32.xlu0 %v433, 72
      %v774 = vpop.permute.xlu0 %773
      %v776 = vsel %vm437, %v772, 0
      %v779 = vsel %vm437, %v774, 0
      %781 = vmatprep.subr.bf16.mxu0 0
      %782 = vmatpush1.bf16.xpose.msra.mxu0 %v779
      %783 = vmatprep.subr.bf16.mxu0 0
      %784 = vmatpush1.bf16.xpose.msra.mxu0 0
      %785 = vmatprep.subr.bf16.mxu0 0
      %786 = vmatpush1.bf16.xpose.msra.mxu0 0
      %787 = vmatprep.subr.bf16.mxu0 0
      %788 = vmatpush1.bf16.xpose.msra.mxu0 0
      %789 = vmatprep.subr.bf16.mxu0 0
      %790 = vmatpush1.bf16.xpose.msra.mxu0 0
      %791 = vmatprep.subr.bf16.mxu0 0
      %792 = vmatpush1.bf16.xpose.msra.mxu0 0
      %793 = vmatprep.subr.bf16.mxu0 0
      %794 = vmatpush1.bf16.xpose.msra.mxu0 0
      %795 = vmatprep.subr.bf16.mxu0 0
      %796 = vmatpush1.bf16.xpose.msra.mxu0 0
      %797 = vmatprep.subr.bf16.mxu0 0
      %798 = vmatpush1.bf16.xpose.msra.mxu0 0
      %799 = vmatprep.subr.bf16.mxu0 0
      %800 = vmatpush1.bf16.xpose.msra.mxu0 0
      %801 = vmatprep.subr.bf16.mxu0 0
      %802 = vmatpush1.bf16.xpose.msra.mxu0 0
      %803 = vmatprep.subr.bf16.mxu0 0
      %804 = vmatpush1.bf16.xpose.msra.mxu0 0
      %805 = vmatprep.subr.bf16.mxu0 0
      %806 = vmatpush1.bf16.xpose.msra.mxu0 0
      %807 = vmatprep.subr.bf16.mxu0 0
      %808 = vmatpush1.bf16.xpose.msra.mxu0 0
      %809 = vmatprep.subr.bf16.mxu0 0
      %810 = vmatpush1.bf16.xpose.msra.mxu0 0
      %811 = vmatprep.subr.bf16.mxu0 0
      %812 = vmatpush1.bf16.xpose.msra.mxu0 0
      %813 = vmatprep.mubr.bf16.mxu0 0
      %814 = vmatmul.mubr.bf16.gmra.mrb[0].mxu0 %v776
      %v815 = vpop.f32.mrb[0].mxu0
      %v816 = vadd.f32 0.0, %v815
      %v817 = vpop.f32.mrb[0].mxu0
      %v818 = vpop.f32.mrb[0].mxu0
      %v819 = vpop.f32.mrb[0].mxu0
      %820 = vdwg.mxu0
      %v821 = vmul.f32 %v816, 0.35355338
      %v822 = vadd.f32 %v821, %v432
      %v823 = vsel %vm437, %v822, -inf
      %824 = vmax.xlane.f32.xlu0 %v823
      %v825 = vpop.xlane.xlu0 %824
      %v826 = vsub.f32 %v822, %v825
      %v827 = vmul.f32 %v826, 1.442695
      %v828 = vpow.pop %v827
      %v829 = vsel %vm437, %v828, 0.0
      %830 = vadd.xlane.f32.xlu0 %v829
      %v831 = vpop.xlane.xlu0 %830
      %v832 = vrcp.pop %v831
      %v833 = vmul.f32 %v828, %v832
      %v834 = vpack.c.bf16 %v833, %v833
      %835 = vrot.lane.b32.xlu0 %v433, 40
      %v836 = vpop.permute.xlu0 %835
      %v838 = vsel %vm437, %v834, 0
      %v841 = vsel %vm503, %v836, 0
      %843 = vmatprep.subr.bf16.mxu0 0
      %844 = vmatpush1.bf16.msra.mxu0 %v841
      %845 = vmatprep.subr.bf16.mxu0 0
      %846 = vmatpush1.bf16.msra.mxu0 0
      %847 = vmatprep.subr.bf16.mxu0 0
      %848 = vmatpush1.bf16.msra.mxu0 0
      %849 = vmatprep.subr.bf16.mxu0 0
      %850 = vmatpush1.bf16.msra.mxu0 0
      %851 = vmatprep.subr.bf16.mxu0 0
      %852 = vmatpush1.bf16.msra.mxu0 0
      %853 = vmatprep.subr.bf16.mxu0 0
      %854 = vmatpush1.bf16.msra.mxu0 0
      %855 = vmatprep.subr.bf16.mxu0 0
      %856 = vmatpush1.bf16.msra.mxu0 0
      %857 = vmatprep.subr.bf16.mxu0 0
      %858 = vmatpush1.bf16.msra.mxu0 0
      %859 = vmatprep.subr.bf16.mxu0 0
      %860 = vmatpush1.bf16.msra.mxu0 0
      %861 = vmatprep.subr.bf16.mxu0 0
      %862 = vmatpush1.bf16.msra.mxu0 0
      %863 = vmatprep.subr.bf16.mxu0 0
      %864 = vmatpush1.bf16.msra.mxu0 0
      %865 = vmatprep.subr.bf16.mxu0 0
      %866 = vmatpush1.bf16.msra.mxu0 0
      %867 = vmatprep.subr.bf16.mxu0 0
      %868 = vmatpush1.bf16.msra.mxu0 0
      %869 = vmatprep.subr.bf16.mxu0 0
      %870 = vmatpush1.bf16.msra.mxu0 0
      %871 = vmatprep.subr.bf16.mxu0 0
      %872 = vmatpush1.bf16.msra.mxu0 0
      %873 = vmatprep.subr.bf16.mxu0 0
      %874 = vmatpush1.bf16.msra.mxu0 0
      %875 = vmatprep.mubr.bf16.mxu0 0
      %876 = vmatmul.mubr.bf16.gmra.mrb[0].mxu0 %v838
      %v877 = vpop.f32.mrb[0].mxu0
      %v878 = vadd.f32 0.0, %v877
      %v879 = vpop.f32.mrb[0].mxu0
      %v880 = vpop.f32.mrb[0].mxu0
      %v881 = vpop.f32.mrb[0].mxu0
      %882 = vdwg.mxu0
      %884 = vrot.lane.b32.xlu0 %v654, 8
      %v885 = vpop.permute.xlu0 %884
      %888 = vrot.lane.b32.xlu0 %v766, 16
      %v889 = vpop.permute.xlu0 %888
      %892 = vrot.lane.b32.xlu0 %v878, 24
      %v893 = vpop.permute.xlu0 %892
      %v895 = vsel %vm437, %v542, %v885
      %vm896 = vcmask 130048
      %v897 = vsel %vm896, %v895, %v889
      %vm898 = vcmask 195584
      %v899 = vsel %vm898, %v897, %v893
      %v900 = vpack.c.bf16 %v899, %v899
      %v901 = vld [vmem:[%s4] sm:$0xff]
      %v902 = vld [vmem:[%s4 + $0x8] sm:$0xff]
      %v903 = vld [vmem:[%s4 + $0x10] sm:$0xff]
      %v904 = vld [vmem:[%s4 + $0x18] sm:$0xff]
      %v905 = vpack.c.bf16 %v902, %v901
      %v906 = vpack.c.bf16 %v904, %v903
      %v907 = vld [vmem:[%s5] sm:$0x1]
      %v909 = vlaneseq
      %v910 = vshrl.u32 %v909, 7
      %v911 = vsub.s32 0, %v910
      %v912 = vrot.slane %v907, %v911
      %v915 = vsel %vm375, %v900, 0
      %917 = vmatprep.subr.bf16.mxu0 0
      %918 = vmatpush1.bf16.msra.mxu0 %v905
      %919 = vmatprep.subr.bf16.mxu0 0
      %920 = vmatpush1.bf16.msra.mxu0 %v906
      %921 = vmatprep.subr.bf16.mxu0 0
      %922 = vmatpush1.bf16.msra.mxu0 0
      %923 = vmatprep.subr.bf16.mxu0 0
      %924 = vmatpush1.bf16.msra.mxu0 0
      %925 = vmatprep.subr.bf16.mxu0 0
      %926 = vmatpush1.bf16.msra.mxu0 0
      %927 = vmatprep.subr.bf16.mxu0 0
      %928 = vmatpush1.bf16.msra.mxu0 0
      %929 = vmatprep.subr.bf16.mxu0 0
      %930 = vmatpush1.bf16.msra.mxu0 0
      %931 = vmatprep.subr.bf16.mxu0 0
      %932 = vmatpush1.bf16.msra.mxu0 0
      %933 = vmatprep.subr.bf16.mxu0 0
      %934 = vmatpush1.bf16.msra.mxu0 0
      %935 = vmatprep.subr.bf16.mxu0 0
      %936 = vmatpush1.bf16.msra.mxu0 0
      %937 = vmatprep.subr.bf16.mxu0 0
      %938 = vmatpush1.bf16.msra.mxu0 0
      %939 = vmatprep.subr.bf16.mxu0 0
      %940 = vmatpush1.bf16.msra.mxu0 0
      %941 = vmatprep.subr.bf16.mxu0 0
      %942 = vmatpush1.bf16.msra.mxu0 0
      %943 = vmatprep.subr.bf16.mxu0 0
      %944 = vmatpush1.bf16.msra.mxu0 0
      %945 = vmatprep.subr.bf16.mxu0 0
      %946 = vmatpush1.bf16.msra.mxu0 0
      %947 = vmatprep.subr.bf16.mxu0 0
      %948 = vmatpush1.bf16.msra.mxu0 0
      %949 = vmatprep.mubr.bf16.mxu0 0
      %950 = vmatmul.mubr.bf16.gmra.mrb[0].mxu0 %v915
      %v951 = vpop.f32.mrb[0].mxu0
      %v952 = vadd.f32 %v912, %v951
      %v953 = vpop.f32.mrb[0].mxu0
      %v954 = vpop.f32.mrb[0].mxu0
      %v955 = vpop.f32.mrb[0].mxu0
      %956 = vdwg.mxu0
      %v957 = vadd.f32 %v360, %v952
      %v958 = vld [vmem:[%s7] sm:$0x1]
      %v959 = vld [vmem:[%s8] sm:$0x1]
      %v960 = vsel %vm375, %v957, 0.0
      %961 = vadd.xlane.f32.xlu0 %v960
      %v962 = vpop.xlane.xlu0 %961
      %v963 = vrcp.pop 32.0
      %v964 = vmul.f32 %v962, %v963
      %v965 = vsub.f32 %v957, %v964
      %v966 = vmul.f32 %v965, %v965
      %v967 = vsel %vm375, %v966, 0.0
      %968 = vadd.xlane.f32.xlu0 %v967
      %v969 = vpop.xlane.xlu0 %968
      %v970 = vmul.f32 %v969, %v963
      %v971 = vadd.f32 %v970, 1e-05
      %v972 = vrsqrt.pop %v971
      %v973 = vmul.f32 %v965, %v972
      %v975 = vlaneseq
      %v976 = vshrl.u32 %v975, 7
      %v977 = vsub.s32 0, %v976
      %v978 = vrot.slane %v958, %v977
      %v980 = vmul.f32 %v973, %v978
      %v982 = vlaneseq
      %v983 = vshrl.u32 %v982, 7
      %v984 = vsub.s32 0, %v983
      %v985 = vrot.slane %v959, %v984
      %v987 = vadd.f32 %v980, %v985
      %988 = vst.msk [vmem:[%s358] sm:$0xff] %vm375, %v987
      %p989 = scmp.lt.s32.totalorder %s20, 1
      %s990 = scalar_select %p989, %s20, 1
      %s991 = smul.addr %s990, 8
      %s992 = scalar_lea.vmem %s9, %s991
      // Predicated region
      $region57: #{forward.103} parent=55 // pred_check
        %p993 = pneg %p242
      $region58: #{forward.103} parent=55 // pred_check_branch
        %995 = sbr.rel (%p993) target = $region60
      $region59: #{forward.103} parent=55 // pred_region
        _
      $region60: #{forward.103} parent=55 // pred_fallthru
        _
    $region56: #{forward.103} parent=5 // pred_fallthru
      _
    %p996 = scmp.le.s32.totalorder 2, %s15
    // Predicated region
    $region61: #{forward.103} parent=5 // pred_check
      %p997 = pneg %p996
    $region62: #{forward.103} parent=5 // pred_check_branch
      %999 = sbr.rel (%p997) target = $region64
    $region63: #{forward.103} parent=5 // pred_region
      %s1000 = ssub.s32 %s15, 2
      // Predicated region
      $region65: #{forward.103} parent=63 // pred_check
        %p1001 = pneg %p248
      $region66: #{forward.103} parent=63 // pred_check_branch
        %1003 = sbr.rel (%p1001) target = $region68
      $region67: #{forward.103} parent=63 // pred_region
        %p1004 = scmp.lt.s32.totalorder %s21, 1
        %s1005 = scalar_select %p1004, %s21, 1
        %s1006 = smul.addr %s1005, 8
        %s1007 = scalar_lea.vmem %s9, %s1006
      $region68: #{forward.103} parent=63 // pred_fallthru
        _
    $region64: #{forward.103} parent=5 // pred_fallthru
      _
  $region6: #{forward.103} parent=0 // loop_footer
    %s19 = sadd.s32 1, %s15
  $region7: #{forward.103} parent=0 // loop_footer_branch
    %14 = sbr.rel target = $region3
  $region8: #{forward.103} parent=0 // loop_exit
    _

// kernel: forward.76
$region0: #{forward.76}
  #allocation0 [shape = 'u32[]', space=smem, size = 0x4, offset = 0x4, fixed_abs, tag = 'smem constant byte address 0x4 - core index']
  #allocation1 [shape = 'u32[144,128]{1,0:T(1,128)}', space=vmem, size = 0x12000, scoped, tag = 'internal scratch']
  %s0 = inlined_call_operand.vmem [shape: f32[16,32], index: 0, kind: input, shape index: {}]
  %s1 = inlined_call_operand.vmem [shape: f32[32,8], index: 1, kind: input, shape index: {}]
  %s2 = inlined_call_operand.vmem [shape: f32[1,8], index: 2, kind: input, shape index: {}]
  %s3 = inlined_call_operand.hbm [shape: f32[16,8], index: 3, kind: output, shape index: {}]
  %s4 = sld [smem:[#allocation0]]
  $region22: #{forward.76} parent=0
    _
  %s6 = ssub.s32 1, %s4
  %s7 = scalar_select 0, %s6, %s4
  $region1: #{forward.76} parent=0
    #allocation2 [shape = 'u8[8192]{0}', space=vmem, size = 0x2000, scoped, tag = 'output window, operand 0, single buffered']
    #allocation3 [shape = 's32[1]{0}', space=sflag, size = 0x4, scoped, tag = 'scoped memory for forward.76']
    %8 = vsyncpa [#allocation3], 0
    // Predicated region
    $region2: #{forward.76} parent=1 // pred_check
      _
    $region3: #{forward.76} parent=1 // pred_check_branch
      %10 = sbr.rel (0) target = $region5
    $region4: #{forward.76} parent=1 // pred_region
      _
    $region5: #{forward.76} parent=1 // pred_fallthru
      _
    // Predicated region
    $region6: #{forward.76} parent=1 // pred_check
      _
    $region7: #{forward.76} parent=1 // pred_check_branch
      %12 = sbr.rel (0) target = $region9
    $region8: #{forward.76} parent=1 // pred_region
      _
    $region9: #{forward.76} parent=1 // pred_fallthru
      _
    // Predicated region
    $region10: #{forward.76} parent=1 // pred_check
      _
    $region11: #{forward.76} parent=1 // pred_check_branch
      %14 = sbr.rel (0) target = $region13
    $region12: #{forward.76} parent=1 // pred_region
      _
    $region13: #{forward.76} parent=1 // pred_fallthru
      _
    %v16 = vld [vmem:[%s0] sm:$0xff]
    %v17 = vld [vmem:[%s0 + $0x8] sm:$0xff]
    %v18 = vpack.c.bf16 %v17, %v16
    %v19 = vld [vmem:[%s1] sm:$0xff]
    %v20 = vld [vmem:[%s1 + $0x8] sm:$0xff]
    %v21 = vld [vmem:[%s1 + $0x10] sm:$0xff]
    %v22 = vld [vmem:[%s1 + $0x18] sm:$0xff]
    %v23 = vpack.c.bf16 %v20, %v19
    %v24 = vpack.c.bf16 %v22, %v21
    %v25 = vld [vmem:[%s2] sm:$0x1]
    %v27 = vlaneseq
    %v28 = vshrl.u32 %v27, 7
    %v29 = vsub.s32 0, %v28
    %v30 = vrot.slane %v25, %v29
    %vm32 = vcmask 261120
    %v34 = vsel %vm32, %v18, 0
    %36 = vmatprep.subr.bf16.mxu0 0
    %37 = vmatpush1.bf16.msra.mxu0 %v23
    %38 = vmatprep.subr.bf16.mxu0 0
    %39 = vmatpush1.bf16.msra.mxu0 %v24
    %40 = vmatprep.subr.bf16.mxu0 0
    %41 = vmatpush1.bf16.msra.mxu0 0
    %42 = vmatprep.subr.bf16.mxu0 0
    %43 = vmatpush1.bf16.msra.mxu0 0
    %44 = vmatprep.subr.bf16.mxu0 0
    %45 = vmatpush1.bf16.msra.mxu0 0
    %46 = vmatprep.subr.bf16.mxu0 0
    %47 = vmatpush1.bf16.msra.mxu0 0
    %48 = vmatprep.subr.bf16.mxu0 0
    %49 = vmatpush1.bf16.msra.mxu0 0
    %50 = vmatprep.subr.bf16.mxu0 0
    %51 = vmatpush1.bf16.msra.mxu0 0
    %52 = vmatprep.subr.bf16.mxu0 0
    %53 = vmatpush1.bf16.msra.mxu0 0
    %54 = vmatprep.subr.bf16.mxu0 0
    %55 = vmatpush1.bf16.msra.mxu0 0
    %56 = vmatprep.subr.bf16.mxu0 0
    %57 = vmatpush1.bf16.msra.mxu0 0
    %58 = vmatprep.subr.bf16.mxu0 0
    %59 = vmatpush1.bf16.msra.mxu0 0
    %60 = vmatprep.subr.bf16.mxu0 0
    %61 = vmatpush1.bf16.msra.mxu0 0
    %62 = vmatprep.subr.bf16.mxu0 0
    %63 = vmatpush1.bf16.msra.mxu0 0
    %64 = vmatprep.subr.bf16.mxu0 0
    %65 = vmatpush1.bf16.msra.mxu0 0
    %66 = vmatprep.subr.bf16.mxu0 0
    %67 = vmatpush1.bf16.msra.mxu0 0
    %68 = vmatprep.mubr.bf16.mxu0 0
    %69 = vmatmul.mubr.bf16.gmra.mrb[0].mxu0 %v34
    %v70 = vpop.f32.mrb[0].mxu0
    %v71 = vadd.f32 %v30, %v70
    %v72 = vpop.f32.mrb[0].mxu0
    %v73 = vpop.f32.mrb[0].mxu0
    %v74 = vadd.f32 %v30, %v73
    %v75 = vpop.f32.mrb[0].mxu0
    %76 = vdwg.mxu0
    %vm77 = vcmask 64512
    %78 = vst.msk [vmem:[#allocation2] sm:$0xff] %vm77, %v71
    %79 = vst.msk [vmem:[#allocation2 + $0x8] sm:$0xff] %vm77, %v74
    // Predicated region
    $region14: #{forward.76} parent=1 // pred_check
      _
    $region15: #{forward.76} parent=1 // pred_check_branch
      %81 = sbr.rel (0) target = $region17
    $region16: #{forward.76} parent=1 // pred_region
      %s83 = ssub.s32 256, 256
      %84 = vsyncadd [#allocation3], %s83
      %s85 = sshll.u32 [#allocation2], 4
      %s86 = int_to_ptr.vmem [resolvable:$true] %s85
      %91 = dma.vmem_to_hbm [thread:$0]  %s86, 256, %s3, [#allocation3], 128, 128, 8
    $region17: #{forward.76} parent=1 // pred_fallthru
      _
    // Predicated region
    $region18: #{forward.76} parent=1 // pred_check
      _
    $region19: #{forward.76} parent=1 // pred_check_branch
      %93 = sbr.rel (0) target = $region21
    $region20: #{forward.76} parent=1 // pred_region
      %94 = dma.done [#allocation3], 256
    $region21: #{forward.76} parent=1 // pred_fallthru
      _
    %95 = vsyncpa [#allocation3], 1

// kernel: forward.109
$region0: #{forward.109}
  #allocation0 [shape = 'u32[]', space=smem, size = 0x4, offset = 0x4, fixed_abs, tag = 'smem constant byte address 0x4 - core index']
  #allocation1 [shape = 'u32[144,128]{1,0:T(1,128)}', space=vmem, size = 0x12000, scoped, tag = 'internal scratch']
  %s0 = inlined_call_operand.vmem [shape: f32[16,32], index: 0, kind: input, shape index: {}]
  %s1 = inlined_call_operand.vmem [shape: f32[32,21], index: 1, kind: input, shape index: {}]
  %s2 = inlined_call_operand.vmem [shape: f32[1,21], index: 2, kind: input, shape index: {}]
  %s3 = inlined_call_operand.hbm [shape: f32[16,21], index: 3, kind: output, shape index: {}]
  %s4 = sld [smem:[#allocation0]]
  $region22: #{forward.109} parent=0
    _
  %s6 = ssub.s32 1, %s4
  %s7 = scalar_select 0, %s6, %s4
  $region1: #{forward.109} parent=0
    #allocation2 [shape = 'u8[8192]{0}', space=vmem, size = 0x2000, scoped, tag = 'output window, operand 0, single buffered']
    #allocation3 [shape = 's32[1]{0}', space=sflag, size = 0x4, scoped, tag = 'scoped memory for forward.109']
    %8 = vsyncpa [#allocation3], 0
    // Predicated region
    $region2: #{forward.109} parent=1 // pred_check
      _
    $region3: #{forward.109} parent=1 // pred_check_branch
      %10 = sbr.rel (0) target = $region5
    $region4: #{forward.109} parent=1 // pred_region
      _
    $region5: #{forward.109} parent=1 // pred_fallthru
      _
    // Predicated region
    $region6: #{forward.109} parent=1 // pred_check
      _
    $region7: #{forward.109} parent=1 // pred_check_branch
      %12 = sbr.rel (0) target = $region9
    $region8: #{forward.109} parent=1 // pred_region
      _
    $region9: #{forward.109} parent=1 // pred_fallthru
      _
    // Predicated region
    $region10: #{forward.109} parent=1 // pred_check
      _
    $region11: #{forward.109} parent=1 // pred_check_branch
      %14 = sbr.rel (0) target = $region13
    $region12: #{forward.109} parent=1 // pred_region
      _
    $region13: #{forward.109} parent=1 // pred_fallthru
      _
    %v16 = vld [vmem:[%s0] sm:$0xff]
    %v17 = vld [vmem:[%s0 + $0x8] sm:$0xff]
    %v18 = vpack.c.bf16 %v17, %v16
    %v19 = vld [vmem:[%s1] sm:$0xff]
    %v20 = vld [vmem:[%s1 + $0x8] sm:$0xff]
    %v21 = vld [vmem:[%s1 + $0x10] sm:$0xff]
    %v22 = vld [vmem:[%s1 + $0x18] sm:$0xff]
    %v23 = vpack.c.bf16 %v20, %v19
    %v24 = vpack.c.bf16 %v22, %v21
    %v25 = vld [vmem:[%s2] sm:$0x1]
    %v27 = vlaneseq
    %v28 = vshrl.u32 %v27, 7
    %v29 = vsub.s32 0, %v28
    %v30 = vrot.slane %v25, %v29
    %vm32 = vcmask 261120
    %v34 = vsel %vm32, %v18, 0
    %36 = vmatprep.subr.bf16.mxu0 0
    %37 = vmatpush1.bf16.msra.mxu0 %v23
    %38 = vmatprep.subr.bf16.mxu0 0
    %39 = vmatpush1.bf16.msra.mxu0 %v24
    %40 = vmatprep.subr.bf16.mxu0 0
    %41 = vmatpush1.bf16.msra.mxu0 0
    %42 = vmatprep.subr.bf16.mxu0 0
    %43 = vmatpush1.bf16.msra.mxu0 0
    %44 = vmatprep.subr.bf16.mxu0 0
    %45 = vmatpush1.bf16.msra.mxu0 0
    %46 = vmatprep.subr.bf16.mxu0 0
    %47 = vmatpush1.bf16.msra.mxu0 0
    %48 = vmatprep.subr.bf16.mxu0 0
    %49 = vmatpush1.bf16.msra.mxu0 0
    %50 = vmatprep.subr.bf16.mxu0 0
    %51 = vmatpush1.bf16.msra.mxu0 0
    %52 = vmatprep.subr.bf16.mxu0 0
    %53 = vmatpush1.bf16.msra.mxu0 0
    %54 = vmatprep.subr.bf16.mxu0 0
    %55 = vmatpush1.bf16.msra.mxu0 0
    %56 = vmatprep.subr.bf16.mxu0 0
    %57 = vmatpush1.bf16.msra.mxu0 0
    %58 = vmatprep.subr.bf16.mxu0 0
    %59 = vmatpush1.bf16.msra.mxu0 0
    %60 = vmatprep.subr.bf16.mxu0 0
    %61 = vmatpush1.bf16.msra.mxu0 0
    %62 = vmatprep.subr.bf16.mxu0 0
    %63 = vmatpush1.bf16.msra.mxu0 0
    %64 = vmatprep.subr.bf16.mxu0 0
    %65 = vmatpush1.bf16.msra.mxu0 0
    %66 = vmatprep.subr.bf16.mxu0 0
    %67 = vmatpush1.bf16.msra.mxu0 0
    %68 = vmatprep.mubr.bf16.mxu0 0
    %69 = vmatmul.mubr.bf16.gmra.mrb[0].mxu0 %v34
    %v70 = vpop.f32.mrb[0].mxu0
    %v71 = vadd.f32 %v30, %v70
    %v72 = vpop.f32.mrb[0].mxu0
    %v73 = vpop.f32.mrb[0].mxu0
    %v74 = vadd.f32 %v30, %v73
    %v75 = vpop.f32.mrb[0].mxu0
    %76 = vdwg.mxu0
    %vm77 = vcmask 171008
    %78 = vst.msk [vmem:[#allocation2] sm:$0xff] %vm77, %v71
    %79 = vst.msk [vmem:[#allocation2 + $0x8] sm:$0xff] %vm77, %v74
    // Predicated region
    $region14: #{forward.109} parent=1 // pred_check
      _
    $region15: #{forward.109} parent=1 // pred_check_branch
      %81 = sbr.rel (0) target = $region17
    $region16: #{forward.109} parent=1 // pred_region
      %s83 = ssub.s32 256, 256
      %84 = vsyncadd [#allocation3], %s83
      %s85 = sshll.u32 [#allocation2], 4
      %s86 = int_to_ptr.vmem [resolvable:$true] %s85
      %91 = dma.vmem_to_hbm [thread:$0]  %s86, 256, %s3, [#allocation3], 128, 128, 8
    $region17: #{forward.109} parent=1 // pred_fallthru
      _
    // Predicated region
    $region18: #{forward.109} parent=1 // pred_check
      _
    $region19: #{forward.109} parent=1 // pred_check_branch
      %93 = sbr.rel (0) target = $region21
    $region20: #{forward.109} parent=1 // pred_region
      %94 = dma.done [#allocation3], 256
    $region21: #{forward.109} parent=1 // pred_fallthru
      _
    %95 = vsyncpa [#allocation3], 1

// kernel: forward.65
$region0: #{forward.65}
  #allocation0 [shape = 'u32[]', space=smem, size = 0x4, offset = 0x4, fixed_abs, tag = 'smem constant byte address 0x4 - core index']
  #allocation1 [shape = 'u32[144,128]{1,0:T(1,128)}', space=vmem, size = 0x12000, scoped, tag = 'internal scratch']
  %s0 = inlined_call_operand.vmem [shape: f32[16,32], index: 0, kind: input, shape index: {}]
  %s1 = inlined_call_operand.vmem [shape: f32[32,12], index: 1, kind: input, shape index: {}]
  %s2 = inlined_call_operand.vmem [shape: f32[1,12], index: 2, kind: input, shape index: {}]
  %s3 = inlined_call_operand.vmem [shape: f32[16,12], index: 3, kind: output, shape index: {}]
  %s4 = sld [smem:[#allocation0]]
  $region22: #{forward.65} parent=0
    _
  %s6 = ssub.s32 1, %s4
  %s7 = scalar_select 0, %s6, %s4
  // Predicated region
  $region2: #{forward.65} parent=0 // pred_check
    _
  $region3: #{forward.65} parent=0 // pred_check_branch
    %9 = sbr.rel (0) target = $region5
  $region4: #{forward.65} parent=0 // pred_region
    _
  $region5: #{forward.65} parent=0 // pred_fallthru
    _
  // Predicated region
  $region6: #{forward.65} parent=0 // pred_check
    _
  $region7: #{forward.65} parent=0 // pred_check_branch
    %11 = sbr.rel (0) target = $region9
  $region8: #{forward.65} parent=0 // pred_region
    _
  $region9: #{forward.65} parent=0 // pred_fallthru
    _
  // Predicated region
  $region10: #{forward.65} parent=0 // pred_check
    _
  $region11: #{forward.65} parent=0 // pred_check_branch
    %13 = sbr.rel (0) target = $region13
  $region12: #{forward.65} parent=0 // pred_region
    _
  $region13: #{forward.65} parent=0 // pred_fallthru
    _
  %v15 = vld [vmem:[%s0] sm:$0xff]
  %v16 = vld [vmem:[%s0 + $0x8] sm:$0xff]
  %v17 = vpack.c.bf16 %v16, %v15
  %v18 = vld [vmem:[%s1] sm:$0xff]
  %v19 = vld [vmem:[%s1 + $0x8] sm:$0xff]
  %v20 = vld [vmem:[%s1 + $0x10] sm:$0xff]
  %v21 = vld [vmem:[%s1 + $0x18] sm:$0xff]
  %v22 = vpack.c.bf16 %v19, %v18
  %v23 = vpack.c.bf16 %v21, %v20
  %v24 = vld [vmem:[%s2] sm:$0x1]
  %v26 = vlaneseq
  %v27 = vshrl.u32 %v26, 7
  %v28 = vsub.s32 0, %v27
  %v29 = vrot.slane %v24, %v28
  %vm31 = vcmask 261120
  %v33 = vsel %vm31, %v17, 0
  %35 = vmatprep.subr.bf16.mxu0 0
  %36 = vmatpush1.bf16.msra.mxu0 %v22
  %37 = vmatprep.subr.bf16.mxu0 0
  %38 = vmatpush1.bf16.msra.mxu0 %v23
  %39 = vmatprep.subr.bf16.mxu0 0
  %40 = vmatpush1.bf16.msra.mxu0 0
  %41 = vmatprep.subr.bf16.mxu0 0
  %42 = vmatpush1.bf16.msra.mxu0 0
  %43 = vmatprep.subr.bf16.mxu0 0
  %44 = vmatpush1.bf16.msra.mxu0 0
  %45 = vmatprep.subr.bf16.mxu0 0
  %46 = vmatpush1.bf16.msra.mxu0 0
  %47 = vmatprep.subr.bf16.mxu0 0
  %48 = vmatpush1.bf16.msra.mxu0 0
  %49 = vmatprep.subr.bf16.mxu0 0
  %50 = vmatpush1.bf16.msra.mxu0 0
  %51 = vmatprep.subr.bf16.mxu0 0
  %52 = vmatpush1.bf16.msra.mxu0 0
  %53 = vmatprep.subr.bf16.mxu0 0
  %54 = vmatpush1.bf16.msra.mxu0 0
  %55 = vmatprep.subr.bf16.mxu0 0
  %56 = vmatpush1.bf16.msra.mxu0 0
  %57 = vmatprep.subr.bf16.mxu0 0
  %58 = vmatpush1.bf16.msra.mxu0 0
  %59 = vmatprep.subr.bf16.mxu0 0
  %60 = vmatpush1.bf16.msra.mxu0 0
  %61 = vmatprep.subr.bf16.mxu0 0
  %62 = vmatpush1.bf16.msra.mxu0 0
  %63 = vmatprep.subr.bf16.mxu0 0
  %64 = vmatpush1.bf16.msra.mxu0 0
  %65 = vmatprep.subr.bf16.mxu0 0
  %66 = vmatpush1.bf16.msra.mxu0 0
  %67 = vmatprep.mubr.bf16.mxu0 0
  %68 = vmatmul.mubr.bf16.gmra.mrb[0].mxu0 %v33
  %v69 = vpop.f32.mrb[0].mxu0
  %v70 = vadd.f32 %v29, %v69
  %v71 = vpop.f32.mrb[0].mxu0
  %v72 = vpop.f32.mrb[0].mxu0
  %v73 = vadd.f32 %v29, %v72
  %v74 = vpop.f32.mrb[0].mxu0
  %75 = vdwg.mxu0
  %vm76 = vcmask 97280
  %77 = vst.msk [vmem:[%s3] sm:$0xff] %vm76, %v70
  %78 = vst.msk [vmem:[%s3 + $0x8] sm:$0xff] %vm76, %v73
  // Predicated region
  $region14: #{forward.65} parent=0 // pred_check
    _
  $region15: #{forward.65} parent=0 // pred_check_branch
    %80 = sbr.rel (0) target = $region17
  $region16: #{forward.65} parent=0 // pred_region
    _
  $region17: #{forward.65} parent=0 // pred_fallthru
    _
  // Predicated region
  $region18: #{forward.65} parent=0 // pred_check
    _
  $region19: #{forward.65} parent=0 // pred_check_branch
    %82 = sbr.rel (0) target = $region21
  $region20: #{forward.65} parent=0 // pred_region
    _
  $region21: #{forward.65} parent=0 // pred_fallthru
    _

</llo_original>
